<compile_context>
chip_gen: v6e
topology: v6e:2x2x1
jax: 0.10.0
libtpu: 0.0.40
codegen_flags: <defaults>
</compile_context>

<pallas_src>
import jax
import jax.numpy as jnp
from jax.experimental import pallas as pl
from jax.experimental.pallas import tpu as pltpu

HIDDEN = 1000
NUM_CLASSES = 2
NUM_LAYERS = 6
NUM_HIDDEN_LAYERS = 4
NEG_SLOPE = 0.2
LANE = 128


def _round_up(x, m):
    return (x + m - 1) // m * m


def _leaky_relu(x):
    return jnp.where(x >= 0, x, NEG_SLOPE * x)


def discriminator_kernel(z_ref, w1_ref, wh_ref, w6_ref, b_ref, o_ref, h_ref):
    """One (batch_tile, layer) grid step of the 6-layer MLP.

    z_ref : (tm, zp)    f32  input tile (constant along the layer axis -> 1 fetch)
    w1_ref: (zp, hp)    bf16 layer-1 weight (VMEM resident)
    wh_ref: (1, hp, hp) bf16 hidden weight streamed for this layer step
    w6_ref: (hp, cp)    bf16 layer-6 weight (VMEM resident)
    b_ref : (1, 1, hp)  f32  bias for this layer (last layer uses lanes [:cp])
    o_ref : (tm, cp)    f32  logits tile (written on the last layer step)
    h_ref : (tm, hp)    bf16 activation carried across layer steps (scratch)
    """
    l = pl.program_id(1)
    last = pl.num_programs(1) - 1
    bias = b_ref[0]  # (1, hp), f32

    @pl.when(l == 0)
    def _first():
        y = jnp.dot(z_ref[...].astype(jnp.bfloat16), w1_ref[...],
                    preferred_element_type=jnp.float32) + bias
        h_ref[...] = _leaky_relu(y).astype(jnp.bfloat16)

    @pl.when(jnp.logical_and(l > 0, l < last))
    def _hidden():
        y = jnp.dot(h_ref[...], wh_ref[0],
                    preferred_element_type=jnp.float32) + bias
        h_ref[...] = _leaky_relu(y).astype(jnp.bfloat16)

    @pl.when(l == last)
    def _last():
        cp = o_ref.shape[-1]
        y = jnp.dot(h_ref[...], w6_ref[...],
                    preferred_element_type=jnp.float32) + bias[:, :cp]
        o_ref[...] = y.astype(o_ref.dtype)


def init_discriminator_params(z_dim, key, dtype=jnp.bfloat16):
    """normal_init: weight ~ N(0, 0.02), bias = 0 (matches the module's weight_init).

    Weights are transposed to (in, out), zero-padded to lane-aligned shapes and
    cast to bf16.  The 4 hidden-layer weights are stacked along a leading layer
    axis so the kernel can stream them one layer per grid step.
    """
    zp = _round_up(z_dim, LANE)
    hp = _round_up(HIDDEN, LANE)        # 1024
    cp = _round_up(NUM_CLASSES, LANE)   # 128
    k1, kh, k6 = jax.random.split(key, 3)

    w1 = 0.02 * jax.random.normal(k1, (z_dim, HIDDEN), jnp.float32)
    w1p = jnp.zeros((zp, hp), jnp.float32).at[:z_dim, :HIDDEN].set(w1)

    wh = 0.02 * jax.random.normal(
        kh, (NUM_HIDDEN_LAYERS, HIDDEN, HIDDEN), jnp.float32)
    whp = jnp.zeros((NUM_HIDDEN_LAYERS, hp, hp),
                    jnp.float32).at[:, :HIDDEN, :HIDDEN].set(wh)

    w6 = 0.02 * jax.random.normal(k6, (HIDDEN, NUM_CLASSES), jnp.float32)
    w6p = jnp.zeros((hp, cp), jnp.float32).at[:HIDDEN, :NUM_CLASSES].set(w6)

    biases = jnp.zeros((NUM_LAYERS, 1, hp), jnp.float32)  # bias init = 0

    return {"w1": w1p.astype(dtype), "wh": whp.astype(dtype),
            "w6": w6p.astype(dtype), "b": biases}


def _discriminator_logits(z, params, tile_m):
    B, z_dim = z.shape
    w1, wh, w6, b = params["w1"], params["wh"], params["w6"], params["b"]
    zp, hp = w1.shape
    cp = w6.shape[1]
    assert z_dim <= zp

    bp = _round_up(B, 8)
    if bp > tile_m:
        bp = _round_up(B, tile_m)
        tm = tile_m
    else:
        tm = bp
    n_tiles = bp // tm

    z_pad = jnp.zeros((bp, zp), jnp.float32).at[:B, :z_dim].set(
        z.astype(jnp.float32))

    # VMEM budget from actual buffer footprint (double-buffered pipeline blocks
    # + activation scratch) plus slack for compiler-internal scratch.
    buf_bytes = (2 * tm * zp * 4          # z tile
                 + 2 * zp * hp * 2        # W1 (resident)
                 + 2 * hp * hp * 2        # streamed hidden weight (2-deep)
                 + 2 * hp * cp * 2        # W6 (resident)
                 + 2 * hp * 4             # bias block
                 + 2 * tm * cp * 4        # output tile
                 + tm * hp * 2)           # activation scratch
    vmem_limit = int(buf_bytes) + (8 << 20)

    weight_bytes = sum(int(a.size) * a.dtype.itemsize for a in (w1, wh, w6, b))
    flops = 2 * bp * (zp * hp + NUM_HIDDEN_LAYERS * hp * hp + hp * cp)
    cost = pl.CostEstimate(
        flops=flops,
        transcendentals=0,
        bytes_accessed=weight_bytes + int(z_pad.size) * 4 + bp * cp * 4,
    )

    out = pl.pallas_call(
        discriminator_kernel,
        out_shape=jax.ShapeDtypeStruct((bp, cp), jnp.float32),
        grid=(n_tiles, NUM_LAYERS),
        in_specs=[
            pl.BlockSpec((tm, zp), lambda i, l: (i, 0)),
            pl.BlockSpec((zp, hp), lambda i, l: (0, 0)),
            # Hidden weight for layer step l is wh[l-1]; clamping makes l=0
            # prefetch wh[0] (used at l=1) and l=last reuse wh[3] (no refetch).
            pl.BlockSpec(
                (1, hp, hp),
                lambda i, l: (jnp.minimum(jnp.maximum(l - 1, 0),
                                          NUM_HIDDEN_LAYERS - 1), 0, 0)),
            pl.BlockSpec((hp, cp), lambda i, l: (0, 0)),
            pl.BlockSpec((1, 1, hp), lambda i, l: (l, 0, 0)),
        ],
        out_specs=pl.BlockSpec((tm, cp), lambda i, l: (i, 0)),
        scratch_shapes=[pltpu.VMEM((tm, hp), jnp.bfloat16)],
        compiler_params=pltpu.CompilerParams(
            dimension_semantics=("parallel", "arbitrary"),
            vmem_limit_bytes=vmem_limit,
        ),
        cost_estimate=cost,
    )(z_pad, w1, wh, w6, b)

    return out[:B, :NUM_CLASSES]


def discriminator_forward(z, params, *, tile_m=512):
    """Forward pass.

    `z` may be a single (B, z_dim) array, or a tuple/list of batches (e.g.
    (z, z_perm)) which are fused into ONE pallas_call so the dominant weight
    DMA is paid once; a tuple of per-batch results is returned in that case.
    torch-style .squeeze() is applied to each result.
    """
    if isinstance(z, (list, tuple)):
        sizes = [int(zi.shape[0]) for zi in z]
        logits = _discriminator_logits(jnp.concatenate(z, axis=0), params, tile_m)
        outs, off = [], 0
        for n in sizes:
            outs.append(jnp.squeeze(logits[off:off + n]))
            off += n
        return tuple(outs)
    return jnp.squeeze(_discriminator_logits(z, params, tile_m))


if __name__ == "__main__":
    key = jax.random.PRNGKey(0)
    k_param, k_z, k_perm = jax.random.split(key, 3)

    z_dim = 32
    batch = 2
    params = init_discriminator_params(z_dim, k_param)
    z = jax.random.normal(k_z, (batch, z_dim), dtype=jnp.float32)

    logits = discriminator_forward(z, params)
    jax.block_until_ready(logits)

    # Pure-JAX reference mirroring the kernel math (bf16 weights & activations,
    # f32 MXU accumulation, f32 bias-add / LeakyReLU) on unpadded logical shapes.
    def ref_forward(zz):
        h = zz.astype(jnp.bfloat16)
        y = jnp.dot(h, params["w1"][:z_dim, :HIDDEN],
                    preferred_element_type=jnp.float32) + params["b"][0, :, :HIDDEN]
        h = jnp.where(y >= 0, y, NEG_SLOPE * y).astype(jnp.bfloat16)
        for li in range(NUM_HIDDEN_LAYERS):
            y = jnp.dot(h, params["wh"][li, :HIDDEN, :HIDDEN],
                        preferred_element_type=jnp.float32) + params["b"][li + 1, :, :HIDDEN]
            h = jnp.where(y >= 0, y, NEG_SLOPE * y).astype(jnp.bfloat16)
        y = jnp.dot(h, params["w6"][:HIDDEN, :NUM_CLASSES],
                    preferred_element_type=jnp.float32) + params["b"][5, :, :NUM_CLASSES]
        return jnp.squeeze(y)

    ref = ref_forward(z)
    assert logits.shape == (batch, NUM_CLASSES), logits.shape
    assert jnp.allclose(logits, ref, atol=1e-4, rtol=1e-4), \
        float(jnp.max(jnp.abs(logits - ref)))

    # Fused D(z) / D(z_perm) path: one pallas_call pays the weight DMA once.
    z_perm = jax.random.permutation(k_perm, z, axis=0)
    d_z, d_zp = discriminator_forward((z, z_perm), params)
    jax.block_until_ready(d_zp)
    assert jnp.allclose(d_z, ref, atol=1e-4, rtol=1e-4)
    assert jnp.allclose(d_zp, ref_forward(z_perm), atol=1e-4, rtol=1e-4)

    print("KERNEL_OK")
</pallas_src>

<mosaic_0001>
module attributes {stable_mosaic.version = 11 : i64} {
  func.func @discriminator_kernel(%arg0: i32, %arg1: i32, %arg2: memref<8x128xf32, #tpu.memory_space<vmem>>, %arg3: memref<128x1024xbf16, #tpu.memory_space<vmem>>, %arg4: memref<1x1024x1024xbf16, #tpu.memory_space<vmem>>, %arg5: memref<1024x128xbf16, #tpu.memory_space<vmem>>, %arg6: memref<1x1x1024xf32, #tpu.memory_space<vmem>>, %arg7: memref<8x128xf32, #tpu.memory_space<vmem>>, %arg8: memref<8x1024xbf16, #tpu.memory_space<vmem>>) attributes {dimension_semantics = [#tpu.dimension_semantics<parallel>, #tpu.dimension_semantics<arbitrary>], iteration_bounds = array<i64: 1, 6>, scalar_prefetch = 0 : i64, scratch_operands = 1 : i64, tpu.core_type = #tpu.core_type<tc>, window_params = [{transform_indices = @transform_0, window_bounds = array<i64: 8, 128>}, {pipeline_mode = #tpu.pipeline_mode<synchronous>, transform_indices = @transform_1, window_bounds = array<i64: 128, 1024>}, {transform_indices = @transform_2, window_bounds = array<i64: 1, 1024, 1024>}, {pipeline_mode = #tpu.pipeline_mode<synchronous>, transform_indices = @transform_3, window_bounds = array<i64: 1024, 128>}, {transform_indices = @transform_4, window_bounds = array<i64: 1, 1, 1024>}, {transform_indices = @transform_5, window_bounds = array<i64: 8, 128>}]} {
    %c0 = arith.constant 0 : index
    %c0_0 = arith.constant 0 : index
    %c0_1 = arith.constant 0 : index
    %0 = vector.load %arg6[%c0, %c0_0, %c0_1] : memref<1x1x1024xf32, #tpu.memory_space<vmem>>, vector<1x1x1024xf32>
    %1 = vector.shape_cast %0 : vector<1x1x1024xf32> to vector<1x1024xf32>
    %c0_i32 = arith.constant 0 : i32
    %2 = arith.cmpi eq, %arg1, %c0_i32 : i32
    %3 = arith.extui %2 : i1 to i32
    %c0_i32_2 = arith.constant 0 : i32
    %4 = arith.cmpi ne, %3, %c0_i32_2 : i32
    scf.if %4 {
      %c0_7 = arith.constant 0 : index
      %c0_8 = arith.constant 0 : index
      %13 = vector.load %arg2[%c0_7, %c0_8] : memref<8x128xf32, #tpu.memory_space<vmem>>, vector<8x128xf32>
      %14 = arith.truncf %13 : vector<8x128xf32> to vector<8x128xbf16>
      %c0_9 = arith.constant 0 : index
      %c0_10 = arith.constant 0 : index
      %15 = vector.load %arg3[%c0_9, %c0_10] : memref<128x1024xbf16, #tpu.memory_space<vmem>>, vector<128x1024xbf16>
      %cst = arith.constant dense<0.000000e+00> : vector<8x1024xf32>
      %16 = tpu.matmul %14, %15, %cst {dimension_numbers = #tpu.dot_dimension_numbers<[1], [0], [0], [1], [0, 0, 1, 1], [], []>} : vector<8x128xbf16>, vector<128x1024xbf16>, vector<8x1024xf32> -> vector<8x1024xf32>
      %17 = vector.broadcast %1 : vector<1x1024xf32> to vector<8x1024xf32>
      %18 = arith.addf %16, %17 : vector<8x1024xf32>
      %cst_11 = arith.constant 0.000000e+00 : f32
      %19 = vector.broadcast %cst_11 : f32 to vector<8x1024xf32>
      %20 = arith.cmpf oge, %18, %19 : vector<8x1024xf32>
      %cst_12 = arith.constant 2.000000e-01 : f32
      %21 = vector.broadcast %cst_12 : f32 to vector<8x1024xf32>
      %22 = arith.mulf %21, %18 : vector<8x1024xf32>
      %23 = arith.select %20, %18, %22 : vector<8x1024xi1>, vector<8x1024xf32>
      %24 = arith.truncf %23 : vector<8x1024xf32> to vector<8x1024xbf16>
      %c0_13 = arith.constant 0 : index
      %c0_14 = arith.constant 0 : index
      %25 = vector.load %arg8[%c0_13, %c0_14] : memref<8x1024xbf16, #tpu.memory_space<vmem>>, vector<8x1024xbf16>
      tpu.vector_store %arg8[%c0_13, %c0_14], %24 {strides = array<i32>} : memref<8x1024xbf16, #tpu.memory_space<vmem>>, vector<8x1024xbf16>,
    } else {
    }
    %c0_i32_3 = arith.constant 0 : i32
    %5 = arith.cmpi sgt, %arg1, %c0_i32_3 : i32
    %c5_i32 = arith.constant 5 : i32
    %6 = arith.cmpi slt, %arg1, %c5_i32 : i32
    %7 = arith.andi %5, %6 : i1
    %8 = arith.extui %7 : i1 to i32
    %c0_i32_4 = arith.constant 0 : i32
    %9 = arith.cmpi ne, %8, %c0_i32_4 : i32
    scf.if %9 {
      %c0_7 = arith.constant 0 : index
      %c0_8 = arith.constant 0 : index
      %13 = vector.load %arg8[%c0_7, %c0_8] : memref<8x1024xbf16, #tpu.memory_space<vmem>>, vector<8x1024xbf16>
      %c0_9 = arith.constant 0 : index
      %c0_10 = arith.constant 0 : index
      %c0_11 = arith.constant 0 : index
      %14 = vector.load %arg4[%c0_9, %c0_10, %c0_11] : memref<1x1024x1024xbf16, #tpu.memory_space<vmem>>, vector<1x1024x1024xbf16>
      %15 = vector.shape_cast %14 : vector<1x1024x1024xbf16> to vector<1024x1024xbf16>
      %cst = arith.constant dense<0.000000e+00> : vector<8x1024xf32>
      %16 = tpu.matmul %13, %15, %cst {dimension_numbers = #tpu.dot_dimension_numbers<[1], [0], [0], [1], [0, 0, 1, 1], [], []>} : vector<8x1024xbf16>, vector<1024x1024xbf16>, vector<8x1024xf32> -> vector<8x1024xf32>
      %17 = vector.broadcast %1 : vector<1x1024xf32> to vector<8x1024xf32>
      %18 = arith.addf %16, %17 : vector<8x1024xf32>
      %cst_12 = arith.constant 0.000000e+00 : f32
      %19 = vector.broadcast %cst_12 : f32 to vector<8x1024xf32>
      %20 = arith.cmpf oge, %18, %19 : vector<8x1024xf32>
      %cst_13 = arith.constant 2.000000e-01 : f32
      %21 = vector.broadcast %cst_13 : f32 to vector<8x1024xf32>
      %22 = arith.mulf %21, %18 : vector<8x1024xf32>
      %23 = arith.select %20, %18, %22 : vector<8x1024xi1>, vector<8x1024xf32>
      %24 = arith.truncf %23 : vector<8x1024xf32> to vector<8x1024xbf16>
      %c0_14 = arith.constant 0 : index
      %c0_15 = arith.constant 0 : index
      %25 = vector.load %arg8[%c0_14, %c0_15] : memref<8x1024xbf16, #tpu.memory_space<vmem>>, vector<8x1024xbf16>
      tpu.vector_store %arg8[%c0_14, %c0_15], %24 {strides = array<i32>} : memref<8x1024xbf16, #tpu.memory_space<vmem>>, vector<8x1024xbf16>,
    } else {
    }
    %c5_i32_5 = arith.constant 5 : i32
    %10 = arith.cmpi eq, %arg1, %c5_i32_5 : i32
    %11 = arith.extui %10 : i1 to i32
    %c0_i32_6 = arith.constant 0 : i32
    %12 = arith.cmpi ne, %11, %c0_i32_6 : i32
    scf.if %12 {
      %c0_7 = arith.constant 0 : index
      %c0_8 = arith.constant 0 : index
      %13 = vector.load %arg8[%c0_7, %c0_8] : memref<8x1024xbf16, #tpu.memory_space<vmem>>, vector<8x1024xbf16>
      %c0_9 = arith.constant 0 : index
      %c0_10 = arith.constant 0 : index
      %14 = vector.load %arg5[%c0_9, %c0_10] : memref<1024x128xbf16, #tpu.memory_space<vmem>>, vector<1024x128xbf16>
      %cst = arith.constant dense<0.000000e+00> : vector<8x128xf32>
      %15 = tpu.matmul %13, %14, %cst {dimension_numbers = #tpu.dot_dimension_numbers<[1], [0], [0], [1], [0, 0, 1, 1], [], []>} : vector<8x1024xbf16>, vector<1024x128xbf16>, vector<8x128xf32> -> vector<8x128xf32>
      %16 = vector.extract_strided_slice %1 {offsets = [0, 0], sizes = [1, 128], strides = [1, 1]} : vector<1x1024xf32> to vector<1x128xf32>
      %17 = vector.broadcast %16 : vector<1x128xf32> to vector<8x128xf32>
      %18 = arith.addf %15, %17 : vector<8x128xf32>
      %c0_11 = arith.constant 0 : index
      %c0_12 = arith.constant 0 : index
      %19 = vector.load %arg7[%c0_11, %c0_12] : memref<8x128xf32, #tpu.memory_space<vmem>>, vector<8x128xf32>
      tpu.vector_store %arg7[%c0_11, %c0_12], %18 {strides = array<i32>} : memref<8x128xf32, #tpu.memory_space<vmem>>, vector<8x128xf32>,
    } else {
    }
    return
  }
  func.func @transform_0(%arg0: i32, %arg1: i32) -> (i32, i32) {
    %c0_i32 = arith.constant 0 : i32
    %c0_i32_0 = arith.constant 0 : i32
    return %arg0, %c0_i32 : i32, i32
  }
  func.func @transform_1(%arg0: i32, %arg1: i32) -> (i32, i32) {
    %c0_i32 = arith.constant 0 : i32
    %c0_i32_0 = arith.constant 0 : i32
    %c0_i32_1 = arith.constant 0 : i32
    return %c0_i32, %c0_i32_0 : i32, i32
  }
  func.func @transform_2(%arg0: i32, %arg1: i32) -> (i32, i32, i32) {
    %c1_i32 = arith.constant 1 : i32
    %0 = arith.subi %arg1, %c1_i32 : i32
    %c0_i32 = arith.constant 0 : i32
    %1 = arith.maxsi %0, %c0_i32 : i32
    %c3_i32 = arith.constant 3 : i32
    %2 = arith.minsi %1, %c3_i32 : i32
    %c0_i32_0 = arith.constant 0 : i32
    %c0_i32_1 = arith.constant 0 : i32
    %c0_i32_2 = arith.constant 0 : i32
    return %2, %c0_i32_0, %c0_i32_1 : i32, i32, i32
  }
  func.func @transform_3(%arg0: i32, %arg1: i32) -> (i32, i32) {
    %c0_i32 = arith.constant 0 : i32
    %c0_i32_0 = arith.constant 0 : i32
    %c0_i32_1 = arith.constant 0 : i32
    return %c0_i32, %c0_i32_0 : i32, i32
  }
  func.func @transform_4(%arg0: i32, %arg1: i32) -> (i32, i32, i32) {
    %c0_i32 = arith.constant 0 : i32
    %c0_i32_0 = arith.constant 0 : i32
    %c0_i32_1 = arith.constant 0 : i32
    return %arg1, %c0_i32, %c0_i32_0 : i32, i32, i32
  }
  func.func @transform_5(%arg0: i32, %arg1: i32) -> (i32, i32) {
    %c0_i32 = arith.constant 0 : i32
    %c0_i32_0 = arith.constant 0 : i32
    return %arg0, %c0_i32 : i32, i32
  }
}

</mosaic_0001>

<llo_original>
// kernel: tpu_custom_call.1
$region0: #{tpu_custom_call.1}
  #allocation0 [shape = 'u32[]', space=smem, size = 0x4, offset = 0x4, fixed_abs, tag = 'smem constant byte address 0x4 - core index']
  #allocation1 [shape = 'u32[144,128]{1,0:T(1,128)}', space=vmem, size = 0x12000, scoped, tag = 'internal scratch']
  #allocation2 [shape = 'bf16[8,1024]{1,0:T(8,128)(2,1)}', space=vmem, size = 0x4000, scoped, tag = 'scratch operand']
  %s0 = inlined_call_operand.hbm [shape: f32[8,128], index: 0, kind: input, shape index: {}]
  %s1 = inlined_call_operand.hbm [shape: bf16[128,1024], index: 1, kind: input, shape index: {}]
  %s2 = inlined_call_operand.hbm [shape: bf16[4,1024,1024], index: 2, kind: input, shape index: {}]
  %s3 = inlined_call_operand.hbm [shape: bf16[1024,128], index: 3, kind: input, shape index: {}]
  %s4 = inlined_call_operand.hbm [shape: f32[6,1,1024], index: 4, kind: input, shape index: {}]
  %s5 = inlined_call_operand.hbm [shape: f32[8,128], index: 5, kind: output, shape index: {}]
  %s6 = sld [smem:[#allocation0]]
  $region85: #{tpu_custom_call.1} parent=0
    _
  %s8 = ssub.s32 1, %s6
  %s9 = scalar_select 0, %s8, %s6
  $region1: #{tpu_custom_call.1} parent=0
    #allocation3 [shape = 'u8[4096]{0}', space=vmem, size = 0x1000, scoped, tag = 'input window, operand 0, single buffered']
    #allocation4 [shape = 's32[2]{0}', space=sflag, size = 0x8, scoped, tag = 'scoped memory for tpu_custom_call.1']
    #allocation5 [shape = 's32[2]{0}', space=sflag, size = 0x8, scoped, tag = 'scoped memory for tpu_custom_call.1']
    #allocation6 [shape = 'u8[262144]{0}', space=vmem, size = 0x40000, scoped, tag = 'input window, operand 1, single buffered']
    #allocation7 [shape = 's32[1]{0}', space=sflag, size = 0x4, scoped, tag = 'scoped memory for tpu_custom_call.1']
    #allocation8 [shape = 'u8[4194304]{0}', space=vmem, size = 0x400000, scoped, tag = 'input window, operand 2']
    #allocation9 [shape = 'u8[262144]{0}', space=vmem, size = 0x40000, scoped, tag = 'input window, operand 3, single buffered']
    #allocation10 [shape = 'u8[8192]{0}', space=vmem, size = 0x2000, scoped, tag = 'input window, operand 4']
    #allocation11 [shape = 's32[2]{0}', space=sflag, size = 0x8, scoped, tag = 'scoped memory for tpu_custom_call.1']
    #allocation12 [shape = 'u8[4096]{0}', space=vmem, size = 0x1000, scoped, tag = 'output window, operand 0, single buffered']
    %10 = vsyncpa [#allocation4], 0
    %11 = vsyncpa [#allocation7], 0
    %12 = vsyncpa [#allocation11], 0
    %s13 = scalar_lea.sflag [#allocation11], 1
    %14 = vsyncpa %s13, 0
    %15 = vsyncpa [#allocation5], 0
    loop: start=0, step=1, limit=8
    $region2: #{tpu_custom_call.1} parent=1 // loop_pre_header
      _
    $region3: #{tpu_custom_call.1} parent=1 // loop_header
      %s17 = sphi 0, %s21
      %p18 = scmp.ge.s32.totalorder %s17, 8
      %s24 = sphi 0, %s36
      %s25 = sphi 0, %s32
      %s26 = sphi 0, %s24
      %s27 = sphi 0, %s25
      %s28 = sphi 0, %s26
      %s29 = sphi 0, %s27
      %s39 = sphi 0, %s41
      %s42 = sphi 0, %s39
      %s43 = sphi 0, %s42
      %s59 = sphi 0, %s43
      %s63 = sphi 0, %s63
      %s65 = sphi 0, %s63
      %s66 = sphi 0, %s65
      %s80 = sphi 0, %s66
      %s96 = sphi 0, %s98
      %s99 = sphi 0, %s96
      %s100 = sphi 0, %s99
      %s116 = sphi 0, %s100
      %s120 = sphi 0, %s120
      %s122 = sphi 0, %s120
      %s123 = sphi 0, %s122
      %s137 = sphi 0, %s123
      %s143 = sphi 0, %s145
      %s146 = sphi 0, %s143
      %s147 = sphi 0, %s146
      %s163 = sphi 0, %s147
      %s169 = sphi 0, %s171
      %s172 = sphi 0, %s169
      %s173 = sphi 0, %s172
      %s189 = sphi 0, %s173
    $region4: #{tpu_custom_call.1} parent=1 // loop_header_branch
      %20 = sbr.rel (%p18) target = $region8
    $region5: #{tpu_custom_call.1} parent=1 // loop_body
      %s22 = ssub.s32 %s17, 1
      %s23 = ssub.s32 %s17, 2
      %s30 = sadd.s32 1, %s25
      %p31 = scmp.ge.s32.totalorder %s30, 6
      %s32 = scalar_select %p31, 0, %s30
      %s33 = sadd.s32 1, %s24
      %s34 = scalar_select %p31, %s33, %s24
      %p35 = scmp.ge.s32.totalorder %s34, 1
      %s36 = scalar_select %p35, 0, %s34
      %s37 = ssub.s32 %s24, %s36
      %p38 = scmp.eq.s32.totalorder %s37, 0
      %s40 = sadd.s32 %s39, 1
      %s41 = scalar_select %p38, %s39, %s40
      %p44 = pneg %p38
      %p45 = scmp.eq.s32.totalorder %s17, 5
      %p46 = por %p44, %p45
      %p47 = scmp.ne.s32.totalorder %s39, %s42
      %p48 = scmp.eq.s32.totalorder %s17, 0
      %p49 = por %p47, %p48
      %p50 = scmp.ne.s32.totalorder %s39, %s42
      %p51 = scmp.eq.s32.totalorder %s22, 5
      %p52 = por %p50, %p51
      %p53 = scmp.ne.s32.totalorder %s42, %s43
      %p54 = scmp.eq.s32.totalorder %s22, 0
      %p55 = por %p53, %p54
      %p56 = scmp.ne.s32.totalorder %s42, %s43
      %p57 = scmp.eq.s32.totalorder %s23, 5
      %p58 = por %p56, %p57
      %p60 = scmp.ne.s32.totalorder %s43, %s59
      %p61 = scmp.eq.s32.totalorder %s23, 0
      %p62 = por %p60, %p61
      %s64 = sadd.s32 %s63, 1
      %p67 = scmp.eq.s32.totalorder %s17, 5
      %p68 = scmp.ne.s32.totalorder %s63, %s65
      %p69 = scmp.eq.s32.totalorder %s17, 0
      %p70 = por %p68, %p69
      %p71 = scmp.ne.s32.totalorder %s63, %s65
      %p72 = scmp.eq.s32.totalorder %s22, 5
      %p73 = por %p71, %p72
      %p74 = scmp.ne.s32.totalorder %s65, %s66
      %p75 = scmp.eq.s32.totalorder %s22, 0
      %p76 = por %p74, %p75
      %p77 = scmp.ne.s32.totalorder %s65, %s66
      %p78 = scmp.eq.s32.totalorder %s23, 5
      %p79 = por %p77, %p78
      %p81 = scmp.ne.s32.totalorder %s66, %s80
      %p82 = scmp.eq.s32.totalorder %s23, 0
      %p83 = por %p81, %p82
      %s84 = ssub.s32 %s25, 1
      %p85 = scmp.gt.s32.totalorder %s84, 0
      %s86 = scalar_select %p85, %s84, 0
      %p87 = scmp.lt.s32.totalorder %s86, 3
      %s88 = scalar_select %p87, %s86, 3
      %s89 = ssub.s32 %s32, 1
      %p90 = scmp.gt.s32.totalorder %s89, 0
      %s91 = scalar_select %p90, %s89, 0
      %p92 = scmp.lt.s32.totalorder %s91, 3
      %s93 = scalar_select %p92, %s91, 3
      %s94 = ssub.s32 %s88, %s93
      %p95 = scmp.eq.s32.totalorder %s94, 0
      %s97 = sadd.s32 %s96, 1
      %s98 = scalar_select %p95, %s96, %s97
      %p101 = pneg %p95
      %p102 = scmp.eq.s32.totalorder %s17, 5
      %p103 = por %p101, %p102
      %p104 = scmp.ne.s32.totalorder %s96, %s99
      %p105 = scmp.eq.s32.totalorder %s17, 0
      %p106 = por %p104, %p105
      %p107 = scmp.ne.s32.totalorder %s96, %s99
      %p108 = scmp.eq.s32.totalorder %s22, 5
      %p109 = por %p107, %p108
      %p110 = scmp.ne.s32.totalorder %s99, %s100
      %p111 = scmp.eq.s32.totalorder %s22, 0
      %p112 = por %p110, %p111
      %p113 = scmp.ne.s32.totalorder %s99, %s100
      %p114 = scmp.eq.s32.totalorder %s23, 5
      %p115 = por %p113, %p114
      %p117 = scmp.ne.s32.totalorder %s100, %s116
      %p118 = scmp.eq.s32.totalorder %s23, 0
      %p119 = por %p117, %p118
      %s121 = sadd.s32 %s120, 1
      %p124 = scmp.eq.s32.totalorder %s17, 5
      %p125 = scmp.ne.s32.totalorder %s120, %s122
      %p126 = scmp.eq.s32.totalorder %s17, 0
      %p127 = por %p125, %p126
      %p128 = scmp.ne.s32.totalorder %s120, %s122
      %p129 = scmp.eq.s32.totalorder %s22, 5
      %p130 = por %p128, %p129
      %p131 = scmp.ne.s32.totalorder %s122, %s123
      %p132 = scmp.eq.s32.totalorder %s22, 0
      %p133 = por %p131, %p132
      %p134 = scmp.ne.s32.totalorder %s122, %s123
      %p135 = scmp.eq.s32.totalorder %s23, 5
      %p136 = por %p134, %p135
      %p138 = scmp.ne.s32.totalorder %s123, %s137
      %p139 = scmp.eq.s32.totalorder %s23, 0
      %p140 = por %p138, %p139
      %s141 = ssub.s32 %s25, %s32
      %p142 = scmp.eq.s32.totalorder %s141, 0
      %s144 = sadd.s32 %s143, 1
      %s145 = scalar_select %p142, %s143, %s144
      %p148 = pneg %p142
      %p149 = scmp.eq.s32.totalorder %s17, 5
      %p150 = por %p148, %p149
      %p151 = scmp.ne.s32.totalorder %s143, %s146
      %p152 = scmp.eq.s32.totalorder %s17, 0
      %p153 = por %p151, %p152
      %p154 = scmp.ne.s32.totalorder %s143, %s146
      %p155 = scmp.eq.s32.totalorder %s22, 5
      %p156 = por %p154, %p155
      %p157 = scmp.ne.s32.totalorder %s146, %s147
      %p158 = scmp.eq.s32.totalorder %s22, 0
      %p159 = por %p157, %p158
      %p160 = scmp.ne.s32.totalorder %s146, %s147
      %p161 = scmp.eq.s32.totalorder %s23, 5
      %p162 = por %p160, %p161
      %p164 = scmp.ne.s32.totalorder %s147, %s163
      %p165 = scmp.eq.s32.totalorder %s23, 0
      %p166 = por %p164, %p165
      %s167 = ssub.s32 %s24, %s36
      %p168 = scmp.eq.s32.totalorder %s167, 0
      %s170 = sadd.s32 %s169, 1
      %s171 = scalar_select %p168, %s169, %s170
      %p174 = pneg %p168
      %p175 = scmp.eq.s32.totalorder %s17, 5
      %p176 = por %p174, %p175
      %p177 = scmp.ne.s32.totalorder %s169, %s172
      %p178 = scmp.eq.s32.totalorder %s17, 0
      %p179 = por %p177, %p178
      %p180 = scmp.ne.s32.totalorder %s169, %s172
      %p181 = scmp.eq.s32.totalorder %s22, 5
      %p182 = por %p180, %p181
      %p183 = scmp.ne.s32.totalorder %s172, %s173
      %p184 = scmp.eq.s32.totalorder %s22, 0
      %p185 = por %p183, %p184
      %p186 = scmp.ne.s32.totalorder %s172, %s173
      %p187 = scmp.eq.s32.totalorder %s23, 5
      %p188 = por %p186, %p187
      %p190 = scmp.ne.s32.totalorder %s173, %s189
      %p191 = scmp.eq.s32.totalorder %s23, 0
      %p192 = por %p190, %p191
      %p193 = scmp.le.s32.totalorder 1, %s17
      %p194 = scmp.lt.s32.totalorder %s17, 7
      %p195 = pnand %p193, %p194
      %p196 = pneg %p195
      // Predicated region
      $region9: #{tpu_custom_call.1} parent=5 // pred_check
        _
      $region10: #{tpu_custom_call.1} parent=5 // pred_check_branch
        %198 = sbr.rel (%p195) target = $region12
      $region11: #{tpu_custom_call.1} parent=5 // pred_region
        %s199 = ssub.s32 %s17, 1
        // Predicated region
        $region13: #{tpu_custom_call.1} parent=11 // pred_check
          %p200 = pneg %p55
        $region14: #{tpu_custom_call.1} parent=11 // pred_check_branch
          %202 = sbr.rel (%p200) target = $region16
        $region15: #{tpu_custom_call.1} parent=11 // pred_region
          %s204 = ssub.s32 128, 128
          %205 = vsyncadd [#allocation4], %s204
          %s206 = smul.addr %s26, 128
          %s207 = scalar_lea.hbm %s0, %s206
          %s209 = sshll.u32 [#allocation3], 4
          %s210 = int_to_ptr.vmem [resolvable:$true] %s209
          %212 = dma.hbm_to_vmem [thread:$0]  %s207, 128, %s210, [#allocation4]
        $region16: #{tpu_custom_call.1} parent=11 // pred_fallthru
          _
        // Predicated region
        $region17: #{tpu_custom_call.1} parent=11 // pred_check
          %p213 = pneg %p76
        $region18: #{tpu_custom_call.1} parent=11 // pred_check_branch
          %215 = sbr.rel (%p213) target = $region20
        $region19: #{tpu_custom_call.1} parent=11 // pred_region
          %s217 = ssub.s32 8192, 8192
          %218 = vsyncadd [#allocation7], %s217
          %s219 = sshll.u32 [#allocation6], 4
          %s220 = int_to_ptr.vmem [resolvable:$true] %s219
          %225 = dma.hbm_to_vmem [thread:$0]  %s1, 8192, %s220, [#allocation7], 512, 512, 32
        $region20: #{tpu_custom_call.1} parent=11 // pred_fallthru
          _
        // Predicated region
        $region21: #{tpu_custom_call.1} parent=11 // pred_check
          %p226 = pneg %p133
        $region22: #{tpu_custom_call.1} parent=11 // pred_check_branch
          %228 = sbr.rel (%p226) target = $region24
        $region23: #{tpu_custom_call.1} parent=11 // pred_region
          %s230 = ssub.s32 8192, 8192
          %231 = vsyncadd [#allocation7], %s230
          %s232 = sshll.u32 [#allocation9], 4
          %s233 = int_to_ptr.vmem [resolvable:$true] %s232
          %238 = dma.hbm_to_vmem [thread:$0]  %s3, 8192, %s233, [#allocation7], 64, 64, 4
        $region24: #{tpu_custom_call.1} parent=11 // pred_fallthru
          _
      $region12: #{tpu_custom_call.1} parent=5 // pred_fallthru
        _
      %p239 = scmp.lt.s32.totalorder %s17, 6
      // Predicated region
      $region25: #{tpu_custom_call.1} parent=5 // pred_check
        %p240 = pneg %p239
      $region26: #{tpu_custom_call.1} parent=5 // pred_check_branch
        %242 = sbr.rel (%p240) target = $region28
      $region27: #{tpu_custom_call.1} parent=5 // pred_region
        // Predicated region
        $region29: #{tpu_custom_call.1} parent=27 // pred_check
          %p243 = pneg %p106
        $region30: #{tpu_custom_call.1} parent=27 // pred_check_branch
          %245 = sbr.rel (%p243) target = $region32
        $region31: #{tpu_custom_call.1} parent=27 // pred_region
          %s246 = sand.u32 %s17, 1
          %s247 = scalar_lea.sflag [#allocation4], %s246
          %s248 = sand.u32 %s96, 1
          %s249 = smul.addr %s248, 4096
          %s250 = scalar_lea.vmem [#allocation8], %s249
          %s251 = ssub.s32 %s25, 1
          %p252 = scmp.gt.s32.totalorder %s251, 0
          %s253 = scalar_select %p252, %s251, 0
          %p254 = scmp.lt.s32.totalorder %s253, 3
          %s255 = scalar_select %p254, %s253, 3
          %s257 = ssub.s32 65536, 65536
          %258 = vsyncadd %s247, %s257
          %s259 = smul.addr %s255, 1024
          %s260 = smul.addr %s259, 64
          %s261 = scalar_lea.hbm %s2, %s260
          %s262 = sshll.u32 %s250, 4
          %s263 = int_to_ptr.vmem [resolvable:$true] %s262
          %268 = dma.hbm_to_vmem [thread:$0]  %s261, 65536, %s263, %s247, 512, 512, 32
        $region32: #{tpu_custom_call.1} parent=27 // pred_fallthru
          _
        // Predicated region
        $region33: #{tpu_custom_call.1} parent=27 // pred_check
          %p269 = pneg %p153
        $region34: #{tpu_custom_call.1} parent=27 // pred_check_branch
          %271 = sbr.rel (%p269) target = $region36
        $region35: #{tpu_custom_call.1} parent=27 // pred_region
          %s272 = sand.u32 %s143, 1
          %s273 = scalar_lea.sflag [#allocation11], %s272
          %s274 = sand.u32 %s143, 1
          %s275 = smul.addr %s274, 8
          %s276 = scalar_lea.vmem [#allocation10], %s275
          %s278 = ssub.s32 128, 128
          %279 = vsyncadd %s273, %s278
          %s280 = smul.addr %s25, 8
          %s281 = smul.addr %s280, 16
          %s282 = scalar_lea.hbm %s4, %s281
          %s284 = sshll.u32 %s276, 4
          %s285 = int_to_ptr.vmem [resolvable:$true] %s284
          %287 = dma.hbm_to_vmem [thread:$0]  %s282, 128, %s285, %s273
        $region36: #{tpu_custom_call.1} parent=27 // pred_fallthru
          _
      $region28: #{tpu_custom_call.1} parent=5 // pred_fallthru
        _
      %p288 = scmp.le.s32.totalorder 1, %s17
      %p289 = scmp.lt.s32.totalorder %s17, 7
      %p290 = pnand %p288, %p289
      %p291 = pneg %p290
      // Predicated region
      $region37: #{tpu_custom_call.1} parent=5 // pred_check
        _
      $region38: #{tpu_custom_call.1} parent=5 // pred_check_branch
        %293 = sbr.rel (%p290) target = $region40
      $region39: #{tpu_custom_call.1} parent=5 // pred_region
        %s294 = ssub.s32 %s17, 1
        // Predicated region
        $region41: #{tpu_custom_call.1} parent=39 // pred_check
          %p295 = pneg %p55
        $region42: #{tpu_custom_call.1} parent=39 // pred_check_branch
          %297 = sbr.rel (%p295) target = $region44
        $region43: #{tpu_custom_call.1} parent=39 // pred_region
          %298 = dma.done [#allocation4], 128
        $region44: #{tpu_custom_call.1} parent=39 // pred_fallthru
          _
        // Predicated region
        $region45: #{tpu_custom_call.1} parent=39 // pred_check
          %p299 = pneg %p76
        $region46: #{tpu_custom_call.1} parent=39 // pred_check_branch
          %301 = sbr.rel (%p299) target = $region48
        $region47: #{tpu_custom_call.1} parent=39 // pred_region
          %302 = dma.done [#allocation7], 8192
        $region48: #{tpu_custom_call.1} parent=39 // pred_fallthru
          _
        %s303 = sand.u32 %s22, 1
        %s304 = scalar_lea.sflag [#allocation4], %s303
        %s305 = sand.u32 %s99, 1
        %s306 = smul.addr %s305, 4096
        %s307 = scalar_lea.vmem [#allocation8], %s306
        // Predicated region
        $region49: #{tpu_custom_call.1} parent=39 // pred_check
          %p308 = pneg %p112
        $region50: #{tpu_custom_call.1} parent=39 // pred_check_branch
          %310 = sbr.rel (%p308) target = $region52
        $region51: #{tpu_custom_call.1} parent=39 // pred_region
          %311 = dma.done %s304, 65536
        $region52: #{tpu_custom_call.1} parent=39 // pred_fallthru
          _
        // Predicated region
        $region53: #{tpu_custom_call.1} parent=39 // pred_check
          %p312 = pneg %p133
        $region54: #{tpu_custom_call.1} parent=39 // pred_check_branch
          %314 = sbr.rel (%p312) target = $region56
        $region55: #{tpu_custom_call.1} parent=39 // pred_region
          %315 = dma.done [#allocation7], 8192
        $region56: #{tpu_custom_call.1} parent=39 // pred_fallthru
          _
        %s316 = sand.u32 %s146, 1
        %s317 = scalar_lea.sflag [#allocation11], %s316
        %s318 = sand.u32 %s146, 1
        %s319 = smul.addr %s318, 8
        %s320 = scalar_lea.vmem [#allocation10], %s319
        // Predicated region
        $region57: #{tpu_custom_call.1} parent=39 // pred_check
          %p321 = pneg %p159
        $region58: #{tpu_custom_call.1} parent=39 // pred_check_branch
          %323 = sbr.rel (%p321) target = $region60
        $region59: #{tpu_custom_call.1} parent=39 // pred_region
          %324 = dma.done %s317, 128
        $region60: #{tpu_custom_call.1} parent=39 // pred_fallthru
          _
        %p325 = pneg %p55
        %p326 = pneg %p52
        %p327 = pneg %p76
        %p328 = pneg %p73
        %s329 = sand.u32 %s22, 1
        %s330 = scalar_lea.sflag [#allocation4], %s329
        %s331 = sand.u32 %s99, 1
        %s332 = smul.addr %s331, 4096
        %s333 = scalar_lea.vmem [#allocation8], %s332
        %p334 = pneg %p112
        %p335 = pneg %p109
        %p336 = pneg %p133
        %p337 = pneg %p130
        %s338 = sand.u32 %s146, 1
        %s339 = scalar_lea.sflag [#allocation11], %s338
        %s340 = sand.u32 %s146, 1
        %s341 = smul.addr %s340, 8
        %s342 = scalar_lea.vmem [#allocation10], %s341
        %p343 = pneg %p159
        %p344 = pneg %p156
        %p345 = pneg %p185
        %p346 = pneg %p182
        %s347 = ssub.s32 %s27, 1
        %p348 = scmp.gt.s32.totalorder %s347, 0
        %s349 = scalar_select %p348, %s347, 0
        %p350 = scmp.lt.s32.totalorder %s349, 3
        %s351 = scalar_select %p350, %s349, 3
        %v353 = vld [vmem:[%s320] sm:$0xff]
        %p354 = scmp.eq.s32.totalorder %s27, 0
        // Predicated region
        $region61: #{tpu_custom_call.1} parent=39 // pred_check
          %p355 = pneg %p354
        $region62: #{tpu_custom_call.1} parent=39 // pred_check_branch
          %357 = sbr.rel (%p355) target = $region64
        $region63: #{tpu_custom_call.1} parent=39 // pred_region
          %v358 = vld [vmem:[#allocation3] sm:$0xff]
          %v359 = vpack.c.bf16 %v358, %v358
          %v360 = vld [vmem:[#allocation6] sm:$0xff]
          %v361 = vld [vmem:[#allocation6 + $0x8] sm:$0xff]
          %v362 = vld [vmem:[#allocation6 + $0x10] sm:$0xff]
          %v363 = vld [vmem:[#allocation6 + $0x18] sm:$0xff]
          %v364 = vld [vmem:[#allocation6 + $0x20] sm:$0xff]
          %v365 = vld [vmem:[#allocation6 + $0x28] sm:$0xff]
          %v366 = vld [vmem:[#allocation6 + $0x30] sm:$0xff]
          %v367 = vld [vmem:[#allocation6 + $0x38] sm:$0xff]
          %v368 = vld [vmem:[#allocation6 + $0x40] sm:$0xff]
          %v369 = vld [vmem:[#allocation6 + $0x48] sm:$0xff]
          %v370 = vld [vmem:[#allocation6 + $0x50] sm:$0xff]
          %v371 = vld [vmem:[#allocation6 + $0x58] sm:$0xff]
          %v372 = vld [vmem:[#allocation6 + $0x60] sm:$0xff]
          %v373 = vld [vmem:[#allocation6 + $0x68] sm:$0xff]
          %v374 = vld [vmem:[#allocation6 + $0x70] sm:$0xff]
          %v375 = vld [vmem:[#allocation6 + $0x78] sm:$0xff]
          %v376 = vld [vmem:[#allocation6 + $0x80] sm:$0xff]
          %v377 = vld [vmem:[#allocation6 + $0x88] sm:$0xff]
          %v378 = vld [vmem:[#allocation6 + $0x90] sm:$0xff]
          %v379 = vld [vmem:[#allocation6 + $0x98] sm:$0xff]
          %v380 = vld [vmem:[#allocation6 + $0xa0] sm:$0xff]
          %v381 = vld [vmem:[#allocation6 + $0xa8] sm:$0xff]
          %v382 = vld [vmem:[#allocation6 + $0xb0] sm:$0xff]
          %v383 = vld [vmem:[#allocation6 + $0xb8] sm:$0xff]
          %v384 = vld [vmem:[#allocation6 + $0xc0] sm:$0xff]
          %v385 = vld [vmem:[#allocation6 + $0xc8] sm:$0xff]
          %v386 = vld [vmem:[#allocation6 + $0xd0] sm:$0xff]
          %v387 = vld [vmem:[#allocation6 + $0xd8] sm:$0xff]
          %v388 = vld [vmem:[#allocation6 + $0xe0] sm:$0xff]
          %v389 = vld [vmem:[#allocation6 + $0xe8] sm:$0xff]
          %v390 = vld [vmem:[#allocation6 + $0xf0] sm:$0xff]
          %v391 = vld [vmem:[#allocation6 + $0xf8] sm:$0xff]
          %v392 = vld [vmem:[#allocation6 + $0x100] sm:$0xff]
          %v393 = vld [vmem:[#allocation6 + $0x108] sm:$0xff]
          %v394 = vld [vmem:[#allocation6 + $0x110] sm:$0xff]
          %v395 = vld [vmem:[#allocation6 + $0x118] sm:$0xff]
          %v396 = vld [vmem:[#allocation6 + $0x120] sm:$0xff]
          %v397 = vld [vmem:[#allocation6 + $0x128] sm:$0xff]
          %v398 = vld [vmem:[#allocation6 + $0x130] sm:$0xff]
          %v399 = vld [vmem:[#allocation6 + $0x138] sm:$0xff]
          %v400 = vld [vmem:[#allocation6 + $0x140] sm:$0xff]
          %v401 = vld [vmem:[#allocation6 + $0x148] sm:$0xff]
          %v402 = vld [vmem:[#allocation6 + $0x150] sm:$0xff]
          %v403 = vld [vmem:[#allocation6 + $0x158] sm:$0xff]
          %v404 = vld [vmem:[#allocation6 + $0x160] sm:$0xff]
          %v405 = vld [vmem:[#allocation6 + $0x168] sm:$0xff]
          %v406 = vld [vmem:[#allocation6 + $0x170] sm:$0xff]
          %v407 = vld [vmem:[#allocation6 + $0x178] sm:$0xff]
          %v408 = vld [vmem:[#allocation6 + $0x180] sm:$0xff]
          %v409 = vld [vmem:[#allocation6 + $0x188] sm:$0xff]
          %v410 = vld [vmem:[#allocation6 + $0x190] sm:$0xff]
          %v411 = vld [vmem:[#allocation6 + $0x198] sm:$0xff]
          %v412 = vld [vmem:[#allocation6 + $0x1a0] sm:$0xff]
          %v413 = vld [vmem:[#allocation6 + $0x1a8] sm:$0xff]
          %v414 = vld [vmem:[#allocation6 + $0x1b0] sm:$0xff]
          %v415 = vld [vmem:[#allocation6 + $0x1b8] sm:$0xff]
          %v416 = vld [vmem:[#allocation6 + $0x1c0] sm:$0xff]
          %v417 = vld [vmem:[#allocation6 + $0x1c8] sm:$0xff]
          %v418 = vld [vmem:[#allocation6 + $0x1d0] sm:$0xff]
          %v419 = vld [vmem:[#allocation6 + $0x1d8] sm:$0xff]
          %v420 = vld [vmem:[#allocation6 + $0x1e0] sm:$0xff]
          %v421 = vld [vmem:[#allocation6 + $0x1e8] sm:$0xff]
          %v422 = vld [vmem:[#allocation6 + $0x1f0] sm:$0xff]
          %v423 = vld [vmem:[#allocation6 + $0x1f8] sm:$0xff]
          %v425 = vlaneseq
          %v426 = vshrl.u32 %v425, 7
          %v427 = vsub.s32 0, %v426
          %v428 = vrot.slane %v353, %v427
          %v429 = vlaneseq
          %v430 = vshrl.u32 %v429, 7
          %v431 = vsub.s32 1, %v430
          %v432 = vrot.slane %v353, %v431
          %v433 = vlaneseq
          %v434 = vshrl.u32 %v433, 7
          %v435 = vsub.s32 2, %v434
          %v436 = vrot.slane %v353, %v435
          %v437 = vlaneseq
          %v438 = vshrl.u32 %v437, 7
          %v439 = vsub.s32 3, %v438
          %v440 = vrot.slane %v353, %v439
          %v441 = vlaneseq
          %v442 = vshrl.u32 %v441, 7
          %v443 = vsub.s32 4, %v442
          %v444 = vrot.slane %v353, %v443
          %v445 = vlaneseq
          %v446 = vshrl.u32 %v445, 7
          %v447 = vsub.s32 5, %v446
          %v448 = vrot.slane %v353, %v447
          %v449 = vlaneseq
          %v450 = vshrl.u32 %v449, 7
          %v451 = vsub.s32 6, %v450
          %v452 = vrot.slane %v353, %v451
          %v453 = vlaneseq
          %v454 = vshrl.u32 %v453, 7
          %v455 = vsub.s32 7, %v454
          %v456 = vrot.slane %v353, %v455
          %v529 = vunpack.c.l.b16 %v360
          %v530 = vunpack.c.h.b16 %v360
          %v531 = vunpack.c.l.b16 %v361
          %v532 = vunpack.c.h.b16 %v361
          %v533 = vunpack.c.l.b16 %v362
          %v534 = vunpack.c.h.b16 %v362
          %v535 = vunpack.c.l.b16 %v363
          %v536 = vunpack.c.h.b16 %v363
          %v537 = vunpack.c.l.b16 %v364
          %v538 = vunpack.c.h.b16 %v364
          %v539 = vunpack.c.l.b16 %v365
          %v540 = vunpack.c.h.b16 %v365
          %v541 = vunpack.c.l.b16 %v366
          %v542 = vunpack.c.h.b16 %v366
          %v543 = vunpack.c.l.b16 %v367
          %v544 = vunpack.c.h.b16 %v367
          %v545 = vunpack.c.l.b16 %v368
          %v546 = vunpack.c.h.b16 %v368
          %v547 = vunpack.c.l.b16 %v369
          %v548 = vunpack.c.h.b16 %v369
          %v549 = vunpack.c.l.b16 %v370
          %v550 = vunpack.c.h.b16 %v370
          %v551 = vunpack.c.l.b16 %v371
          %v552 = vunpack.c.h.b16 %v371
          %v553 = vunpack.c.l.b16 %v372
          %v554 = vunpack.c.h.b16 %v372
          %v555 = vunpack.c.l.b16 %v373
          %v556 = vunpack.c.h.b16 %v373
          %v557 = vunpack.c.l.b16 %v374
          %v558 = vunpack.c.h.b16 %v374
          %v559 = vunpack.c.l.b16 %v375
          %v560 = vunpack.c.h.b16 %v375
          %v561 = vunpack.c.l.b16 %v376
          %v562 = vunpack.c.h.b16 %v376
          %v563 = vunpack.c.l.b16 %v377
          %v564 = vunpack.c.h.b16 %v377
          %v565 = vunpack.c.l.b16 %v378
          %v566 = vunpack.c.h.b16 %v378
          %v567 = vunpack.c.l.b16 %v379
          %v568 = vunpack.c.h.b16 %v379
          %v569 = vunpack.c.l.b16 %v380
          %v570 = vunpack.c.h.b16 %v380
          %v571 = vunpack.c.l.b16 %v381
          %v572 = vunpack.c.h.b16 %v381
          %v573 = vunpack.c.l.b16 %v382
          %v574 = vunpack.c.h.b16 %v382
          %v575 = vunpack.c.l.b16 %v383
          %v576 = vunpack.c.h.b16 %v383
          %v577 = vunpack.c.l.b16 %v384
          %v578 = vunpack.c.h.b16 %v384
          %v579 = vunpack.c.l.b16 %v385
          %v580 = vunpack.c.h.b16 %v385
          %v581 = vunpack.c.l.b16 %v386
          %v582 = vunpack.c.h.b16 %v386
          %v583 = vunpack.c.l.b16 %v387
          %v584 = vunpack.c.h.b16 %v387
          %v585 = vunpack.c.l.b16 %v388
          %v586 = vunpack.c.h.b16 %v388
          %v587 = vunpack.c.l.b16 %v389
          %v588 = vunpack.c.h.b16 %v389
          %v589 = vunpack.c.l.b16 %v390
          %v590 = vunpack.c.h.b16 %v390
          %v591 = vunpack.c.l.b16 %v391
          %v592 = vunpack.c.h.b16 %v391
          %v593 = vunpack.c.l.b16 %v392
          %v594 = vunpack.c.h.b16 %v392
          %v595 = vunpack.c.l.b16 %v393
          %v596 = vunpack.c.h.b16 %v393
          %v597 = vunpack.c.l.b16 %v394
          %v598 = vunpack.c.h.b16 %v394
          %v599 = vunpack.c.l.b16 %v395
          %v600 = vunpack.c.h.b16 %v395
          %v601 = vunpack.c.l.b16 %v396
          %v602 = vunpack.c.h.b16 %v396
          %v603 = vunpack.c.l.b16 %v397
          %v604 = vunpack.c.h.b16 %v397
          %v605 = vunpack.c.l.b16 %v398
          %v606 = vunpack.c.h.b16 %v398
          %v607 = vunpack.c.l.b16 %v399
          %v608 = vunpack.c.h.b16 %v399
          %v609 = vunpack.c.l.b16 %v400
          %v610 = vunpack.c.h.b16 %v400
          %v611 = vunpack.c.l.b16 %v401
          %v612 = vunpack.c.h.b16 %v401
          %v613 = vunpack.c.l.b16 %v402
          %v614 = vunpack.c.h.b16 %v402
          %v615 = vunpack.c.l.b16 %v403
          %v616 = vunpack.c.h.b16 %v403
          %v617 = vunpack.c.l.b16 %v404
          %v618 = vunpack.c.h.b16 %v404
          %v619 = vunpack.c.l.b16 %v405
          %v620 = vunpack.c.h.b16 %v405
          %v621 = vunpack.c.l.b16 %v406
          %v622 = vunpack.c.h.b16 %v406
          %v623 = vunpack.c.l.b16 %v407
          %v624 = vunpack.c.h.b16 %v407
          %v625 = vunpack.c.l.b16 %v408
          %v626 = vunpack.c.h.b16 %v408
          %v627 = vunpack.c.l.b16 %v409
          %v628 = vunpack.c.h.b16 %v409
          %v629 = vunpack.c.l.b16 %v410
          %v630 = vunpack.c.h.b16 %v410
          %v631 = vunpack.c.l.b16 %v411
          %v632 = vunpack.c.h.b16 %v411
          %v633 = vunpack.c.l.b16 %v412
          %v634 = vunpack.c.h.b16 %v412
          %v635 = vunpack.c.l.b16 %v413
          %v636 = vunpack.c.h.b16 %v413
          %v637 = vunpack.c.l.b16 %v414
          %v638 = vunpack.c.h.b16 %v414
          %v639 = vunpack.c.l.b16 %v415
          %v640 = vunpack.c.h.b16 %v415
          %v641 = vunpack.c.l.b16 %v416
          %v642 = vunpack.c.h.b16 %v416
          %v643 = vunpack.c.l.b16 %v417
          %v644 = vunpack.c.h.b16 %v417
          %v645 = vunpack.c.l.b16 %v418
          %v646 = vunpack.c.h.b16 %v418
          %v647 = vunpack.c.l.b16 %v419
          %v648 = vunpack.c.h.b16 %v419
          %v649 = vunpack.c.l.b16 %v420
          %v650 = vunpack.c.h.b16 %v420
          %v651 = vunpack.c.l.b16 %v421
          %v652 = vunpack.c.h.b16 %v421
          %v653 = vunpack.c.l.b16 %v422
          %v654 = vunpack.c.h.b16 %v422
          %v655 = vunpack.c.l.b16 %v423
          %v656 = vunpack.c.h.b16 %v423
          %v657 = vpack.c.b16 %v537, %v529
          %v658 = vpack.c.b16 %v538, %v530
          %v659 = vpack.c.b16 %v539, %v531
          %v660 = vpack.c.b16 %v540, %v532
          %v661 = vpack.c.b16 %v541, %v533
          %v662 = vpack.c.b16 %v542, %v534
          %v663 = vpack.c.b16 %v543, %v535
          %v664 = vpack.c.b16 %v544, %v536
          %v665 = vpack.c.b16 %v553, %v545
          %v666 = vpack.c.b16 %v554, %v546
          %v667 = vpack.c.b16 %v555, %v547
          %v668 = vpack.c.b16 %v556, %v548
          %v669 = vpack.c.b16 %v557, %v549
          %v670 = vpack.c.b16 %v558, %v550
          %v671 = vpack.c.b16 %v559, %v551
          %v672 = vpack.c.b16 %v560, %v552
          %v673 = vpack.c.b16 %v569, %v561
          %v674 = vpack.c.b16 %v570, %v562
          %v675 = vpack.c.b16 %v571, %v563
          %v676 = vpack.c.b16 %v572, %v564
          %v677 = vpack.c.b16 %v573, %v565
          %v678 = vpack.c.b16 %v574, %v566
          %v679 = vpack.c.b16 %v575, %v567
          %v680 = vpack.c.b16 %v576, %v568
          %v681 = vpack.c.b16 %v585, %v577
          %v682 = vpack.c.b16 %v586, %v578
          %v683 = vpack.c.b16 %v587, %v579
          %v684 = vpack.c.b16 %v588, %v580
          %v685 = vpack.c.b16 %v589, %v581
          %v686 = vpack.c.b16 %v590, %v582
          %v687 = vpack.c.b16 %v591, %v583
          %v688 = vpack.c.b16 %v592, %v584
          %v689 = vpack.c.b16 %v601, %v593
          %v690 = vpack.c.b16 %v602, %v594
          %v691 = vpack.c.b16 %v603, %v595
          %v692 = vpack.c.b16 %v604, %v596
          %v693 = vpack.c.b16 %v605, %v597
          %v694 = vpack.c.b16 %v606, %v598
          %v695 = vpack.c.b16 %v607, %v599
          %v696 = vpack.c.b16 %v608, %v600
          %v697 = vpack.c.b16 %v617, %v609
          %v698 = vpack.c.b16 %v618, %v610
          %v699 = vpack.c.b16 %v619, %v611
          %v700 = vpack.c.b16 %v620, %v612
          %v701 = vpack.c.b16 %v621, %v613
          %v702 = vpack.c.b16 %v622, %v614
          %v703 = vpack.c.b16 %v623, %v615
          %v704 = vpack.c.b16 %v624, %v616
          %v705 = vpack.c.b16 %v633, %v625
          %v706 = vpack.c.b16 %v634, %v626
          %v707 = vpack.c.b16 %v635, %v627
          %v708 = vpack.c.b16 %v636, %v628
          %v709 = vpack.c.b16 %v637, %v629
          %v710 = vpack.c.b16 %v638, %v630
          %v711 = vpack.c.b16 %v639, %v631
          %v712 = vpack.c.b16 %v640, %v632
          %v713 = vpack.c.b16 %v649, %v641
          %v714 = vpack.c.b16 %v650, %v642
          %v715 = vpack.c.b16 %v651, %v643
          %v716 = vpack.c.b16 %v652, %v644
          %v717 = vpack.c.b16 %v653, %v645
          %v718 = vpack.c.b16 %v654, %v646
          %v719 = vpack.c.b16 %v655, %v647
          %v720 = vpack.c.b16 %v656, %v648
          %785 = vmatprep.subr.bf16.mxu0 %v714
          %786 = vmatpush1.bf16.msra.mxu0 %v713
          %787 = vmatprep.subr.bf16.mxu0 %v706
          %788 = vmatpush1.bf16.msra.mxu0 %v705
          %789 = vmatprep.subr.bf16.mxu0 %v698
          %790 = vmatpush1.bf16.msra.mxu0 %v697
          %791 = vmatprep.subr.bf16.mxu0 %v690
          %792 = vmatpush1.bf16.msra.mxu0 %v689
          %793 = vmatprep.subr.bf16.mxu0 %v682
          %794 = vmatpush1.bf16.msra.mxu0 %v681
          %795 = vmatprep.subr.bf16.mxu0 %v674
          %796 = vmatpush1.bf16.msra.mxu0 %v673
          %797 = vmatprep.subr.bf16.mxu0 %v666
          %798 = vmatpush1.bf16.msra.mxu0 %v665
          %799 = vmatprep.subr.bf16.mxu0 %v658
          %800 = vmatpush1.bf16.msra.mxu0 %v657
          %801 = vmatprep.subr.bf16.mxu0 0
          %802 = vmatpush2.bf16.msra.mxu0 0
          %803 = vmatprep.subr.bf16.mxu0 0
          %804 = vmatpush2.bf16.msra.mxu0 0
          %805 = vmatprep.subr.bf16.mxu0 0
          %806 = vmatpush2.bf16.msra.mxu0 0
          %807 = vmatprep.subr.bf16.mxu0 0
          %808 = vmatpush2.bf16.msra.mxu0 0
          %809 = vmatprep.subr.bf16.mxu0 0
          %810 = vmatpush2.bf16.msra.mxu0 0
          %811 = vmatprep.subr.bf16.mxu0 0
          %812 = vmatpush2.bf16.msra.mxu0 0
          %813 = vmatprep.subr.bf16.mxu0 0
          %814 = vmatpush2.bf16.msra.mxu0 0
          %815 = vmatprep.subr.bf16.mxu0 0
          %816 = vmatpush2.bf16.msra.mxu0 0
          %817 = vmatprep.mubr.bf16.mxu0 0
          %818 = vmatmul.mubr.bf16.gmra.mxu0 %v359
          %v819 = vpop.f32.mrf.mxu0
          %v820 = vadd.f32 %v428, %v819
          %v821 = vpop.f32.mrf.mxu0
          %v822 = vadd.f32 %v432, %v821
          %v823 = vpop.f32.mrf.mxu0
          %v824 = vpop.f32.mrf.mxu0
          %825 = vdwg.mxu0
          %826 = vmatprep.subr.bf16.mxu0 %v716
          %827 = vmatpush1.bf16.msra.mxu0 %v715
          %828 = vmatprep.subr.bf16.mxu0 %v708
          %829 = vmatpush1.bf16.msra.mxu0 %v707
          %830 = vmatprep.subr.bf16.mxu0 %v700
          %831 = vmatpush1.bf16.msra.mxu0 %v699
          %832 = vmatprep.subr.bf16.mxu0 %v692
          %833 = vmatpush1.bf16.msra.mxu0 %v691
          %834 = vmatprep.subr.bf16.mxu0 %v684
          %835 = vmatpush1.bf16.msra.mxu0 %v683
          %836 = vmatprep.subr.bf16.mxu0 %v676
          %837 = vmatpush1.bf16.msra.mxu0 %v675
          %838 = vmatprep.subr.bf16.mxu0 %v668
          %839 = vmatpush1.bf16.msra.mxu0 %v667
          %840 = vmatprep.subr.bf16.mxu0 %v660
          %841 = vmatpush1.bf16.msra.mxu0 %v659
          %842 = vmatprep.subr.bf16.mxu0 0
          %843 = vmatpush2.bf16.msra.mxu0 0
          %844 = vmatprep.subr.bf16.mxu0 0
          %845 = vmatpush2.bf16.msra.mxu0 0
          %846 = vmatprep.subr.bf16.mxu0 0
          %847 = vmatpush2.bf16.msra.mxu0 0
          %848 = vmatprep.subr.bf16.mxu0 0
          %849 = vmatpush2.bf16.msra.mxu0 0
          %850 = vmatprep.subr.bf16.mxu0 0
          %851 = vmatpush2.bf16.msra.mxu0 0
          %852 = vmatprep.subr.bf16.mxu0 0
          %853 = vmatpush2.bf16.msra.mxu0 0
          %854 = vmatprep.subr.bf16.mxu0 0
          %855 = vmatpush2.bf16.msra.mxu0 0
          %856 = vmatprep.subr.bf16.mxu0 0
          %857 = vmatpush2.bf16.msra.mxu0 0
          %858 = vmatprep.mubr.bf16.mxu0 0
          %859 = vmatmul.mubr.bf16.gmra.mxu0 %v359
          %v860 = vpop.f32.mrf.mxu0
          %v861 = vadd.f32 %v436, %v860
          %v862 = vpop.f32.mrf.mxu0
          %v863 = vadd.f32 %v440, %v862
          %v864 = vpop.f32.mrf.mxu0
          %v865 = vpop.f32.mrf.mxu0
          %866 = vdwg.mxu0
          %867 = vmatprep.subr.bf16.mxu0 %v718
          %868 = vmatpush1.bf16.msra.mxu0 %v717
          %869 = vmatprep.subr.bf16.mxu0 %v710
          %870 = vmatpush1.bf16.msra.mxu0 %v709
          %871 = vmatprep.subr.bf16.mxu0 %v702
          %872 = vmatpush1.bf16.msra.mxu0 %v701
          %873 = vmatprep.subr.bf16.mxu0 %v694
          %874 = vmatpush1.bf16.msra.mxu0 %v693
          %875 = vmatprep.subr.bf16.mxu0 %v686
          %876 = vmatpush1.bf16.msra.mxu0 %v685
          %877 = vmatprep.subr.bf16.mxu0 %v678
          %878 = vmatpush1.bf16.msra.mxu0 %v677
          %879 = vmatprep.subr.bf16.mxu0 %v670
          %880 = vmatpush1.bf16.msra.mxu0 %v669
          %881 = vmatprep.subr.bf16.mxu0 %v662
          %882 = vmatpush1.bf16.msra.mxu0 %v661
          %883 = vmatprep.subr.bf16.mxu0 0
          %884 = vmatpush2.bf16.msra.mxu0 0
          %885 = vmatprep.subr.bf16.mxu0 0
          %886 = vmatpush2.bf16.msra.mxu0 0
          %887 = vmatprep.subr.bf16.mxu0 0
          %888 = vmatpush2.bf16.msra.mxu0 0
          %889 = vmatprep.subr.bf16.mxu0 0
          %890 = vmatpush2.bf16.msra.mxu0 0
          %891 = vmatprep.subr.bf16.mxu0 0
          %892 = vmatpush2.bf16.msra.mxu0 0
          %893 = vmatprep.subr.bf16.mxu0 0
          %894 = vmatpush2.bf16.msra.mxu0 0
          %895 = vmatprep.subr.bf16.mxu0 0
          %896 = vmatpush2.bf16.msra.mxu0 0
          %897 = vmatprep.subr.bf16.mxu0 0
          %898 = vmatpush2.bf16.msra.mxu0 0
          %899 = vmatprep.mubr.bf16.mxu0 0
          %900 = vmatmul.mubr.bf16.gmra.mxu0 %v359
          %v901 = vpop.f32.mrf.mxu0
          %v902 = vadd.f32 %v444, %v901
          %v903 = vpop.f32.mrf.mxu0
          %v904 = vadd.f32 %v448, %v903
          %v905 = vpop.f32.mrf.mxu0
          %v906 = vpop.f32.mrf.mxu0
          %907 = vdwg.mxu0
          %908 = vmatprep.subr.bf16.mxu0 %v720
          %909 = vmatpush1.bf16.msra.mxu0 %v719
          %910 = vmatprep.subr.bf16.mxu0 %v712
          %911 = vmatpush1.bf16.msra.mxu0 %v711
          %912 = vmatprep.subr.bf16.mxu0 %v704
          %913 = vmatpush1.bf16.msra.mxu0 %v703
          %914 = vmatprep.subr.bf16.mxu0 %v696
          %915 = vmatpush1.bf16.msra.mxu0 %v695
          %916 = vmatprep.subr.bf16.mxu0 %v688
          %917 = vmatpush1.bf16.msra.mxu0 %v687
          %918 = vmatprep.subr.bf16.mxu0 %v680
          %919 = vmatpush1.bf16.msra.mxu0 %v679
          %920 = vmatprep.subr.bf16.mxu0 %v672
          %921 = vmatpush1.bf16.msra.mxu0 %v671
          %922 = vmatprep.subr.bf16.mxu0 %v664
          %923 = vmatpush1.bf16.msra.mxu0 %v663
          %924 = vmatprep.subr.bf16.mxu0 0
          %925 = vmatpush2.bf16.msra.mxu0 0
          %926 = vmatprep.subr.bf16.mxu0 0
          %927 = vmatpush2.bf16.msra.mxu0 0
          %928 = vmatprep.subr.bf16.mxu0 0
          %929 = vmatpush2.bf16.msra.mxu0 0
          %930 = vmatprep.subr.bf16.mxu0 0
          %931 = vmatpush2.bf16.msra.mxu0 0
          %932 = vmatprep.subr.bf16.mxu0 0
          %933 = vmatpush2.bf16.msra.mxu0 0
          %934 = vmatprep.subr.bf16.mxu0 0
          %935 = vmatpush2.bf16.msra.mxu0 0
          %936 = vmatprep.subr.bf16.mxu0 0
          %937 = vmatpush2.bf16.msra.mxu0 0
          %938 = vmatprep.subr.bf16.mxu0 0
          %939 = vmatpush2.bf16.msra.mxu0 0
          %940 = vmatprep.mubr.bf16.mxu0 0
          %941 = vmatmul.mubr.bf16.gmra.mxu0 %v359
          %v942 = vpop.f32.mrf.mxu0
          %v943 = vadd.f32 %v452, %v942
          %v944 = vpop.f32.mrf.mxu0
          %v945 = vadd.f32 %v456, %v944
          %v946 = vpop.f32.mrf.mxu0
          %v947 = vpop.f32.mrf.mxu0
          %948 = vdwg.mxu0
          %vm949 = vcmp.ge.f32.partialorder %v820, 0.0
          %vm950 = vcmp.ge.f32.partialorder %v822, 0.0
          %vm951 = vcmp.ge.f32.partialorder %v861, 0.0
          %vm952 = vcmp.ge.f32.partialorder %v863, 0.0
          %vm953 = vcmp.ge.f32.partialorder %v902, 0.0
          %vm954 = vcmp.ge.f32.partialorder %v904, 0.0
          %vm955 = vcmp.ge.f32.partialorder %v943, 0.0
          %vm956 = vcmp.ge.f32.partialorder %v945, 0.0
          %v957 = vmul.f32 %v820, 0.2
          %v958 = vmul.f32 %v822, 0.2
          %v959 = vmul.f32 %v861, 0.2
          %v960 = vmul.f32 %v863, 0.2
          %v961 = vmul.f32 %v902, 0.2
          %v962 = vmul.f32 %v904, 0.2
          %v963 = vmul.f32 %v943, 0.2
          %v964 = vmul.f32 %v945, 0.2
          %v965 = vsel %vm949, %v820, %v957
          %v966 = vsel %vm950, %v822, %v958
          %v967 = vsel %vm951, %v861, %v959
          %v968 = vsel %vm952, %v863, %v960
          %v969 = vsel %vm953, %v902, %v961
          %v970 = vsel %vm954, %v904, %v962
          %v971 = vsel %vm955, %v943, %v963
          %v972 = vsel %vm956, %v945, %v964
          %v973 = vpack.c.bf16 %v965, %v965
          %v974 = vpack.c.bf16 %v966, %v966
          %v975 = vpack.c.bf16 %v967, %v967
          %v976 = vpack.c.bf16 %v968, %v968
          %v977 = vpack.c.bf16 %v969, %v969
          %v978 = vpack.c.bf16 %v970, %v970
          %v979 = vpack.c.bf16 %v971, %v971
          %v980 = vpack.c.bf16 %v972, %v972
          %v989 = vunpack.c.l.b16 %v973
          %v990 = vunpack.c.l.b16 %v974
          %v991 = vunpack.c.l.b16 %v975
          %v992 = vunpack.c.l.b16 %v976
          %v993 = vunpack.c.l.b16 %v977
          %v994 = vunpack.c.l.b16 %v978
          %v995 = vunpack.c.l.b16 %v979
          %v996 = vunpack.c.l.b16 %v980
          %v997 = vpack.c.b16 %v990, %v989
          %v998 = vpack.c.b16 %v992, %v991
          %v999 = vpack.c.b16 %v994, %v993
          %v1000 = vpack.c.b16 %v996, %v995
          %1005 = vst [vmem:[#allocation2] sm:$0xff] %v997
          %1006 = vst [vmem:[#allocation2 + $0x8] sm:$0xff] %v998
          %1007 = vst [vmem:[#allocation2 + $0x10] sm:$0xff] %v999
          %1008 = vst [vmem:[#allocation2 + $0x18] sm:$0xff] %v1000
        $region64: #{tpu_custom_call.1} parent=39 // pred_fallthru
          _
        %p1009 = scmp.gt.s32.totalorder %s27, 0
        %p1010 = scmp.lt.s32.totalorder %s27, 5
        %p1011 = pnand %p1009, %p1010
        %p1012 = pneg %p1011
        // Predicated region
        $region65: #{tpu_custom_call.1} parent=39 // pred_check
          _
        $region66: #{tpu_custom_call.1} parent=39 // pred_check_branch
          %1014 = sbr.rel (%p1011) target = $region68
        $region67: #{tpu_custom_call.1} parent=39 // pred_region
          %v1015 = vld [vmem:[#allocation2] sm:$0xff]
          %v1016 = vld [vmem:[#allocation2 + $0x8] sm:$0xff]
          %v1017 = vld [vmem:[#allocation2 + $0x10] sm:$0xff]
          %v1018 = vld [vmem:[#allocation2 + $0x18] sm:$0xff]
          %v1019 = vld [vmem:[%s307] sm:$0xff]
          %v1020 = vld [vmem:[%s307 + $0x8] sm:$0xff]
          %v1021 = vld [vmem:[%s307 + $0x10] sm:$0xff]
          %v1022 = vld [vmem:[%s307 + $0x18] sm:$0xff]
          %v1023 = vld [vmem:[%s307 + $0x20] sm:$0xff]
          %v1024 = vld [vmem:[%s307 + $0x28] sm:$0xff]
          %v1025 = vld [vmem:[%s307 + $0x30] sm:$0xff]
          %v1026 = vld [vmem:[%s307 + $0x38] sm:$0xff]
          %v1027 = vld [vmem:[%s307 + $0x40] sm:$0xff]
          %v1028 = vld [vmem:[%s307 + $0x48] sm:$0xff]
          %v1029 = vld [vmem:[%s307 + $0x50] sm:$0xff]
          %v1030 = vld [vmem:[%s307 + $0x58] sm:$0xff]
          %v1031 = vld [vmem:[%s307 + $0x60] sm:$0xff]
          %v1032 = vld [vmem:[%s307 + $0x68] sm:$0xff]
          %v1033 = vld [vmem:[%s307 + $0x70] sm:$0xff]
          %v1034 = vld [vmem:[%s307 + $0x78] sm:$0xff]
          %v1035 = vld [vmem:[%s307 + $0x80] sm:$0xff]
          %v1036 = vld [vmem:[%s307 + $0x88] sm:$0xff]
          %v1037 = vld [vmem:[%s307 + $0x90] sm:$0xff]
          %v1038 = vld [vmem:[%s307 + $0x98] sm:$0xff]
          %v1039 = vld [vmem:[%s307 + $0xa0] sm:$0xff]
          %v1040 = vld [vmem:[%s307 + $0xa8] sm:$0xff]
          %v1041 = vld [vmem:[%s307 + $0xb0] sm:$0xff]
          %v1042 = vld [vmem:[%s307 + $0xb8] sm:$0xff]
          %v1043 = vld [vmem:[%s307 + $0xc0] sm:$0xff]
          %v1044 = vld [vmem:[%s307 + $0xc8] sm:$0xff]
          %v1045 = vld [vmem:[%s307 + $0xd0] sm:$0xff]
          %v1046 = vld [vmem:[%s307 + $0xd8] sm:$0xff]
          %v1047 = vld [vmem:[%s307 + $0xe0] sm:$0xff]
          %v1048 = vld [vmem:[%s307 + $0xe8] sm:$0xff]
          %v1049 = vld [vmem:[%s307 + $0xf0] sm:$0xff]
          %v1050 = vld [vmem:[%s307 + $0xf8] sm:$0xff]
          %v1051 = vld [vmem:[%s307 + $0x100] sm:$0xff]
          %v1052 = vld [vmem:[%s307 + $0x108] sm:$0xff]
          %v1053 = vld [vmem:[%s307 + $0x110] sm:$0xff]
          %v1054 = vld [vmem:[%s307 + $0x118] sm:$0xff]
          %v1055 = vld [vmem:[%s307 + $0x120] sm:$0xff]
          %v1056 = vld [vmem:[%s307 + $0x128] sm:$0xff]
          %v1057 = vld [vmem:[%s307 + $0x130] sm:$0xff]
          %v1058 = vld [vmem:[%s307 + $0x138] sm:$0xff]
          %v1059 = vld [vmem:[%s307 + $0x140] sm:$0xff]
          %v1060 = vld [vmem:[%s307 + $0x148] sm:$0xff]
          %v1061 = vld [vmem:[%s307 + $0x150] sm:$0xff]
          %v1062 = vld [vmem:[%s307 + $0x158] sm:$0xff]
          %v1063 = vld [vmem:[%s307 + $0x160] sm:$0xff]
          %v1064 = vld [vmem:[%s307 + $0x168] sm:$0xff]
          %v1065 = vld [vmem:[%s307 + $0x170] sm:$0xff]
          %v1066 = vld [vmem:[%s307 + $0x178] sm:$0xff]
          %v1067 = vld [vmem:[%s307 + $0x180] sm:$0xff]
          %v1068 = vld [vmem:[%s307 + $0x188] sm:$0xff]
          %v1069 = vld [vmem:[%s307 + $0x190] sm:$0xff]
          %v1070 = vld [vmem:[%s307 + $0x198] sm:$0xff]
          %v1071 = vld [vmem:[%s307 + $0x1a0] sm:$0xff]
          %v1072 = vld [vmem:[%s307 + $0x1a8] sm:$0xff]
          %v1073 = vld [vmem:[%s307 + $0x1b0] sm:$0xff]
          %v1074 = vld [vmem:[%s307 + $0x1b8] sm:$0xff]
          %v1075 = vld [vmem:[%s307 + $0x1c0] sm:$0xff]
          %v1076 = vld [vmem:[%s307 + $0x1c8] sm:$0xff]
          %v1077 = vld [vmem:[%s307 + $0x1d0] sm:$0xff]
          %v1078 = vld [vmem:[%s307 + $0x1d8] sm:$0xff]
          %v1079 = vld [vmem:[%s307 + $0x1e0] sm:$0xff]
          %v1080 = vld [vmem:[%s307 + $0x1e8] sm:$0xff]
          %v1081 = vld [vmem:[%s307 + $0x1f0] sm:$0xff]
          %v1082 = vld [vmem:[%s307 + $0x1f8] sm:$0xff]
          %v1083 = vld [vmem:[%s307 + $0x200] sm:$0xff]
          %v1084 = vld [vmem:[%s307 + $0x208] sm:$0xff]
          %v1085 = vld [vmem:[%s307 + $0x210] sm:$0xff]
          %v1086 = vld [vmem:[%s307 + $0x218] sm:$0xff]
          %v1087 = vld [vmem:[%s307 + $0x220] sm:$0xff]
          %v1088 = vld [vmem:[%s307 + $0x228] sm:$0xff]
          %v1089 = vld [vmem:[%s307 + $0x230] sm:$0xff]
          %v1090 = vld [vmem:[%s307 + $0x238] sm:$0xff]
          %v1091 = vld [vmem:[%s307 + $0x240] sm:$0xff]
          %v1092 = vld [vmem:[%s307 + $0x248] sm:$0xff]
          %v1093 = vld [vmem:[%s307 + $0x250] sm:$0xff]
          %v1094 = vld [vmem:[%s307 + $0x258] sm:$0xff]
          %v1095 = vld [vmem:[%s307 + $0x260] sm:$0xff]
          %v1096 = vld [vmem:[%s307 + $0x268] sm:$0xff]
          %v1097 = vld [vmem:[%s307 + $0x270] sm:$0xff]
          %v1098 = vld [vmem:[%s307 + $0x278] sm:$0xff]
          %v1099 = vld [vmem:[%s307 + $0x280] sm:$0xff]
          %v1100 = vld [vmem:[%s307 + $0x288] sm:$0xff]
          %v1101 = vld [vmem:[%s307 + $0x290] sm:$0xff]
          %v1102 = vld [vmem:[%s307 + $0x298] sm:$0xff]
          %v1103 = vld [vmem:[%s307 + $0x2a0] sm:$0xff]
          %v1104 = vld [vmem:[%s307 + $0x2a8] sm:$0xff]
          %v1105 = vld [vmem:[%s307 + $0x2b0] sm:$0xff]
          %v1106 = vld [vmem:[%s307 + $0x2b8] sm:$0xff]
          %v1107 = vld [vmem:[%s307 + $0x2c0] sm:$0xff]
          %v1108 = vld [vmem:[%s307 + $0x2c8] sm:$0xff]
          %v1109 = vld [vmem:[%s307 + $0x2d0] sm:$0xff]
          %v1110 = vld [vmem:[%s307 + $0x2d8] sm:$0xff]
          %v1111 = vld [vmem:[%s307 + $0x2e0] sm:$0xff]
          %v1112 = vld [vmem:[%s307 + $0x2e8] sm:$0xff]
          %v1113 = vld [vmem:[%s307 + $0x2f0] sm:$0xff]
          %v1114 = vld [vmem:[%s307 + $0x2f8] sm:$0xff]
          %v1115 = vld [vmem:[%s307 + $0x300] sm:$0xff]
          %v1116 = vld [vmem:[%s307 + $0x308] sm:$0xff]
          %v1117 = vld [vmem:[%s307 + $0x310] sm:$0xff]
          %v1118 = vld [vmem:[%s307 + $0x318] sm:$0xff]
          %v1119 = vld [vmem:[%s307 + $0x320] sm:$0xff]
          %v1120 = vld [vmem:[%s307 + $0x328] sm:$0xff]
          %v1121 = vld [vmem:[%s307 + $0x330] sm:$0xff]
          %v1122 = vld [vmem:[%s307 + $0x338] sm:$0xff]
          %v1123 = vld [vmem:[%s307 + $0x340] sm:$0xff]
          %v1124 = vld [vmem:[%s307 + $0x348] sm:$0xff]
          %v1125 = vld [vmem:[%s307 + $0x350] sm:$0xff]
          %v1126 = vld [vmem:[%s307 + $0x358] sm:$0xff]
          %v1127 = vld [vmem:[%s307 + $0x360] sm:$0xff]
          %v1128 = vld [vmem:[%s307 + $0x368] sm:$0xff]
          %v1129 = vld [vmem:[%s307 + $0x370] sm:$0xff]
          %v1130 = vld [vmem:[%s307 + $0x378] sm:$0xff]
          %v1131 = vld [vmem:[%s307 + $0x380] sm:$0xff]
          %v1132 = vld [vmem:[%s307 + $0x388] sm:$0xff]
          %v1133 = vld [vmem:[%s307 + $0x390] sm:$0xff]
          %v1134 = vld [vmem:[%s307 + $0x398] sm:$0xff]
          %v1135 = vld [vmem:[%s307 + $0x3a0] sm:$0xff]
          %v1136 = vld [vmem:[%s307 + $0x3a8] sm:$0xff]
          %v1137 = vld [vmem:[%s307 + $0x3b0] sm:$0xff]
          %v1138 = vld [vmem:[%s307 + $0x3b8] sm:$0xff]
          %v1139 = vld [vmem:[%s307 + $0x3c0] sm:$0xff]
          %v1140 = vld [vmem:[%s307 + $0x3c8] sm:$0xff]
          %v1141 = vld [vmem:[%s307 + $0x3d0] sm:$0xff]
          %v1142 = vld [vmem:[%s307 + $0x3d8] sm:$0xff]
          %v1143 = vld [vmem:[%s307 + $0x3e0] sm:$0xff]
          %v1144 = vld [vmem:[%s307 + $0x3e8] sm:$0xff]
          %v1145 = vld [vmem:[%s307 + $0x3f0] sm:$0xff]
          %v1146 = vld [vmem:[%s307 + $0x3f8] sm:$0xff]
          %v1147 = vld [vmem:[%s307 + $0x400] sm:$0xff]
          %v1148 = vld [vmem:[%s307 + $0x408] sm:$0xff]
          %v1149 = vld [vmem:[%s307 + $0x410] sm:$0xff]
          %v1150 = vld [vmem:[%s307 + $0x418] sm:$0xff]
          %v1151 = vld [vmem:[%s307 + $0x420] sm:$0xff]
          %v1152 = vld [vmem:[%s307 + $0x428] sm:$0xff]
          %v1153 = vld [vmem:[%s307 + $0x430] sm:$0xff]
          %v1154 = vld [vmem:[%s307 + $0x438] sm:$0xff]
          %v1155 = vld [vmem:[%s307 + $0x440] sm:$0xff]
          %v1156 = vld [vmem:[%s307 + $0x448] sm:$0xff]
          %v1157 = vld [vmem:[%s307 + $0x450] sm:$0xff]
          %v1158 = vld [vmem:[%s307 + $0x458] sm:$0xff]
          %v1159 = vld [vmem:[%s307 + $0x460] sm:$0xff]
          %v1160 = vld [vmem:[%s307 + $0x468] sm:$0xff]
          %v1161 = vld [vmem:[%s307 + $0x470] sm:$0xff]
          %v1162 = vld [vmem:[%s307 + $0x478] sm:$0xff]
          %v1163 = vld [vmem:[%s307 + $0x480] sm:$0xff]
          %v1164 = vld [vmem:[%s307 + $0x488] sm:$0xff]
          %v1165 = vld [vmem:[%s307 + $0x490] sm:$0xff]
          %v1166 = vld [vmem:[%s307 + $0x498] sm:$0xff]
          %v1167 = vld [vmem:[%s307 + $0x4a0] sm:$0xff]
          %v1168 = vld [vmem:[%s307 + $0x4a8] sm:$0xff]
          %v1169 = vld [vmem:[%s307 + $0x4b0] sm:$0xff]
          %v1170 = vld [vmem:[%s307 + $0x4b8] sm:$0xff]
          %v1171 = vld [vmem:[%s307 + $0x4c0] sm:$0xff]
          %v1172 = vld [vmem:[%s307 + $0x4c8] sm:$0xff]
          %v1173 = vld [vmem:[%s307 + $0x4d0] sm:$0xff]
          %v1174 = vld [vmem:[%s307 + $0x4d8] sm:$0xff]
          %v1175 = vld [vmem:[%s307 + $0x4e0] sm:$0xff]
          %v1176 = vld [vmem:[%s307 + $0x4e8] sm:$0xff]
          %v1177 = vld [vmem:[%s307 + $0x4f0] sm:$0xff]
          %v1178 = vld [vmem:[%s307 + $0x4f8] sm:$0xff]
          %v1179 = vld [vmem:[%s307 + $0x500] sm:$0xff]
          %v1180 = vld [vmem:[%s307 + $0x508] sm:$0xff]
          %v1181 = vld [vmem:[%s307 + $0x510] sm:$0xff]
          %v1182 = vld [vmem:[%s307 + $0x518] sm:$0xff]
          %v1183 = vld [vmem:[%s307 + $0x520] sm:$0xff]
          %v1184 = vld [vmem:[%s307 + $0x528] sm:$0xff]
          %v1185 = vld [vmem:[%s307 + $0x530] sm:$0xff]
          %v1186 = vld [vmem:[%s307 + $0x538] sm:$0xff]
          %v1187 = vld [vmem:[%s307 + $0x540] sm:$0xff]
          %v1188 = vld [vmem:[%s307 + $0x548] sm:$0xff]
          %v1189 = vld [vmem:[%s307 + $0x550] sm:$0xff]
          %v1190 = vld [vmem:[%s307 + $0x558] sm:$0xff]
          %v1191 = vld [vmem:[%s307 + $0x560] sm:$0xff]
          %v1192 = vld [vmem:[%s307 + $0x568] sm:$0xff]
          %v1193 = vld [vmem:[%s307 + $0x570] sm:$0xff]
          %v1194 = vld [vmem:[%s307 + $0x578] sm:$0xff]
          %v1195 = vld [vmem:[%s307 + $0x580] sm:$0xff]
          %v1196 = vld [vmem:[%s307 + $0x588] sm:$0xff]
          %v1197 = vld [vmem:[%s307 + $0x590] sm:$0xff]
          %v1198 = vld [vmem:[%s307 + $0x598] sm:$0xff]
          %v1199 = vld [vmem:[%s307 + $0x5a0] sm:$0xff]
          %v1200 = vld [vmem:[%s307 + $0x5a8] sm:$0xff]
          %v1201 = vld [vmem:[%s307 + $0x5b0] sm:$0xff]
          %v1202 = vld [vmem:[%s307 + $0x5b8] sm:$0xff]
          %v1203 = vld [vmem:[%s307 + $0x5c0] sm:$0xff]
          %v1204 = vld [vmem:[%s307 + $0x5c8] sm:$0xff]
          %v1205 = vld [vmem:[%s307 + $0x5d0] sm:$0xff]
          %v1206 = vld [vmem:[%s307 + $0x5d8] sm:$0xff]
          %v1207 = vld [vmem:[%s307 + $0x5e0] sm:$0xff]
          %v1208 = vld [vmem:[%s307 + $0x5e8] sm:$0xff]
          %v1209 = vld [vmem:[%s307 + $0x5f0] sm:$0xff]
          %v1210 = vld [vmem:[%s307 + $0x5f8] sm:$0xff]
          %v1211 = vld [vmem:[%s307 + $0x600] sm:$0xff]
          %v1212 = vld [vmem:[%s307 + $0x608] sm:$0xff]
          %v1213 = vld [vmem:[%s307 + $0x610] sm:$0xff]
          %v1214 = vld [vmem:[%s307 + $0x618] sm:$0xff]
          %v1215 = vld [vmem:[%s307 + $0x620] sm:$0xff]
          %v1216 = vld [vmem:[%s307 + $0x628] sm:$0xff]
          %v1217 = vld [vmem:[%s307 + $0x630] sm:$0xff]
          %v1218 = vld [vmem:[%s307 + $0x638] sm:$0xff]
          %v1219 = vld [vmem:[%s307 + $0x640] sm:$0xff]
          %v1220 = vld [vmem:[%s307 + $0x648] sm:$0xff]
          %v1221 = vld [vmem:[%s307 + $0x650] sm:$0xff]
          %v1222 = vld [vmem:[%s307 + $0x658] sm:$0xff]
          %v1223 = vld [vmem:[%s307 + $0x660] sm:$0xff]
          %v1224 = vld [vmem:[%s307 + $0x668] sm:$0xff]
          %v1225 = vld [vmem:[%s307 + $0x670] sm:$0xff]
          %v1226 = vld [vmem:[%s307 + $0x678] sm:$0xff]
          %v1227 = vld [vmem:[%s307 + $0x680] sm:$0xff]
          %v1228 = vld [vmem:[%s307 + $0x688] sm:$0xff]
          %v1229 = vld [vmem:[%s307 + $0x690] sm:$0xff]
          %v1230 = vld [vmem:[%s307 + $0x698] sm:$0xff]
          %v1231 = vld [vmem:[%s307 + $0x6a0] sm:$0xff]
          %v1232 = vld [vmem:[%s307 + $0x6a8] sm:$0xff]
          %v1233 = vld [vmem:[%s307 + $0x6b0] sm:$0xff]
          %v1234 = vld [vmem:[%s307 + $0x6b8] sm:$0xff]
          %v1235 = vld [vmem:[%s307 + $0x6c0] sm:$0xff]
          %v1236 = vld [vmem:[%s307 + $0x6c8] sm:$0xff]
          %v1237 = vld [vmem:[%s307 + $0x6d0] sm:$0xff]
          %v1238 = vld [vmem:[%s307 + $0x6d8] sm:$0xff]
          %v1239 = vld [vmem:[%s307 + $0x6e0] sm:$0xff]
          %v1240 = vld [vmem:[%s307 + $0x6e8] sm:$0xff]
          %v1241 = vld [vmem:[%s307 + $0x6f0] sm:$0xff]
          %v1242 = vld [vmem:[%s307 + $0x6f8] sm:$0xff]
          %v1243 = vld [vmem:[%s307 + $0x700] sm:$0xff]
          %v1244 = vld [vmem:[%s307 + $0x708] sm:$0xff]
          %v1245 = vld [vmem:[%s307 + $0x710] sm:$0xff]
          %v1246 = vld [vmem:[%s307 + $0x718] sm:$0xff]
          %v1247 = vld [vmem:[%s307 + $0x720] sm:$0xff]
          %v1248 = vld [vmem:[%s307 + $0x728] sm:$0xff]
          %v1249 = vld [vmem:[%s307 + $0x730] sm:$0xff]
          %v1250 = vld [vmem:[%s307 + $0x738] sm:$0xff]
          %v1251 = vld [vmem:[%s307 + $0x740] sm:$0xff]
          %v1252 = vld [vmem:[%s307 + $0x748] sm:$0xff]
          %v1253 = vld [vmem:[%s307 + $0x750] sm:$0xff]
          %v1254 = vld [vmem:[%s307 + $0x758] sm:$0xff]
          %v1255 = vld [vmem:[%s307 + $0x760] sm:$0xff]
          %v1256 = vld [vmem:[%s307 + $0x768] sm:$0xff]
          %v1257 = vld [vmem:[%s307 + $0x770] sm:$0xff]
          %v1258 = vld [vmem:[%s307 + $0x778] sm:$0xff]
          %v1259 = vld [vmem:[%s307 + $0x780] sm:$0xff]
          %v1260 = vld [vmem:[%s307 + $0x788] sm:$0xff]
          %v1261 = vld [vmem:[%s307 + $0x790] sm:$0xff]
          %v1262 = vld [vmem:[%s307 + $0x798] sm:$0xff]
          %v1263 = vld [vmem:[%s307 + $0x7a0] sm:$0xff]
          %v1264 = vld [vmem:[%s307 + $0x7a8] sm:$0xff]
          %v1265 = vld [vmem:[%s307 + $0x7b0] sm:$0xff]
          %v1266 = vld [vmem:[%s307 + $0x7b8] sm:$0xff]
          %v1267 = vld [vmem:[%s307 + $0x7c0] sm:$0xff]
          %v1268 = vld [vmem:[%s307 + $0x7c8] sm:$0xff]
          %v1269 = vld [vmem:[%s307 + $0x7d0] sm:$0xff]
          %v1270 = vld [vmem:[%s307 + $0x7d8] sm:$0xff]
          %v1271 = vld [vmem:[%s307 + $0x7e0] sm:$0xff]
          %v1272 = vld [vmem:[%s307 + $0x7e8] sm:$0xff]
          %v1273 = vld [vmem:[%s307 + $0x7f0] sm:$0xff]
          %v1274 = vld [vmem:[%s307 + $0x7f8] sm:$0xff]
          %v1275 = vld [vmem:[%s307 + $0x800] sm:$0xff]
          %v1276 = vld [vmem:[%s307 + $0x808] sm:$0xff]
          %v1277 = vld [vmem:[%s307 + $0x810] sm:$0xff]
          %v1278 = vld [vmem:[%s307 + $0x818] sm:$0xff]
          %v1279 = vld [vmem:[%s307 + $0x820] sm:$0xff]
          %v1280 = vld [vmem:[%s307 + $0x828] sm:$0xff]
          %v1281 = vld [vmem:[%s307 + $0x830] sm:$0xff]
          %v1282 = vld [vmem:[%s307 + $0x838] sm:$0xff]
          %v1283 = vld [vmem:[%s307 + $0x840] sm:$0xff]
          %v1284 = vld [vmem:[%s307 + $0x848] sm:$0xff]
          %v1285 = vld [vmem:[%s307 + $0x850] sm:$0xff]
          %v1286 = vld [vmem:[%s307 + $0x858] sm:$0xff]
          %v1287 = vld [vmem:[%s307 + $0x860] sm:$0xff]
          %v1288 = vld [vmem:[%s307 + $0x868] sm:$0xff]
          %v1289 = vld [vmem:[%s307 + $0x870] sm:$0xff]
          %v1290 = vld [vmem:[%s307 + $0x878] sm:$0xff]
          %v1291 = vld [vmem:[%s307 + $0x880] sm:$0xff]
          %v1292 = vld [vmem:[%s307 + $0x888] sm:$0xff]
          %v1293 = vld [vmem:[%s307 + $0x890] sm:$0xff]
          %v1294 = vld [vmem:[%s307 + $0x898] sm:$0xff]
          %v1295 = vld [vmem:[%s307 + $0x8a0] sm:$0xff]
          %v1296 = vld [vmem:[%s307 + $0x8a8] sm:$0xff]
          %v1297 = vld [vmem:[%s307 + $0x8b0] sm:$0xff]
          %v1298 = vld [vmem:[%s307 + $0x8b8] sm:$0xff]
          %v1299 = vld [vmem:[%s307 + $0x8c0] sm:$0xff]
          %v1300 = vld [vmem:[%s307 + $0x8c8] sm:$0xff]
          %v1301 = vld [vmem:[%s307 + $0x8d0] sm:$0xff]
          %v1302 = vld [vmem:[%s307 + $0x8d8] sm:$0xff]
          %v1303 = vld [vmem:[%s307 + $0x8e0] sm:$0xff]
          %v1304 = vld [vmem:[%s307 + $0x8e8] sm:$0xff]
          %v1305 = vld [vmem:[%s307 + $0x8f0] sm:$0xff]
          %v1306 = vld [vmem:[%s307 + $0x8f8] sm:$0xff]
          %v1307 = vld [vmem:[%s307 + $0x900] sm:$0xff]
          %v1308 = vld [vmem:[%s307 + $0x908] sm:$0xff]
          %v1309 = vld [vmem:[%s307 + $0x910] sm:$0xff]
          %v1310 = vld [vmem:[%s307 + $0x918] sm:$0xff]
          %v1311 = vld [vmem:[%s307 + $0x920] sm:$0xff]
          %v1312 = vld [vmem:[%s307 + $0x928] sm:$0xff]
          %v1313 = vld [vmem:[%s307 + $0x930] sm:$0xff]
          %v1314 = vld [vmem:[%s307 + $0x938] sm:$0xff]
          %v1315 = vld [vmem:[%s307 + $0x940] sm:$0xff]
          %v1316 = vld [vmem:[%s307 + $0x948] sm:$0xff]
          %v1317 = vld [vmem:[%s307 + $0x950] sm:$0xff]
          %v1318 = vld [vmem:[%s307 + $0x958] sm:$0xff]
          %v1319 = vld [vmem:[%s307 + $0x960] sm:$0xff]
          %v1320 = vld [vmem:[%s307 + $0x968] sm:$0xff]
          %v1321 = vld [vmem:[%s307 + $0x970] sm:$0xff]
          %v1322 = vld [vmem:[%s307 + $0x978] sm:$0xff]
          %v1323 = vld [vmem:[%s307 + $0x980] sm:$0xff]
          %v1324 = vld [vmem:[%s307 + $0x988] sm:$0xff]
          %v1325 = vld [vmem:[%s307 + $0x990] sm:$0xff]
          %v1326 = vld [vmem:[%s307 + $0x998] sm:$0xff]
          %v1327 = vld [vmem:[%s307 + $0x9a0] sm:$0xff]
          %v1328 = vld [vmem:[%s307 + $0x9a8] sm:$0xff]
          %v1329 = vld [vmem:[%s307 + $0x9b0] sm:$0xff]
          %v1330 = vld [vmem:[%s307 + $0x9b8] sm:$0xff]
          %v1331 = vld [vmem:[%s307 + $0x9c0] sm:$0xff]
          %v1332 = vld [vmem:[%s307 + $0x9c8] sm:$0xff]
          %v1333 = vld [vmem:[%s307 + $0x9d0] sm:$0xff]
          %v1334 = vld [vmem:[%s307 + $0x9d8] sm:$0xff]
          %v1335 = vld [vmem:[%s307 + $0x9e0] sm:$0xff]
          %v1336 = vld [vmem:[%s307 + $0x9e8] sm:$0xff]
          %v1337 = vld [vmem:[%s307 + $0x9f0] sm:$0xff]
          %v1338 = vld [vmem:[%s307 + $0x9f8] sm:$0xff]
          %v1339 = vld [vmem:[%s307 + $0xa00] sm:$0xff]
          %v1340 = vld [vmem:[%s307 + $0xa08] sm:$0xff]
          %v1341 = vld [vmem:[%s307 + $0xa10] sm:$0xff]
          %v1342 = vld [vmem:[%s307 + $0xa18] sm:$0xff]
          %v1343 = vld [vmem:[%s307 + $0xa20] sm:$0xff]
          %v1344 = vld [vmem:[%s307 + $0xa28] sm:$0xff]
          %v1345 = vld [vmem:[%s307 + $0xa30] sm:$0xff]
          %v1346 = vld [vmem:[%s307 + $0xa38] sm:$0xff]
          %v1347 = vld [vmem:[%s307 + $0xa40] sm:$0xff]
          %v1348 = vld [vmem:[%s307 + $0xa48] sm:$0xff]
          %v1349 = vld [vmem:[%s307 + $0xa50] sm:$0xff]
          %v1350 = vld [vmem:[%s307 + $0xa58] sm:$0xff]
          %v1351 = vld [vmem:[%s307 + $0xa60] sm:$0xff]
          %v1352 = vld [vmem:[%s307 + $0xa68] sm:$0xff]
          %v1353 = vld [vmem:[%s307 + $0xa70] sm:$0xff]
          %v1354 = vld [vmem:[%s307 + $0xa78] sm:$0xff]
          %v1355 = vld [vmem:[%s307 + $0xa80] sm:$0xff]
          %v1356 = vld [vmem:[%s307 + $0xa88] sm:$0xff]
          %v1357 = vld [vmem:[%s307 + $0xa90] sm:$0xff]
          %v1358 = vld [vmem:[%s307 + $0xa98] sm:$0xff]
          %v1359 = vld [vmem:[%s307 + $0xaa0] sm:$0xff]
          %v1360 = vld [vmem:[%s307 + $0xaa8] sm:$0xff]
          %v1361 = vld [vmem:[%s307 + $0xab0] sm:$0xff]
          %v1362 = vld [vmem:[%s307 + $0xab8] sm:$0xff]
          %v1363 = vld [vmem:[%s307 + $0xac0] sm:$0xff]
          %v1364 = vld [vmem:[%s307 + $0xac8] sm:$0xff]
          %v1365 = vld [vmem:[%s307 + $0xad0] sm:$0xff]
          %v1366 = vld [vmem:[%s307 + $0xad8] sm:$0xff]
          %v1367 = vld [vmem:[%s307 + $0xae0] sm:$0xff]
          %v1368 = vld [vmem:[%s307 + $0xae8] sm:$0xff]
          %v1369 = vld [vmem:[%s307 + $0xaf0] sm:$0xff]
          %v1370 = vld [vmem:[%s307 + $0xaf8] sm:$0xff]
          %v1371 = vld [vmem:[%s307 + $0xb00] sm:$0xff]
          %v1372 = vld [vmem:[%s307 + $0xb08] sm:$0xff]
          %v1373 = vld [vmem:[%s307 + $0xb10] sm:$0xff]
          %v1374 = vld [vmem:[%s307 + $0xb18] sm:$0xff]
          %v1375 = vld [vmem:[%s307 + $0xb20] sm:$0xff]
          %v1376 = vld [vmem:[%s307 + $0xb28] sm:$0xff]
          %v1377 = vld [vmem:[%s307 + $0xb30] sm:$0xff]
          %v1378 = vld [vmem:[%s307 + $0xb38] sm:$0xff]
          %v1379 = vld [vmem:[%s307 + $0xb40] sm:$0xff]
          %v1380 = vld [vmem:[%s307 + $0xb48] sm:$0xff]
          %v1381 = vld [vmem:[%s307 + $0xb50] sm:$0xff]
          %v1382 = vld [vmem:[%s307 + $0xb58] sm:$0xff]
          %v1383 = vld [vmem:[%s307 + $0xb60] sm:$0xff]
          %v1384 = vld [vmem:[%s307 + $0xb68] sm:$0xff]
          %v1385 = vld [vmem:[%s307 + $0xb70] sm:$0xff]
          %v1386 = vld [vmem:[%s307 + $0xb78] sm:$0xff]
          %v1387 = vld [vmem:[%s307 + $0xb80] sm:$0xff]
          %v1388 = vld [vmem:[%s307 + $0xb88] sm:$0xff]
          %v1389 = vld [vmem:[%s307 + $0xb90] sm:$0xff]
          %v1390 = vld [vmem:[%s307 + $0xb98] sm:$0xff]
          %v1391 = vld [vmem:[%s307 + $0xba0] sm:$0xff]
          %v1392 = vld [vmem:[%s307 + $0xba8] sm:$0xff]
          %v1393 = vld [vmem:[%s307 + $0xbb0] sm:$0xff]
          %v1394 = vld [vmem:[%s307 + $0xbb8] sm:$0xff]
          %v1395 = vld [vmem:[%s307 + $0xbc0] sm:$0xff]
          %v1396 = vld [vmem:[%s307 + $0xbc8] sm:$0xff]
          %v1397 = vld [vmem:[%s307 + $0xbd0] sm:$0xff]
          %v1398 = vld [vmem:[%s307 + $0xbd8] sm:$0xff]
          %v1399 = vld [vmem:[%s307 + $0xbe0] sm:$0xff]
          %v1400 = vld [vmem:[%s307 + $0xbe8] sm:$0xff]
          %v1401 = vld [vmem:[%s307 + $0xbf0] sm:$0xff]
          %v1402 = vld [vmem:[%s307 + $0xbf8] sm:$0xff]
          %v1403 = vld [vmem:[%s307 + $0xc00] sm:$0xff]
          %v1404 = vld [vmem:[%s307 + $0xc08] sm:$0xff]
          %v1405 = vld [vmem:[%s307 + $0xc10] sm:$0xff]
          %v1406 = vld [vmem:[%s307 + $0xc18] sm:$0xff]
          %v1407 = vld [vmem:[%s307 + $0xc20] sm:$0xff]
          %v1408 = vld [vmem:[%s307 + $0xc28] sm:$0xff]
          %v1409 = vld [vmem:[%s307 + $0xc30] sm:$0xff]
          %v1410 = vld [vmem:[%s307 + $0xc38] sm:$0xff]
          %v1411 = vld [vmem:[%s307 + $0xc40] sm:$0xff]
          %v1412 = vld [vmem:[%s307 + $0xc48] sm:$0xff]
          %v1413 = vld [vmem:[%s307 + $0xc50] sm:$0xff]
          %v1414 = vld [vmem:[%s307 + $0xc58] sm:$0xff]
          %v1415 = vld [vmem:[%s307 + $0xc60] sm:$0xff]
          %v1416 = vld [vmem:[%s307 + $0xc68] sm:$0xff]
          %v1417 = vld [vmem:[%s307 + $0xc70] sm:$0xff]
          %v1418 = vld [vmem:[%s307 + $0xc78] sm:$0xff]
          %v1419 = vld [vmem:[%s307 + $0xc80] sm:$0xff]
          %v1420 = vld [vmem:[%s307 + $0xc88] sm:$0xff]
          %v1421 = vld [vmem:[%s307 + $0xc90] sm:$0xff]
          %v1422 = vld [vmem:[%s307 + $0xc98] sm:$0xff]
          %v1423 = vld [vmem:[%s307 + $0xca0] sm:$0xff]
          %v1424 = vld [vmem:[%s307 + $0xca8] sm:$0xff]
          %v1425 = vld [vmem:[%s307 + $0xcb0] sm:$0xff]
          %v1426 = vld [vmem:[%s307 + $0xcb8] sm:$0xff]
          %v1427 = vld [vmem:[%s307 + $0xcc0] sm:$0xff]
          %v1428 = vld [vmem:[%s307 + $0xcc8] sm:$0xff]
          %v1429 = vld [vmem:[%s307 + $0xcd0] sm:$0xff]
          %v1430 = vld [vmem:[%s307 + $0xcd8] sm:$0xff]
          %v1431 = vld [vmem:[%s307 + $0xce0] sm:$0xff]
          %v1432 = vld [vmem:[%s307 + $0xce8] sm:$0xff]
          %v1433 = vld [vmem:[%s307 + $0xcf0] sm:$0xff]
          %v1434 = vld [vmem:[%s307 + $0xcf8] sm:$0xff]
          %v1435 = vld [vmem:[%s307 + $0xd00] sm:$0xff]
          %v1436 = vld [vmem:[%s307 + $0xd08] sm:$0xff]
          %v1437 = vld [vmem:[%s307 + $0xd10] sm:$0xff]
          %v1438 = vld [vmem:[%s307 + $0xd18] sm:$0xff]
          %v1439 = vld [vmem:[%s307 + $0xd20] sm:$0xff]
          %v1440 = vld [vmem:[%s307 + $0xd28] sm:$0xff]
          %v1441 = vld [vmem:[%s307 + $0xd30] sm:$0xff]
          %v1442 = vld [vmem:[%s307 + $0xd38] sm:$0xff]
          %v1443 = vld [vmem:[%s307 + $0xd40] sm:$0xff]
          %v1444 = vld [vmem:[%s307 + $0xd48] sm:$0xff]
          %v1445 = vld [vmem:[%s307 + $0xd50] sm:$0xff]
          %v1446 = vld [vmem:[%s307 + $0xd58] sm:$0xff]
          %v1447 = vld [vmem:[%s307 + $0xd60] sm:$0xff]
          %v1448 = vld [vmem:[%s307 + $0xd68] sm:$0xff]
          %v1449 = vld [vmem:[%s307 + $0xd70] sm:$0xff]
          %v1450 = vld [vmem:[%s307 + $0xd78] sm:$0xff]
          %v1451 = vld [vmem:[%s307 + $0xd80] sm:$0xff]
          %v1452 = vld [vmem:[%s307 + $0xd88] sm:$0xff]
          %v1453 = vld [vmem:[%s307 + $0xd90] sm:$0xff]
          %v1454 = vld [vmem:[%s307 + $0xd98] sm:$0xff]
          %v1455 = vld [vmem:[%s307 + $0xda0] sm:$0xff]
          %v1456 = vld [vmem:[%s307 + $0xda8] sm:$0xff]
          %v1457 = vld [vmem:[%s307 + $0xdb0] sm:$0xff]
          %v1458 = vld [vmem:[%s307 + $0xdb8] sm:$0xff]
          %v1459 = vld [vmem:[%s307 + $0xdc0] sm:$0xff]
          %v1460 = vld [vmem:[%s307 + $0xdc8] sm:$0xff]
          %v1461 = vld [vmem:[%s307 + $0xdd0] sm:$0xff]
          %v1462 = vld [vmem:[%s307 + $0xdd8] sm:$0xff]
          %v1463 = vld [vmem:[%s307 + $0xde0] sm:$0xff]
          %v1464 = vld [vmem:[%s307 + $0xde8] sm:$0xff]
          %v1465 = vld [vmem:[%s307 + $0xdf0] sm:$0xff]
          %v1466 = vld [vmem:[%s307 + $0xdf8] sm:$0xff]
          %v1467 = vld [vmem:[%s307 + $0xe00] sm:$0xff]
          %v1468 = vld [vmem:[%s307 + $0xe08] sm:$0xff]
          %v1469 = vld [vmem:[%s307 + $0xe10] sm:$0xff]
          %v1470 = vld [vmem:[%s307 + $0xe18] sm:$0xff]
          %v1471 = vld [vmem:[%s307 + $0xe20] sm:$0xff]
          %v1472 = vld [vmem:[%s307 + $0xe28] sm:$0xff]
          %v1473 = vld [vmem:[%s307 + $0xe30] sm:$0xff]
          %v1474 = vld [vmem:[%s307 + $0xe38] sm:$0xff]
          %v1475 = vld [vmem:[%s307 + $0xe40] sm:$0xff]
          %v1476 = vld [vmem:[%s307 + $0xe48] sm:$0xff]
          %v1477 = vld [vmem:[%s307 + $0xe50] sm:$0xff]
          %v1478 = vld [vmem:[%s307 + $0xe58] sm:$0xff]
          %v1479 = vld [vmem:[%s307 + $0xe60] sm:$0xff]
          %v1480 = vld [vmem:[%s307 + $0xe68] sm:$0xff]
          %v1481 = vld [vmem:[%s307 + $0xe70] sm:$0xff]
          %v1482 = vld [vmem:[%s307 + $0xe78] sm:$0xff]
          %v1483 = vld [vmem:[%s307 + $0xe80] sm:$0xff]
          %v1484 = vld [vmem:[%s307 + $0xe88] sm:$0xff]
          %v1485 = vld [vmem:[%s307 + $0xe90] sm:$0xff]
          %v1486 = vld [vmem:[%s307 + $0xe98] sm:$0xff]
          %v1487 = vld [vmem:[%s307 + $0xea0] sm:$0xff]
          %v1488 = vld [vmem:[%s307 + $0xea8] sm:$0xff]
          %v1489 = vld [vmem:[%s307 + $0xeb0] sm:$0xff]
          %v1490 = vld [vmem:[%s307 + $0xeb8] sm:$0xff]
          %v1491 = vld [vmem:[%s307 + $0xec0] sm:$0xff]
          %v1492 = vld [vmem:[%s307 + $0xec8] sm:$0xff]
          %v1493 = vld [vmem:[%s307 + $0xed0] sm:$0xff]
          %v1494 = vld [vmem:[%s307 + $0xed8] sm:$0xff]
          %v1495 = vld [vmem:[%s307 + $0xee0] sm:$0xff]
          %v1496 = vld [vmem:[%s307 + $0xee8] sm:$0xff]
          %v1497 = vld [vmem:[%s307 + $0xef0] sm:$0xff]
          %v1498 = vld [vmem:[%s307 + $0xef8] sm:$0xff]
          %v1499 = vld [vmem:[%s307 + $0xf00] sm:$0xff]
          %v1500 = vld [vmem:[%s307 + $0xf08] sm:$0xff]
          %v1501 = vld [vmem:[%s307 + $0xf10] sm:$0xff]
          %v1502 = vld [vmem:[%s307 + $0xf18] sm:$0xff]
          %v1503 = vld [vmem:[%s307 + $0xf20] sm:$0xff]
          %v1504 = vld [vmem:[%s307 + $0xf28] sm:$0xff]
          %v1505 = vld [vmem:[%s307 + $0xf30] sm:$0xff]
          %v1506 = vld [vmem:[%s307 + $0xf38] sm:$0xff]
          %v1507 = vld [vmem:[%s307 + $0xf40] sm:$0xff]
          %v1508 = vld [vmem:[%s307 + $0xf48] sm:$0xff]
          %v1509 = vld [vmem:[%s307 + $0xf50] sm:$0xff]
          %v1510 = vld [vmem:[%s307 + $0xf58] sm:$0xff]
          %v1511 = vld [vmem:[%s307 + $0xf60] sm:$0xff]
          %v1512 = vld [vmem:[%s307 + $0xf68] sm:$0xff]
          %v1513 = vld [vmem:[%s307 + $0xf70] sm:$0xff]
          %v1514 = vld [vmem:[%s307 + $0xf78] sm:$0xff]
          %v1515 = vld [vmem:[%s307 + $0xf80] sm:$0xff]
          %v1516 = vld [vmem:[%s307 + $0xf88] sm:$0xff]
          %v1517 = vld [vmem:[%s307 + $0xf90] sm:$0xff]
          %v1518 = vld [vmem:[%s307 + $0xf98] sm:$0xff]
          %v1519 = vld [vmem:[%s307 + $0xfa0] sm:$0xff]
          %v1520 = vld [vmem:[%s307 + $0xfa8] sm:$0xff]
          %v1521 = vld [vmem:[%s307 + $0xfb0] sm:$0xff]
          %v1522 = vld [vmem:[%s307 + $0xfb8] sm:$0xff]
          %v1523 = vld [vmem:[%s307 + $0xfc0] sm:$0xff]
          %v1524 = vld [vmem:[%s307 + $0xfc8] sm:$0xff]
          %v1525 = vld [vmem:[%s307 + $0xfd0] sm:$0xff]
          %v1526 = vld [vmem:[%s307 + $0xfd8] sm:$0xff]
          %v1527 = vld [vmem:[%s307 + $0xfe0] sm:$0xff]
          %v1528 = vld [vmem:[%s307 + $0xfe8] sm:$0xff]
          %v1529 = vld [vmem:[%s307 + $0xff0] sm:$0xff]
          %v1530 = vld [vmem:[%s307 + $0xff8] sm:$0xff]
          %v1532 = vlaneseq
          %v1533 = vshrl.u32 %v1532, 7
          %v1534 = vsub.s32 0, %v1533
          %v1535 = vrot.slane %v353, %v1534
          %v1536 = vlaneseq
          %v1537 = vshrl.u32 %v1536, 7
          %v1538 = vsub.s32 1, %v1537
          %v1539 = vrot.slane %v353, %v1538
          %v1540 = vlaneseq
          %v1541 = vshrl.u32 %v1540, 7
          %v1542 = vsub.s32 2, %v1541
          %v1543 = vrot.slane %v353, %v1542
          %v1544 = vlaneseq
          %v1545 = vshrl.u32 %v1544, 7
          %v1546 = vsub.s32 3, %v1545
          %v1547 = vrot.slane %v353, %v1546
          %v1548 = vlaneseq
          %v1549 = vshrl.u32 %v1548, 7
          %v1550 = vsub.s32 4, %v1549
          %v1551 = vrot.slane %v353, %v1550
          %v1552 = vlaneseq
          %v1553 = vshrl.u32 %v1552, 7
          %v1554 = vsub.s32 5, %v1553
          %v1555 = vrot.slane %v353, %v1554
          %v1556 = vlaneseq
          %v1557 = vshrl.u32 %v1556, 7
          %v1558 = vsub.s32 6, %v1557
          %v1559 = vrot.slane %v353, %v1558
          %v1560 = vlaneseq
          %v1561 = vshrl.u32 %v1560, 7
          %v1562 = vsub.s32 7, %v1561
          %v1563 = vrot.slane %v353, %v1562
          %v1576 = vunpack.c.l.b16 %v1015
          %v1577 = vunpack.c.h.b16 %v1015
          %v1578 = vunpack.c.l.b16 %v1016
          %v1579 = vunpack.c.h.b16 %v1016
          %v1580 = vunpack.c.l.b16 %v1017
          %v1581 = vunpack.c.h.b16 %v1017
          %v1582 = vunpack.c.l.b16 %v1018
          %v1583 = vunpack.c.h.b16 %v1018
          %v1584 = vpack.c.b16 %v1576, %v1576
          %v1585 = vpack.c.b16 %v1577, %v1577
          %v1586 = vpack.c.b16 %v1578, %v1578
          %v1587 = vpack.c.b16 %v1579, %v1579
          %v1588 = vpack.c.b16 %v1580, %v1580
          %v1589 = vpack.c.b16 %v1581, %v1581
          %v1590 = vpack.c.b16 %v1582, %v1582
          %v1591 = vpack.c.b16 %v1583, %v1583
          %v2112 = vunpack.c.l.b16 %v1019
          %v2113 = vunpack.c.h.b16 %v1019
          %v2114 = vunpack.c.l.b16 %v1020
          %v2115 = vunpack.c.h.b16 %v1020
          %v2116 = vunpack.c.l.b16 %v1021
          %v2117 = vunpack.c.h.b16 %v1021
          %v2118 = vunpack.c.l.b16 %v1022
          %v2119 = vunpack.c.h.b16 %v1022
          %v2120 = vunpack.c.l.b16 %v1023
          %v2121 = vunpack.c.h.b16 %v1023
          %v2122 = vunpack.c.l.b16 %v1024
          %v2123 = vunpack.c.h.b16 %v1024
          %v2124 = vunpack.c.l.b16 %v1025
          %v2125 = vunpack.c.h.b16 %v1025
          %v2126 = vunpack.c.l.b16 %v1026
          %v2127 = vunpack.c.h.b16 %v1026
          %v2128 = vunpack.c.l.b16 %v1027
          %v2129 = vunpack.c.h.b16 %v1027
          %v2130 = vunpack.c.l.b16 %v1028
          %v2131 = vunpack.c.h.b16 %v1028
          %v2132 = vunpack.c.l.b16 %v1029
          %v2133 = vunpack.c.h.b16 %v1029
          %v2134 = vunpack.c.l.b16 %v1030
          %v2135 = vunpack.c.h.b16 %v1030
          %v2136 = vunpack.c.l.b16 %v1031
          %v2137 = vunpack.c.h.b16 %v1031
          %v2138 = vunpack.c.l.b16 %v1032
          %v2139 = vunpack.c.h.b16 %v1032
          %v2140 = vunpack.c.l.b16 %v1033
          %v2141 = vunpack.c.h.b16 %v1033
          %v2142 = vunpack.c.l.b16 %v1034
          %v2143 = vunpack.c.h.b16 %v1034
          %v2144 = vunpack.c.l.b16 %v1035
          %v2145 = vunpack.c.h.b16 %v1035
          %v2146 = vunpack.c.l.b16 %v1036
          %v2147 = vunpack.c.h.b16 %v1036
          %v2148 = vunpack.c.l.b16 %v1037
          %v2149 = vunpack.c.h.b16 %v1037
          %v2150 = vunpack.c.l.b16 %v1038
          %v2151 = vunpack.c.h.b16 %v1038
          %v2152 = vunpack.c.l.b16 %v1039
          %v2153 = vunpack.c.h.b16 %v1039
          %v2154 = vunpack.c.l.b16 %v1040
          %v2155 = vunpack.c.h.b16 %v1040
          %v2156 = vunpack.c.l.b16 %v1041
          %v2157 = vunpack.c.h.b16 %v1041
          %v2158 = vunpack.c.l.b16 %v1042
          %v2159 = vunpack.c.h.b16 %v1042
          %v2160 = vunpack.c.l.b16 %v1043
          %v2161 = vunpack.c.h.b16 %v1043
          %v2162 = vunpack.c.l.b16 %v1044
          %v2163 = vunpack.c.h.b16 %v1044
          %v2164 = vunpack.c.l.b16 %v1045
          %v2165 = vunpack.c.h.b16 %v1045
          %v2166 = vunpack.c.l.b16 %v1046
          %v2167 = vunpack.c.h.b16 %v1046
          %v2168 = vunpack.c.l.b16 %v1047
          %v2169 = vunpack.c.h.b16 %v1047
          %v2170 = vunpack.c.l.b16 %v1048
          %v2171 = vunpack.c.h.b16 %v1048
          %v2172 = vunpack.c.l.b16 %v1049
          %v2173 = vunpack.c.h.b16 %v1049
          %v2174 = vunpack.c.l.b16 %v1050
          %v2175 = vunpack.c.h.b16 %v1050
          %v2176 = vunpack.c.l.b16 %v1051
          %v2177 = vunpack.c.h.b16 %v1051
          %v2178 = vunpack.c.l.b16 %v1052
          %v2179 = vunpack.c.h.b16 %v1052
          %v2180 = vunpack.c.l.b16 %v1053
          %v2181 = vunpack.c.h.b16 %v1053
          %v2182 = vunpack.c.l.b16 %v1054
          %v2183 = vunpack.c.h.b16 %v1054
          %v2184 = vunpack.c.l.b16 %v1055
          %v2185 = vunpack.c.h.b16 %v1055
          %v2186 = vunpack.c.l.b16 %v1056
          %v2187 = vunpack.c.h.b16 %v1056
          %v2188 = vunpack.c.l.b16 %v1057
          %v2189 = vunpack.c.h.b16 %v1057
          %v2190 = vunpack.c.l.b16 %v1058
          %v2191 = vunpack.c.h.b16 %v1058
          %v2192 = vunpack.c.l.b16 %v1059
          %v2193 = vunpack.c.h.b16 %v1059
          %v2194 = vunpack.c.l.b16 %v1060
          %v2195 = vunpack.c.h.b16 %v1060
          %v2196 = vunpack.c.l.b16 %v1061
          %v2197 = vunpack.c.h.b16 %v1061
          %v2198 = vunpack.c.l.b16 %v1062
          %v2199 = vunpack.c.h.b16 %v1062
          %v2200 = vunpack.c.l.b16 %v1063
          %v2201 = vunpack.c.h.b16 %v1063
          %v2202 = vunpack.c.l.b16 %v1064
          %v2203 = vunpack.c.h.b16 %v1064
          %v2204 = vunpack.c.l.b16 %v1065
          %v2205 = vunpack.c.h.b16 %v1065
          %v2206 = vunpack.c.l.b16 %v1066
          %v2207 = vunpack.c.h.b16 %v1066
          %v2208 = vunpack.c.l.b16 %v1067
          %v2209 = vunpack.c.h.b16 %v1067
          %v2210 = vunpack.c.l.b16 %v1068
          %v2211 = vunpack.c.h.b16 %v1068
          %v2212 = vunpack.c.l.b16 %v1069
          %v2213 = vunpack.c.h.b16 %v1069
          %v2214 = vunpack.c.l.b16 %v1070
          %v2215 = vunpack.c.h.b16 %v1070
          %v2216 = vunpack.c.l.b16 %v1071
          %v2217 = vunpack.c.h.b16 %v1071
          %v2218 = vunpack.c.l.b16 %v1072
          %v2219 = vunpack.c.h.b16 %v1072
          %v2220 = vunpack.c.l.b16 %v1073
          %v2221 = vunpack.c.h.b16 %v1073
          %v2222 = vunpack.c.l.b16 %v1074
          %v2223 = vunpack.c.h.b16 %v1074
          %v2224 = vunpack.c.l.b16 %v1075
          %v2225 = vunpack.c.h.b16 %v1075
          %v2226 = vunpack.c.l.b16 %v1076
          %v2227 = vunpack.c.h.b16 %v1076
          %v2228 = vunpack.c.l.b16 %v1077
          %v2229 = vunpack.c.h.b16 %v1077
          %v2230 = vunpack.c.l.b16 %v1078
          %v2231 = vunpack.c.h.b16 %v1078
          %v2232 = vunpack.c.l.b16 %v1079
          %v2233 = vunpack.c.h.b16 %v1079
          %v2234 = vunpack.c.l.b16 %v1080
          %v2235 = vunpack.c.h.b16 %v1080
          %v2236 = vunpack.c.l.b16 %v1081
          %v2237 = vunpack.c.h.b16 %v1081
          %v2238 = vunpack.c.l.b16 %v1082
          %v2239 = vunpack.c.h.b16 %v1082
          %v2240 = vunpack.c.l.b16 %v1083
          %v2241 = vunpack.c.h.b16 %v1083
          %v2242 = vunpack.c.l.b16 %v1084
          %v2243 = vunpack.c.h.b16 %v1084
          %v2244 = vunpack.c.l.b16 %v1085
          %v2245 = vunpack.c.h.b16 %v1085
          %v2246 = vunpack.c.l.b16 %v1086
          %v2247 = vunpack.c.h.b16 %v1086
          %v2248 = vunpack.c.l.b16 %v1087
          %v2249 = vunpack.c.h.b16 %v1087
          %v2250 = vunpack.c.l.b16 %v1088
          %v2251 = vunpack.c.h.b16 %v1088
          %v2252 = vunpack.c.l.b16 %v1089
          %v2253 = vunpack.c.h.b16 %v1089
          %v2254 = vunpack.c.l.b16 %v1090
          %v2255 = vunpack.c.h.b16 %v1090
          %v2256 = vunpack.c.l.b16 %v1091
          %v2257 = vunpack.c.h.b16 %v1091
          %v2258 = vunpack.c.l.b16 %v1092
          %v2259 = vunpack.c.h.b16 %v1092
          %v2260 = vunpack.c.l.b16 %v1093
          %v2261 = vunpack.c.h.b16 %v1093
          %v2262 = vunpack.c.l.b16 %v1094
          %v2263 = vunpack.c.h.b16 %v1094
          %v2264 = vunpack.c.l.b16 %v1095
          %v2265 = vunpack.c.h.b16 %v1095
          %v2266 = vunpack.c.l.b16 %v1096
          %v2267 = vunpack.c.h.b16 %v1096
          %v2268 = vunpack.c.l.b16 %v1097
          %v2269 = vunpack.c.h.b16 %v1097
          %v2270 = vunpack.c.l.b16 %v1098
          %v2271 = vunpack.c.h.b16 %v1098
          %v2272 = vunpack.c.l.b16 %v1099
          %v2273 = vunpack.c.h.b16 %v1099
          %v2274 = vunpack.c.l.b16 %v1100
          %v2275 = vunpack.c.h.b16 %v1100
          %v2276 = vunpack.c.l.b16 %v1101
          %v2277 = vunpack.c.h.b16 %v1101
          %v2278 = vunpack.c.l.b16 %v1102
          %v2279 = vunpack.c.h.b16 %v1102
          %v2280 = vunpack.c.l.b16 %v1103
          %v2281 = vunpack.c.h.b16 %v1103
          %v2282 = vunpack.c.l.b16 %v1104
          %v2283 = vunpack.c.h.b16 %v1104
          %v2284 = vunpack.c.l.b16 %v1105
          %v2285 = vunpack.c.h.b16 %v1105
          %v2286 = vunpack.c.l.b16 %v1106
          %v2287 = vunpack.c.h.b16 %v1106
          %v2288 = vunpack.c.l.b16 %v1107
          %v2289 = vunpack.c.h.b16 %v1107
          %v2290 = vunpack.c.l.b16 %v1108
          %v2291 = vunpack.c.h.b16 %v1108
          %v2292 = vunpack.c.l.b16 %v1109
          %v2293 = vunpack.c.h.b16 %v1109
          %v2294 = vunpack.c.l.b16 %v1110
          %v2295 = vunpack.c.h.b16 %v1110
          %v2296 = vunpack.c.l.b16 %v1111
          %v2297 = vunpack.c.h.b16 %v1111
          %v2298 = vunpack.c.l.b16 %v1112
          %v2299 = vunpack.c.h.b16 %v1112
          %v2300 = vunpack.c.l.b16 %v1113
          %v2301 = vunpack.c.h.b16 %v1113
          %v2302 = vunpack.c.l.b16 %v1114
          %v2303 = vunpack.c.h.b16 %v1114
          %v2304 = vunpack.c.l.b16 %v1115
          %v2305 = vunpack.c.h.b16 %v1115
          %v2306 = vunpack.c.l.b16 %v1116
          %v2307 = vunpack.c.h.b16 %v1116
          %v2308 = vunpack.c.l.b16 %v1117
          %v2309 = vunpack.c.h.b16 %v1117
          %v2310 = vunpack.c.l.b16 %v1118
          %v2311 = vunpack.c.h.b16 %v1118
          %v2312 = vunpack.c.l.b16 %v1119
          %v2313 = vunpack.c.h.b16 %v1119
          %v2314 = vunpack.c.l.b16 %v1120
          %v2315 = vunpack.c.h.b16 %v1120
          %v2316 = vunpack.c.l.b16 %v1121
          %v2317 = vunpack.c.h.b16 %v1121
          %v2318 = vunpack.c.l.b16 %v1122
          %v2319 = vunpack.c.h.b16 %v1122
          %v2320 = vunpack.c.l.b16 %v1123
          %v2321 = vunpack.c.h.b16 %v1123
          %v2322 = vunpack.c.l.b16 %v1124
          %v2323 = vunpack.c.h.b16 %v1124
          %v2324 = vunpack.c.l.b16 %v1125
          %v2325 = vunpack.c.h.b16 %v1125
          %v2326 = vunpack.c.l.b16 %v1126
          %v2327 = vunpack.c.h.b16 %v1126
          %v2328 = vunpack.c.l.b16 %v1127
          %v2329 = vunpack.c.h.b16 %v1127
          %v2330 = vunpack.c.l.b16 %v1128
          %v2331 = vunpack.c.h.b16 %v1128
          %v2332 = vunpack.c.l.b16 %v1129
          %v2333 = vunpack.c.h.b16 %v1129
          %v2334 = vunpack.c.l.b16 %v1130
          %v2335 = vunpack.c.h.b16 %v1130
          %v2336 = vunpack.c.l.b16 %v1131
          %v2337 = vunpack.c.h.b16 %v1131
          %v2338 = vunpack.c.l.b16 %v1132
          %v2339 = vunpack.c.h.b16 %v1132
          %v2340 = vunpack.c.l.b16 %v1133
          %v2341 = vunpack.c.h.b16 %v1133
          %v2342 = vunpack.c.l.b16 %v1134
          %v2343 = vunpack.c.h.b16 %v1134
          %v2344 = vunpack.c.l.b16 %v1135
          %v2345 = vunpack.c.h.b16 %v1135
          %v2346 = vunpack.c.l.b16 %v1136
          %v2347 = vunpack.c.h.b16 %v1136
          %v2348 = vunpack.c.l.b16 %v1137
          %v2349 = vunpack.c.h.b16 %v1137
          %v2350 = vunpack.c.l.b16 %v1138
          %v2351 = vunpack.c.h.b16 %v1138
          %v2352 = vunpack.c.l.b16 %v1139
          %v2353 = vunpack.c.h.b16 %v1139
          %v2354 = vunpack.c.l.b16 %v1140
          %v2355 = vunpack.c.h.b16 %v1140
          %v2356 = vunpack.c.l.b16 %v1141
          %v2357 = vunpack.c.h.b16 %v1141
          %v2358 = vunpack.c.l.b16 %v1142
          %v2359 = vunpack.c.h.b16 %v1142
          %v2360 = vunpack.c.l.b16 %v1143
          %v2361 = vunpack.c.h.b16 %v1143
          %v2362 = vunpack.c.l.b16 %v1144
          %v2363 = vunpack.c.h.b16 %v1144
          %v2364 = vunpack.c.l.b16 %v1145
          %v2365 = vunpack.c.h.b16 %v1145
          %v2366 = vunpack.c.l.b16 %v1146
          %v2367 = vunpack.c.h.b16 %v1146
          %v2368 = vunpack.c.l.b16 %v1147
          %v2369 = vunpack.c.h.b16 %v1147
          %v2370 = vunpack.c.l.b16 %v1148
          %v2371 = vunpack.c.h.b16 %v1148
          %v2372 = vunpack.c.l.b16 %v1149
          %v2373 = vunpack.c.h.b16 %v1149
          %v2374 = vunpack.c.l.b16 %v1150
          %v2375 = vunpack.c.h.b16 %v1150
          %v2376 = vunpack.c.l.b16 %v1151
          %v2377 = vunpack.c.h.b16 %v1151
          %v2378 = vunpack.c.l.b16 %v1152
          %v2379 = vunpack.c.h.b16 %v1152
          %v2380 = vunpack.c.l.b16 %v1153
          %v2381 = vunpack.c.h.b16 %v1153
          %v2382 = vunpack.c.l.b16 %v1154
          %v2383 = vunpack.c.h.b16 %v1154
          %v2384 = vunpack.c.l.b16 %v1155
          %v2385 = vunpack.c.h.b16 %v1155
          %v2386 = vunpack.c.l.b16 %v1156
          %v2387 = vunpack.c.h.b16 %v1156
          %v2388 = vunpack.c.l.b16 %v1157
          %v2389 = vunpack.c.h.b16 %v1157
          %v2390 = vunpack.c.l.b16 %v1158
          %v2391 = vunpack.c.h.b16 %v1158
          %v2392 = vunpack.c.l.b16 %v1159
          %v2393 = vunpack.c.h.b16 %v1159
          %v2394 = vunpack.c.l.b16 %v1160
          %v2395 = vunpack.c.h.b16 %v1160
          %v2396 = vunpack.c.l.b16 %v1161
          %v2397 = vunpack.c.h.b16 %v1161
          %v2398 = vunpack.c.l.b16 %v1162
          %v2399 = vunpack.c.h.b16 %v1162
          %v2400 = vunpack.c.l.b16 %v1163
          %v2401 = vunpack.c.h.b16 %v1163
          %v2402 = vunpack.c.l.b16 %v1164
          %v2403 = vunpack.c.h.b16 %v1164
          %v2404 = vunpack.c.l.b16 %v1165
          %v2405 = vunpack.c.h.b16 %v1165
          %v2406 = vunpack.c.l.b16 %v1166
          %v2407 = vunpack.c.h.b16 %v1166
          %v2408 = vunpack.c.l.b16 %v1167
          %v2409 = vunpack.c.h.b16 %v1167
          %v2410 = vunpack.c.l.b16 %v1168
          %v2411 = vunpack.c.h.b16 %v1168
          %v2412 = vunpack.c.l.b16 %v1169
          %v2413 = vunpack.c.h.b16 %v1169
          %v2414 = vunpack.c.l.b16 %v1170
          %v2415 = vunpack.c.h.b16 %v1170
          %v2416 = vunpack.c.l.b16 %v1171
          %v2417 = vunpack.c.h.b16 %v1171
          %v2418 = vunpack.c.l.b16 %v1172
          %v2419 = vunpack.c.h.b16 %v1172
          %v2420 = vunpack.c.l.b16 %v1173
          %v2421 = vunpack.c.h.b16 %v1173
          %v2422 = vunpack.c.l.b16 %v1174
          %v2423 = vunpack.c.h.b16 %v1174
          %v2424 = vunpack.c.l.b16 %v1175
          %v2425 = vunpack.c.h.b16 %v1175
          %v2426 = vunpack.c.l.b16 %v1176
          %v2427 = vunpack.c.h.b16 %v1176
          %v2428 = vunpack.c.l.b16 %v1177
          %v2429 = vunpack.c.h.b16 %v1177
          %v2430 = vunpack.c.l.b16 %v1178
          %v2431 = vunpack.c.h.b16 %v1178
          %v2432 = vunpack.c.l.b16 %v1179
          %v2433 = vunpack.c.h.b16 %v1179
          %v2434 = vunpack.c.l.b16 %v1180
          %v2435 = vunpack.c.h.b16 %v1180
          %v2436 = vunpack.c.l.b16 %v1181
          %v2437 = vunpack.c.h.b16 %v1181
          %v2438 = vunpack.c.l.b16 %v1182
          %v2439 = vunpack.c.h.b16 %v1182
          %v2440 = vunpack.c.l.b16 %v1183
          %v2441 = vunpack.c.h.b16 %v1183
          %v2442 = vunpack.c.l.b16 %v1184
          %v2443 = vunpack.c.h.b16 %v1184
          %v2444 = vunpack.c.l.b16 %v1185
          %v2445 = vunpack.c.h.b16 %v1185
          %v2446 = vunpack.c.l.b16 %v1186
          %v2447 = vunpack.c.h.b16 %v1186
          %v2448 = vunpack.c.l.b16 %v1187
          %v2449 = vunpack.c.h.b16 %v1187
          %v2450 = vunpack.c.l.b16 %v1188
          %v2451 = vunpack.c.h.b16 %v1188
          %v2452 = vunpack.c.l.b16 %v1189
          %v2453 = vunpack.c.h.b16 %v1189
          %v2454 = vunpack.c.l.b16 %v1190
          %v2455 = vunpack.c.h.b16 %v1190
          %v2456 = vunpack.c.l.b16 %v1191
          %v2457 = vunpack.c.h.b16 %v1191
          %v2458 = vunpack.c.l.b16 %v1192
          %v2459 = vunpack.c.h.b16 %v1192
          %v2460 = vunpack.c.l.b16 %v1193
          %v2461 = vunpack.c.h.b16 %v1193
          %v2462 = vunpack.c.l.b16 %v1194
          %v2463 = vunpack.c.h.b16 %v1194
          %v2464 = vunpack.c.l.b16 %v1195
          %v2465 = vunpack.c.h.b16 %v1195
          %v2466 = vunpack.c.l.b16 %v1196
          %v2467 = vunpack.c.h.b16 %v1196
          %v2468 = vunpack.c.l.b16 %v1197
          %v2469 = vunpack.c.h.b16 %v1197
          %v2470 = vunpack.c.l.b16 %v1198
          %v2471 = vunpack.c.h.b16 %v1198
          %v2472 = vunpack.c.l.b16 %v1199
          %v2473 = vunpack.c.h.b16 %v1199
          %v2474 = vunpack.c.l.b16 %v1200
          %v2475 = vunpack.c.h.b16 %v1200
          %v2476 = vunpack.c.l.b16 %v1201
          %v2477 = vunpack.c.h.b16 %v1201
          %v2478 = vunpack.c.l.b16 %v1202
          %v2479 = vunpack.c.h.b16 %v1202
          %v2480 = vunpack.c.l.b16 %v1203
          %v2481 = vunpack.c.h.b16 %v1203
          %v2482 = vunpack.c.l.b16 %v1204
          %v2483 = vunpack.c.h.b16 %v1204
          %v2484 = vunpack.c.l.b16 %v1205
          %v2485 = vunpack.c.h.b16 %v1205
          %v2486 = vunpack.c.l.b16 %v1206
          %v2487 = vunpack.c.h.b16 %v1206
          %v2488 = vunpack.c.l.b16 %v1207
          %v2489 = vunpack.c.h.b16 %v1207
          %v2490 = vunpack.c.l.b16 %v1208
          %v2491 = vunpack.c.h.b16 %v1208
          %v2492 = vunpack.c.l.b16 %v1209
          %v2493 = vunpack.c.h.b16 %v1209
          %v2494 = vunpack.c.l.b16 %v1210
          %v2495 = vunpack.c.h.b16 %v1210
          %v2496 = vunpack.c.l.b16 %v1211
          %v2497 = vunpack.c.h.b16 %v1211
          %v2498 = vunpack.c.l.b16 %v1212
          %v2499 = vunpack.c.h.b16 %v1212
          %v2500 = vunpack.c.l.b16 %v1213
          %v2501 = vunpack.c.h.b16 %v1213
          %v2502 = vunpack.c.l.b16 %v1214
          %v2503 = vunpack.c.h.b16 %v1214
          %v2504 = vunpack.c.l.b16 %v1215
          %v2505 = vunpack.c.h.b16 %v1215
          %v2506 = vunpack.c.l.b16 %v1216
          %v2507 = vunpack.c.h.b16 %v1216
          %v2508 = vunpack.c.l.b16 %v1217
          %v2509 = vunpack.c.h.b16 %v1217
          %v2510 = vunpack.c.l.b16 %v1218
          %v2511 = vunpack.c.h.b16 %v1218
          %v2512 = vunpack.c.l.b16 %v1219
          %v2513 = vunpack.c.h.b16 %v1219
          %v2514 = vunpack.c.l.b16 %v1220
          %v2515 = vunpack.c.h.b16 %v1220
          %v2516 = vunpack.c.l.b16 %v1221
          %v2517 = vunpack.c.h.b16 %v1221
          %v2518 = vunpack.c.l.b16 %v1222
          %v2519 = vunpack.c.h.b16 %v1222
          %v2520 = vunpack.c.l.b16 %v1223
          %v2521 = vunpack.c.h.b16 %v1223
          %v2522 = vunpack.c.l.b16 %v1224
          %v2523 = vunpack.c.h.b16 %v1224
          %v2524 = vunpack.c.l.b16 %v1225
          %v2525 = vunpack.c.h.b16 %v1225
          %v2526 = vunpack.c.l.b16 %v1226
          %v2527 = vunpack.c.h.b16 %v1226
          %v2528 = vunpack.c.l.b16 %v1227
          %v2529 = vunpack.c.h.b16 %v1227
          %v2530 = vunpack.c.l.b16 %v1228
          %v2531 = vunpack.c.h.b16 %v1228
          %v2532 = vunpack.c.l.b16 %v1229
          %v2533 = vunpack.c.h.b16 %v1229
          %v2534 = vunpack.c.l.b16 %v1230
          %v2535 = vunpack.c.h.b16 %v1230
          %v2536 = vunpack.c.l.b16 %v1231
          %v2537 = vunpack.c.h.b16 %v1231
          %v2538 = vunpack.c.l.b16 %v1232
          %v2539 = vunpack.c.h.b16 %v1232
          %v2540 = vunpack.c.l.b16 %v1233
          %v2541 = vunpack.c.h.b16 %v1233
          %v2542 = vunpack.c.l.b16 %v1234
          %v2543 = vunpack.c.h.b16 %v1234
          %v2544 = vunpack.c.l.b16 %v1235
          %v2545 = vunpack.c.h.b16 %v1235
          %v2546 = vunpack.c.l.b16 %v1236
          %v2547 = vunpack.c.h.b16 %v1236
          %v2548 = vunpack.c.l.b16 %v1237
          %v2549 = vunpack.c.h.b16 %v1237
          %v2550 = vunpack.c.l.b16 %v1238
          %v2551 = vunpack.c.h.b16 %v1238
          %v2552 = vunpack.c.l.b16 %v1239
          %v2553 = vunpack.c.h.b16 %v1239
          %v2554 = vunpack.c.l.b16 %v1240
          %v2555 = vunpack.c.h.b16 %v1240
          %v2556 = vunpack.c.l.b16 %v1241
          %v2557 = vunpack.c.h.b16 %v1241
          %v2558 = vunpack.c.l.b16 %v1242
          %v2559 = vunpack.c.h.b16 %v1242
          %v2560 = vunpack.c.l.b16 %v1243
          %v2561 = vunpack.c.h.b16 %v1243
          %v2562 = vunpack.c.l.b16 %v1244
          %v2563 = vunpack.c.h.b16 %v1244
          %v2564 = vunpack.c.l.b16 %v1245
          %v2565 = vunpack.c.h.b16 %v1245
          %v2566 = vunpack.c.l.b16 %v1246
          %v2567 = vunpack.c.h.b16 %v1246
          %v2568 = vunpack.c.l.b16 %v1247
          %v2569 = vunpack.c.h.b16 %v1247
          %v2570 = vunpack.c.l.b16 %v1248
          %v2571 = vunpack.c.h.b16 %v1248
          %v2572 = vunpack.c.l.b16 %v1249
          %v2573 = vunpack.c.h.b16 %v1249
          %v2574 = vunpack.c.l.b16 %v1250
          %v2575 = vunpack.c.h.b16 %v1250
          %v2576 = vunpack.c.l.b16 %v1251
          %v2577 = vunpack.c.h.b16 %v1251
          %v2578 = vunpack.c.l.b16 %v1252
          %v2579 = vunpack.c.h.b16 %v1252
          %v2580 = vunpack.c.l.b16 %v1253
          %v2581 = vunpack.c.h.b16 %v1253
          %v2582 = vunpack.c.l.b16 %v1254
          %v2583 = vunpack.c.h.b16 %v1254
          %v2584 = vunpack.c.l.b16 %v1255
          %v2585 = vunpack.c.h.b16 %v1255
          %v2586 = vunpack.c.l.b16 %v1256
          %v2587 = vunpack.c.h.b16 %v1256
          %v2588 = vunpack.c.l.b16 %v1257
          %v2589 = vunpack.c.h.b16 %v1257
          %v2590 = vunpack.c.l.b16 %v1258
          %v2591 = vunpack.c.h.b16 %v1258
          %v2592 = vunpack.c.l.b16 %v1259
          %v2593 = vunpack.c.h.b16 %v1259
          %v2594 = vunpack.c.l.b16 %v1260
          %v2595 = vunpack.c.h.b16 %v1260
          %v2596 = vunpack.c.l.b16 %v1261
          %v2597 = vunpack.c.h.b16 %v1261
          %v2598 = vunpack.c.l.b16 %v1262
          %v2599 = vunpack.c.h.b16 %v1262
          %v2600 = vunpack.c.l.b16 %v1263
          %v2601 = vunpack.c.h.b16 %v1263
          %v2602 = vunpack.c.l.b16 %v1264
          %v2603 = vunpack.c.h.b16 %v1264
          %v2604 = vunpack.c.l.b16 %v1265
          %v2605 = vunpack.c.h.b16 %v1265
          %v2606 = vunpack.c.l.b16 %v1266
          %v2607 = vunpack.c.h.b16 %v1266
          %v2608 = vunpack.c.l.b16 %v1267
          %v2609 = vunpack.c.h.b16 %v1267
          %v2610 = vunpack.c.l.b16 %v1268
          %v2611 = vunpack.c.h.b16 %v1268
          %v2612 = vunpack.c.l.b16 %v1269
          %v2613 = vunpack.c.h.b16 %v1269
          %v2614 = vunpack.c.l.b16 %v1270
          %v2615 = vunpack.c.h.b16 %v1270
          %v2616 = vunpack.c.l.b16 %v1271
          %v2617 = vunpack.c.h.b16 %v1271
          %v2618 = vunpack.c.l.b16 %v1272
          %v2619 = vunpack.c.h.b16 %v1272
          %v2620 = vunpack.c.l.b16 %v1273
          %v2621 = vunpack.c.h.b16 %v1273
          %v2622 = vunpack.c.l.b16 %v1274
          %v2623 = vunpack.c.h.b16 %v1274
          %v2624 = vunpack.c.l.b16 %v1275
          %v2625 = vunpack.c.h.b16 %v1275
          %v2626 = vunpack.c.l.b16 %v1276
          %v2627 = vunpack.c.h.b16 %v1276
          %v2628 = vunpack.c.l.b16 %v1277
          %v2629 = vunpack.c.h.b16 %v1277
          %v2630 = vunpack.c.l.b16 %v1278
          %v2631 = vunpack.c.h.b16 %v1278
          %v2632 = vunpack.c.l.b16 %v1279
          %v2633 = vunpack.c.h.b16 %v1279
          %v2634 = vunpack.c.l.b16 %v1280
          %v2635 = vunpack.c.h.b16 %v1280
          %v2636 = vunpack.c.l.b16 %v1281
          %v2637 = vunpack.c.h.b16 %v1281
          %v2638 = vunpack.c.l.b16 %v1282
          %v2639 = vunpack.c.h.b16 %v1282
          %v2640 = vunpack.c.l.b16 %v1283
          %v2641 = vunpack.c.h.b16 %v1283
          %v2642 = vunpack.c.l.b16 %v1284
          %v2643 = vunpack.c.h.b16 %v1284
          %v2644 = vunpack.c.l.b16 %v1285
          %v2645 = vunpack.c.h.b16 %v1285
          %v2646 = vunpack.c.l.b16 %v1286
          %v2647 = vunpack.c.h.b16 %v1286
          %v2648 = vunpack.c.l.b16 %v1287
          %v2649 = vunpack.c.h.b16 %v1287
          %v2650 = vunpack.c.l.b16 %v1288
          %v2651 = vunpack.c.h.b16 %v1288
          %v2652 = vunpack.c.l.b16 %v1289
          %v2653 = vunpack.c.h.b16 %v1289
          %v2654 = vunpack.c.l.b16 %v1290
          %v2655 = vunpack.c.h.b16 %v1290
          %v2656 = vunpack.c.l.b16 %v1291
          %v2657 = vunpack.c.h.b16 %v1291
          %v2658 = vunpack.c.l.b16 %v1292
          %v2659 = vunpack.c.h.b16 %v1292
          %v2660 = vunpack.c.l.b16 %v1293
          %v2661 = vunpack.c.h.b16 %v1293
          %v2662 = vunpack.c.l.b16 %v1294
          %v2663 = vunpack.c.h.b16 %v1294
          %v2664 = vunpack.c.l.b16 %v1295
          %v2665 = vunpack.c.h.b16 %v1295
          %v2666 = vunpack.c.l.b16 %v1296
          %v2667 = vunpack.c.h.b16 %v1296
          %v2668 = vunpack.c.l.b16 %v1297
          %v2669 = vunpack.c.h.b16 %v1297
          %v2670 = vunpack.c.l.b16 %v1298
          %v2671 = vunpack.c.h.b16 %v1298
          %v2672 = vunpack.c.l.b16 %v1299
          %v2673 = vunpack.c.h.b16 %v1299
          %v2674 = vunpack.c.l.b16 %v1300
          %v2675 = vunpack.c.h.b16 %v1300
          %v2676 = vunpack.c.l.b16 %v1301
          %v2677 = vunpack.c.h.b16 %v1301
          %v2678 = vunpack.c.l.b16 %v1302
          %v2679 = vunpack.c.h.b16 %v1302
          %v2680 = vunpack.c.l.b16 %v1303
          %v2681 = vunpack.c.h.b16 %v1303
          %v2682 = vunpack.c.l.b16 %v1304
          %v2683 = vunpack.c.h.b16 %v1304
          %v2684 = vunpack.c.l.b16 %v1305
          %v2685 = vunpack.c.h.b16 %v1305
          %v2686 = vunpack.c.l.b16 %v1306
          %v2687 = vunpack.c.h.b16 %v1306
          %v2688 = vunpack.c.l.b16 %v1307
          %v2689 = vunpack.c.h.b16 %v1307
          %v2690 = vunpack.c.l.b16 %v1308
          %v2691 = vunpack.c.h.b16 %v1308
          %v2692 = vunpack.c.l.b16 %v1309
          %v2693 = vunpack.c.h.b16 %v1309
          %v2694 = vunpack.c.l.b16 %v1310
          %v2695 = vunpack.c.h.b16 %v1310
          %v2696 = vunpack.c.l.b16 %v1311
          %v2697 = vunpack.c.h.b16 %v1311
          %v2698 = vunpack.c.l.b16 %v1312
          %v2699 = vunpack.c.h.b16 %v1312
          %v2700 = vunpack.c.l.b16 %v1313
          %v2701 = vunpack.c.h.b16 %v1313
          %v2702 = vunpack.c.l.b16 %v1314
          %v2703 = vunpack.c.h.b16 %v1314
          %v2704 = vunpack.c.l.b16 %v1315
          %v2705 = vunpack.c.h.b16 %v1315
          %v2706 = vunpack.c.l.b16 %v1316
          %v2707 = vunpack.c.h.b16 %v1316
          %v2708 = vunpack.c.l.b16 %v1317
          %v2709 = vunpack.c.h.b16 %v1317
          %v2710 = vunpack.c.l.b16 %v1318
          %v2711 = vunpack.c.h.b16 %v1318
          %v2712 = vunpack.c.l.b16 %v1319
          %v2713 = vunpack.c.h.b16 %v1319
          %v2714 = vunpack.c.l.b16 %v1320
          %v2715 = vunpack.c.h.b16 %v1320
          %v2716 = vunpack.c.l.b16 %v1321
          %v2717 = vunpack.c.h.b16 %v1321
          %v2718 = vunpack.c.l.b16 %v1322
          %v2719 = vunpack.c.h.b16 %v1322
          %v2720 = vunpack.c.l.b16 %v1323
          %v2721 = vunpack.c.h.b16 %v1323
          %v2722 = vunpack.c.l.b16 %v1324
          %v2723 = vunpack.c.h.b16 %v1324
          %v2724 = vunpack.c.l.b16 %v1325
          %v2725 = vunpack.c.h.b16 %v1325
          %v2726 = vunpack.c.l.b16 %v1326
          %v2727 = vunpack.c.h.b16 %v1326
          %v2728 = vunpack.c.l.b16 %v1327
          %v2729 = vunpack.c.h.b16 %v1327
          %v2730 = vunpack.c.l.b16 %v1328
          %v2731 = vunpack.c.h.b16 %v1328
          %v2732 = vunpack.c.l.b16 %v1329
          %v2733 = vunpack.c.h.b16 %v1329
          %v2734 = vunpack.c.l.b16 %v1330
          %v2735 = vunpack.c.h.b16 %v1330
          %v2736 = vunpack.c.l.b16 %v1331
          %v2737 = vunpack.c.h.b16 %v1331
          %v2738 = vunpack.c.l.b16 %v1332
          %v2739 = vunpack.c.h.b16 %v1332
          %v2740 = vunpack.c.l.b16 %v1333
          %v2741 = vunpack.c.h.b16 %v1333
          %v2742 = vunpack.c.l.b16 %v1334
          %v2743 = vunpack.c.h.b16 %v1334
          %v2744 = vunpack.c.l.b16 %v1335
          %v2745 = vunpack.c.h.b16 %v1335
          %v2746 = vunpack.c.l.b16 %v1336
          %v2747 = vunpack.c.h.b16 %v1336
          %v2748 = vunpack.c.l.b16 %v1337
          %v2749 = vunpack.c.h.b16 %v1337
          %v2750 = vunpack.c.l.b16 %v1338
          %v2751 = vunpack.c.h.b16 %v1338
          %v2752 = vunpack.c.l.b16 %v1339
          %v2753 = vunpack.c.h.b16 %v1339
          %v2754 = vunpack.c.l.b16 %v1340
          %v2755 = vunpack.c.h.b16 %v1340
          %v2756 = vunpack.c.l.b16 %v1341
          %v2757 = vunpack.c.h.b16 %v1341
          %v2758 = vunpack.c.l.b16 %v1342
          %v2759 = vunpack.c.h.b16 %v1342
          %v2760 = vunpack.c.l.b16 %v1343
          %v2761 = vunpack.c.h.b16 %v1343
          %v2762 = vunpack.c.l.b16 %v1344
          %v2763 = vunpack.c.h.b16 %v1344
          %v2764 = vunpack.c.l.b16 %v1345
          %v2765 = vunpack.c.h.b16 %v1345
          %v2766 = vunpack.c.l.b16 %v1346
          %v2767 = vunpack.c.h.b16 %v1346
          %v2768 = vunpack.c.l.b16 %v1347
          %v2769 = vunpack.c.h.b16 %v1347
          %v2770 = vunpack.c.l.b16 %v1348
          %v2771 = vunpack.c.h.b16 %v1348
          %v2772 = vunpack.c.l.b16 %v1349
          %v2773 = vunpack.c.h.b16 %v1349
          %v2774 = vunpack.c.l.b16 %v1350
          %v2775 = vunpack.c.h.b16 %v1350
          %v2776 = vunpack.c.l.b16 %v1351
          %v2777 = vunpack.c.h.b16 %v1351
          %v2778 = vunpack.c.l.b16 %v1352
          %v2779 = vunpack.c.h.b16 %v1352
          %v2780 = vunpack.c.l.b16 %v1353
          %v2781 = vunpack.c.h.b16 %v1353
          %v2782 = vunpack.c.l.b16 %v1354
          %v2783 = vunpack.c.h.b16 %v1354
          %v2784 = vunpack.c.l.b16 %v1355
          %v2785 = vunpack.c.h.b16 %v1355
          %v2786 = vunpack.c.l.b16 %v1356
          %v2787 = vunpack.c.h.b16 %v1356
          %v2788 = vunpack.c.l.b16 %v1357
          %v2789 = vunpack.c.h.b16 %v1357
          %v2790 = vunpack.c.l.b16 %v1358
          %v2791 = vunpack.c.h.b16 %v1358
          %v2792 = vunpack.c.l.b16 %v1359
          %v2793 = vunpack.c.h.b16 %v1359
          %v2794 = vunpack.c.l.b16 %v1360
          %v2795 = vunpack.c.h.b16 %v1360
          %v2796 = vunpack.c.l.b16 %v1361
          %v2797 = vunpack.c.h.b16 %v1361
          %v2798 = vunpack.c.l.b16 %v1362
          %v2799 = vunpack.c.h.b16 %v1362
          %v2800 = vunpack.c.l.b16 %v1363
          %v2801 = vunpack.c.h.b16 %v1363
          %v2802 = vunpack.c.l.b16 %v1364
          %v2803 = vunpack.c.h.b16 %v1364
          %v2804 = vunpack.c.l.b16 %v1365
          %v2805 = vunpack.c.h.b16 %v1365
          %v2806 = vunpack.c.l.b16 %v1366
          %v2807 = vunpack.c.h.b16 %v1366
          %v2808 = vunpack.c.l.b16 %v1367
          %v2809 = vunpack.c.h.b16 %v1367
          %v2810 = vunpack.c.l.b16 %v1368
          %v2811 = vunpack.c.h.b16 %v1368
          %v2812 = vunpack.c.l.b16 %v1369
          %v2813 = vunpack.c.h.b16 %v1369
          %v2814 = vunpack.c.l.b16 %v1370
          %v2815 = vunpack.c.h.b16 %v1370
          %v2816 = vunpack.c.l.b16 %v1371
          %v2817 = vunpack.c.h.b16 %v1371
          %v2818 = vunpack.c.l.b16 %v1372
          %v2819 = vunpack.c.h.b16 %v1372
          %v2820 = vunpack.c.l.b16 %v1373
          %v2821 = vunpack.c.h.b16 %v1373
          %v2822 = vunpack.c.l.b16 %v1374
          %v2823 = vunpack.c.h.b16 %v1374
          %v2824 = vunpack.c.l.b16 %v1375
          %v2825 = vunpack.c.h.b16 %v1375
          %v2826 = vunpack.c.l.b16 %v1376
          %v2827 = vunpack.c.h.b16 %v1376
          %v2828 = vunpack.c.l.b16 %v1377
          %v2829 = vunpack.c.h.b16 %v1377
          %v2830 = vunpack.c.l.b16 %v1378
          %v2831 = vunpack.c.h.b16 %v1378
          %v2832 = vunpack.c.l.b16 %v1379
          %v2833 = vunpack.c.h.b16 %v1379
          %v2834 = vunpack.c.l.b16 %v1380
          %v2835 = vunpack.c.h.b16 %v1380
          %v2836 = vunpack.c.l.b16 %v1381
          %v2837 = vunpack.c.h.b16 %v1381
          %v2838 = vunpack.c.l.b16 %v1382
          %v2839 = vunpack.c.h.b16 %v1382
          %v2840 = vunpack.c.l.b16 %v1383
          %v2841 = vunpack.c.h.b16 %v1383
          %v2842 = vunpack.c.l.b16 %v1384
          %v2843 = vunpack.c.h.b16 %v1384
          %v2844 = vunpack.c.l.b16 %v1385
          %v2845 = vunpack.c.h.b16 %v1385
          %v2846 = vunpack.c.l.b16 %v1386
          %v2847 = vunpack.c.h.b16 %v1386
          %v2848 = vunpack.c.l.b16 %v1387
          %v2849 = vunpack.c.h.b16 %v1387
          %v2850 = vunpack.c.l.b16 %v1388
          %v2851 = vunpack.c.h.b16 %v1388
          %v2852 = vunpack.c.l.b16 %v1389
          %v2853 = vunpack.c.h.b16 %v1389
          %v2854 = vunpack.c.l.b16 %v1390
          %v2855 = vunpack.c.h.b16 %v1390
          %v2856 = vunpack.c.l.b16 %v1391
          %v2857 = vunpack.c.h.b16 %v1391
          %v2858 = vunpack.c.l.b16 %v1392
          %v2859 = vunpack.c.h.b16 %v1392
          %v2860 = vunpack.c.l.b16 %v1393
          %v2861 = vunpack.c.h.b16 %v1393
          %v2862 = vunpack.c.l.b16 %v1394
          %v2863 = vunpack.c.h.b16 %v1394
          %v2864 = vunpack.c.l.b16 %v1395
          %v2865 = vunpack.c.h.b16 %v1395
          %v2866 = vunpack.c.l.b16 %v1396
          %v2867 = vunpack.c.h.b16 %v1396
          %v2868 = vunpack.c.l.b16 %v1397
          %v2869 = vunpack.c.h.b16 %v1397
          %v2870 = vunpack.c.l.b16 %v1398
          %v2871 = vunpack.c.h.b16 %v1398
          %v2872 = vunpack.c.l.b16 %v1399
          %v2873 = vunpack.c.h.b16 %v1399
          %v2874 = vunpack.c.l.b16 %v1400
          %v2875 = vunpack.c.h.b16 %v1400
          %v2876 = vunpack.c.l.b16 %v1401
          %v2877 = vunpack.c.h.b16 %v1401
          %v2878 = vunpack.c.l.b16 %v1402
          %v2879 = vunpack.c.h.b16 %v1402
          %v2880 = vunpack.c.l.b16 %v1403
          %v2881 = vunpack.c.h.b16 %v1403
          %v2882 = vunpack.c.l.b16 %v1404
          %v2883 = vunpack.c.h.b16 %v1404
          %v2884 = vunpack.c.l.b16 %v1405
          %v2885 = vunpack.c.h.b16 %v1405
          %v2886 = vunpack.c.l.b16 %v1406
          %v2887 = vunpack.c.h.b16 %v1406
          %v2888 = vunpack.c.l.b16 %v1407
          %v2889 = vunpack.c.h.b16 %v1407
          %v2890 = vunpack.c.l.b16 %v1408
          %v2891 = vunpack.c.h.b16 %v1408
          %v2892 = vunpack.c.l.b16 %v1409
          %v2893 = vunpack.c.h.b16 %v1409
          %v2894 = vunpack.c.l.b16 %v1410
          %v2895 = vunpack.c.h.b16 %v1410
          %v2896 = vunpack.c.l.b16 %v1411
          %v2897 = vunpack.c.h.b16 %v1411
          %v2898 = vunpack.c.l.b16 %v1412
          %v2899 = vunpack.c.h.b16 %v1412
          %v2900 = vunpack.c.l.b16 %v1413
          %v2901 = vunpack.c.h.b16 %v1413
          %v2902 = vunpack.c.l.b16 %v1414
          %v2903 = vunpack.c.h.b16 %v1414
          %v2904 = vunpack.c.l.b16 %v1415
          %v2905 = vunpack.c.h.b16 %v1415
          %v2906 = vunpack.c.l.b16 %v1416
          %v2907 = vunpack.c.h.b16 %v1416
          %v2908 = vunpack.c.l.b16 %v1417
          %v2909 = vunpack.c.h.b16 %v1417
          %v2910 = vunpack.c.l.b16 %v1418
          %v2911 = vunpack.c.h.b16 %v1418
          %v2912 = vunpack.c.l.b16 %v1419
          %v2913 = vunpack.c.h.b16 %v1419
          %v2914 = vunpack.c.l.b16 %v1420
          %v2915 = vunpack.c.h.b16 %v1420
          %v2916 = vunpack.c.l.b16 %v1421
          %v2917 = vunpack.c.h.b16 %v1421
          %v2918 = vunpack.c.l.b16 %v1422
          %v2919 = vunpack.c.h.b16 %v1422
          %v2920 = vunpack.c.l.b16 %v1423
          %v2921 = vunpack.c.h.b16 %v1423
          %v2922 = vunpack.c.l.b16 %v1424
          %v2923 = vunpack.c.h.b16 %v1424
          %v2924 = vunpack.c.l.b16 %v1425
          %v2925 = vunpack.c.h.b16 %v1425
          %v2926 = vunpack.c.l.b16 %v1426
          %v2927 = vunpack.c.h.b16 %v1426
          %v2928 = vunpack.c.l.b16 %v1427
          %v2929 = vunpack.c.h.b16 %v1427
          %v2930 = vunpack.c.l.b16 %v1428
          %v2931 = vunpack.c.h.b16 %v1428
          %v2932 = vunpack.c.l.b16 %v1429
          %v2933 = vunpack.c.h.b16 %v1429
          %v2934 = vunpack.c.l.b16 %v1430
          %v2935 = vunpack.c.h.b16 %v1430
          %v2936 = vunpack.c.l.b16 %v1431
          %v2937 = vunpack.c.h.b16 %v1431
          %v2938 = vunpack.c.l.b16 %v1432
          %v2939 = vunpack.c.h.b16 %v1432
          %v2940 = vunpack.c.l.b16 %v1433
          %v2941 = vunpack.c.h.b16 %v1433
          %v2942 = vunpack.c.l.b16 %v1434
          %v2943 = vunpack.c.h.b16 %v1434
          %v2944 = vunpack.c.l.b16 %v1435
          %v2945 = vunpack.c.h.b16 %v1435
          %v2946 = vunpack.c.l.b16 %v1436
          %v2947 = vunpack.c.h.b16 %v1436
          %v2948 = vunpack.c.l.b16 %v1437
          %v2949 = vunpack.c.h.b16 %v1437
          %v2950 = vunpack.c.l.b16 %v1438
          %v2951 = vunpack.c.h.b16 %v1438
          %v2952 = vunpack.c.l.b16 %v1439
          %v2953 = vunpack.c.h.b16 %v1439
          %v2954 = vunpack.c.l.b16 %v1440
          %v2955 = vunpack.c.h.b16 %v1440
          %v2956 = vunpack.c.l.b16 %v1441
          %v2957 = vunpack.c.h.b16 %v1441
          %v2958 = vunpack.c.l.b16 %v1442
          %v2959 = vunpack.c.h.b16 %v1442
          %v2960 = vunpack.c.l.b16 %v1443
          %v2961 = vunpack.c.h.b16 %v1443
          %v2962 = vunpack.c.l.b16 %v1444
          %v2963 = vunpack.c.h.b16 %v1444
          %v2964 = vunpack.c.l.b16 %v1445
          %v2965 = vunpack.c.h.b16 %v1445
          %v2966 = vunpack.c.l.b16 %v1446
          %v2967 = vunpack.c.h.b16 %v1446
          %v2968 = vunpack.c.l.b16 %v1447
          %v2969 = vunpack.c.h.b16 %v1447
          %v2970 = vunpack.c.l.b16 %v1448
          %v2971 = vunpack.c.h.b16 %v1448
          %v2972 = vunpack.c.l.b16 %v1449
          %v2973 = vunpack.c.h.b16 %v1449
          %v2974 = vunpack.c.l.b16 %v1450
          %v2975 = vunpack.c.h.b16 %v1450
          %v2976 = vunpack.c.l.b16 %v1451
          %v2977 = vunpack.c.h.b16 %v1451
          %v2978 = vunpack.c.l.b16 %v1452
          %v2979 = vunpack.c.h.b16 %v1452
          %v2980 = vunpack.c.l.b16 %v1453
          %v2981 = vunpack.c.h.b16 %v1453
          %v2982 = vunpack.c.l.b16 %v1454
          %v2983 = vunpack.c.h.b16 %v1454
          %v2984 = vunpack.c.l.b16 %v1455
          %v2985 = vunpack.c.h.b16 %v1455
          %v2986 = vunpack.c.l.b16 %v1456
          %v2987 = vunpack.c.h.b16 %v1456
          %v2988 = vunpack.c.l.b16 %v1457
          %v2989 = vunpack.c.h.b16 %v1457
          %v2990 = vunpack.c.l.b16 %v1458
          %v2991 = vunpack.c.h.b16 %v1458
          %v2992 = vunpack.c.l.b16 %v1459
          %v2993 = vunpack.c.h.b16 %v1459
          %v2994 = vunpack.c.l.b16 %v1460
          %v2995 = vunpack.c.h.b16 %v1460
          %v2996 = vunpack.c.l.b16 %v1461
          %v2997 = vunpack.c.h.b16 %v1461
          %v2998 = vunpack.c.l.b16 %v1462
          %v2999 = vunpack.c.h.b16 %v1462
          %v3000 = vunpack.c.l.b16 %v1463
          %v3001 = vunpack.c.h.b16 %v1463
          %v3002 = vunpack.c.l.b16 %v1464
          %v3003 = vunpack.c.h.b16 %v1464
          %v3004 = vunpack.c.l.b16 %v1465
          %v3005 = vunpack.c.h.b16 %v1465
          %v3006 = vunpack.c.l.b16 %v1466
          %v3007 = vunpack.c.h.b16 %v1466
          %v3008 = vunpack.c.l.b16 %v1467
          %v3009 = vunpack.c.h.b16 %v1467
          %v3010 = vunpack.c.l.b16 %v1468
          %v3011 = vunpack.c.h.b16 %v1468
          %v3012 = vunpack.c.l.b16 %v1469
          %v3013 = vunpack.c.h.b16 %v1469
          %v3014 = vunpack.c.l.b16 %v1470
          %v3015 = vunpack.c.h.b16 %v1470
          %v3016 = vunpack.c.l.b16 %v1471
          %v3017 = vunpack.c.h.b16 %v1471
          %v3018 = vunpack.c.l.b16 %v1472
          %v3019 = vunpack.c.h.b16 %v1472
          %v3020 = vunpack.c.l.b16 %v1473
          %v3021 = vunpack.c.h.b16 %v1473
          %v3022 = vunpack.c.l.b16 %v1474
          %v3023 = vunpack.c.h.b16 %v1474
          %v3024 = vunpack.c.l.b16 %v1475
          %v3025 = vunpack.c.h.b16 %v1475
          %v3026 = vunpack.c.l.b16 %v1476
          %v3027 = vunpack.c.h.b16 %v1476
          %v3028 = vunpack.c.l.b16 %v1477
          %v3029 = vunpack.c.h.b16 %v1477
          %v3030 = vunpack.c.l.b16 %v1478
          %v3031 = vunpack.c.h.b16 %v1478
          %v3032 = vunpack.c.l.b16 %v1479
          %v3033 = vunpack.c.h.b16 %v1479
          %v3034 = vunpack.c.l.b16 %v1480
          %v3035 = vunpack.c.h.b16 %v1480
          %v3036 = vunpack.c.l.b16 %v1481
          %v3037 = vunpack.c.h.b16 %v1481
          %v3038 = vunpack.c.l.b16 %v1482
          %v3039 = vunpack.c.h.b16 %v1482
          %v3040 = vunpack.c.l.b16 %v1483
          %v3041 = vunpack.c.h.b16 %v1483
          %v3042 = vunpack.c.l.b16 %v1484
          %v3043 = vunpack.c.h.b16 %v1484
          %v3044 = vunpack.c.l.b16 %v1485
          %v3045 = vunpack.c.h.b16 %v1485
          %v3046 = vunpack.c.l.b16 %v1486
          %v3047 = vunpack.c.h.b16 %v1486
          %v3048 = vunpack.c.l.b16 %v1487
          %v3049 = vunpack.c.h.b16 %v1487
          %v3050 = vunpack.c.l.b16 %v1488
          %v3051 = vunpack.c.h.b16 %v1488
          %v3052 = vunpack.c.l.b16 %v1489
          %v3053 = vunpack.c.h.b16 %v1489
          %v3054 = vunpack.c.l.b16 %v1490
          %v3055 = vunpack.c.h.b16 %v1490
          %v3056 = vunpack.c.l.b16 %v1491
          %v3057 = vunpack.c.h.b16 %v1491
          %v3058 = vunpack.c.l.b16 %v1492
          %v3059 = vunpack.c.h.b16 %v1492
          %v3060 = vunpack.c.l.b16 %v1493
          %v3061 = vunpack.c.h.b16 %v1493
          %v3062 = vunpack.c.l.b16 %v1494
          %v3063 = vunpack.c.h.b16 %v1494
          %v3064 = vunpack.c.l.b16 %v1495
          %v3065 = vunpack.c.h.b16 %v1495
          %v3066 = vunpack.c.l.b16 %v1496
          %v3067 = vunpack.c.h.b16 %v1496
          %v3068 = vunpack.c.l.b16 %v1497
          %v3069 = vunpack.c.h.b16 %v1497
          %v3070 = vunpack.c.l.b16 %v1498
          %v3071 = vunpack.c.h.b16 %v1498
          %v3072 = vunpack.c.l.b16 %v1499
          %v3073 = vunpack.c.h.b16 %v1499
          %v3074 = vunpack.c.l.b16 %v1500
          %v3075 = vunpack.c.h.b16 %v1500
          %v3076 = vunpack.c.l.b16 %v1501
          %v3077 = vunpack.c.h.b16 %v1501
          %v3078 = vunpack.c.l.b16 %v1502
          %v3079 = vunpack.c.h.b16 %v1502
          %v3080 = vunpack.c.l.b16 %v1503
          %v3081 = vunpack.c.h.b16 %v1503
          %v3082 = vunpack.c.l.b16 %v1504
          %v3083 = vunpack.c.h.b16 %v1504
          %v3084 = vunpack.c.l.b16 %v1505
          %v3085 = vunpack.c.h.b16 %v1505
          %v3086 = vunpack.c.l.b16 %v1506
          %v3087 = vunpack.c.h.b16 %v1506
          %v3088 = vunpack.c.l.b16 %v1507
          %v3089 = vunpack.c.h.b16 %v1507
          %v3090 = vunpack.c.l.b16 %v1508
          %v3091 = vunpack.c.h.b16 %v1508
          %v3092 = vunpack.c.l.b16 %v1509
          %v3093 = vunpack.c.h.b16 %v1509
          %v3094 = vunpack.c.l.b16 %v1510
          %v3095 = vunpack.c.h.b16 %v1510
          %v3096 = vunpack.c.l.b16 %v1511
          %v3097 = vunpack.c.h.b16 %v1511
          %v3098 = vunpack.c.l.b16 %v1512
          %v3099 = vunpack.c.h.b16 %v1512
          %v3100 = vunpack.c.l.b16 %v1513
          %v3101 = vunpack.c.h.b16 %v1513
          %v3102 = vunpack.c.l.b16 %v1514
          %v3103 = vunpack.c.h.b16 %v1514
          %v3104 = vunpack.c.l.b16 %v1515
          %v3105 = vunpack.c.h.b16 %v1515
          %v3106 = vunpack.c.l.b16 %v1516
          %v3107 = vunpack.c.h.b16 %v1516
          %v3108 = vunpack.c.l.b16 %v1517
          %v3109 = vunpack.c.h.b16 %v1517
          %v3110 = vunpack.c.l.b16 %v1518
          %v3111 = vunpack.c.h.b16 %v1518
          %v3112 = vunpack.c.l.b16 %v1519
          %v3113 = vunpack.c.h.b16 %v1519
          %v3114 = vunpack.c.l.b16 %v1520
          %v3115 = vunpack.c.h.b16 %v1520
          %v3116 = vunpack.c.l.b16 %v1521
          %v3117 = vunpack.c.h.b16 %v1521
          %v3118 = vunpack.c.l.b16 %v1522
          %v3119 = vunpack.c.h.b16 %v1522
          %v3120 = vunpack.c.l.b16 %v1523
          %v3121 = vunpack.c.h.b16 %v1523
          %v3122 = vunpack.c.l.b16 %v1524
          %v3123 = vunpack.c.h.b16 %v1524
          %v3124 = vunpack.c.l.b16 %v1525
          %v3125 = vunpack.c.h.b16 %v1525
          %v3126 = vunpack.c.l.b16 %v1526
          %v3127 = vunpack.c.h.b16 %v1526
          %v3128 = vunpack.c.l.b16 %v1527
          %v3129 = vunpack.c.h.b16 %v1527
          %v3130 = vunpack.c.l.b16 %v1528
          %v3131 = vunpack.c.h.b16 %v1528
          %v3132 = vunpack.c.l.b16 %v1529
          %v3133 = vunpack.c.h.b16 %v1529
          %v3134 = vunpack.c.l.b16 %v1530
          %v3135 = vunpack.c.h.b16 %v1530
          %v3136 = vpack.c.b16 %v2120, %v2112
          %v3137 = vpack.c.b16 %v2121, %v2113
          %v3138 = vpack.c.b16 %v2122, %v2114
          %v3139 = vpack.c.b16 %v2123, %v2115
          %v3140 = vpack.c.b16 %v2124, %v2116
          %v3141 = vpack.c.b16 %v2125, %v2117
          %v3142 = vpack.c.b16 %v2126, %v2118
          %v3143 = vpack.c.b16 %v2127, %v2119
          %v3144 = vpack.c.b16 %v2136, %v2128
          %v3145 = vpack.c.b16 %v2137, %v2129
          %v3146 = vpack.c.b16 %v2138, %v2130
          %v3147 = vpack.c.b16 %v2139, %v2131
          %v3148 = vpack.c.b16 %v2140, %v2132
          %v3149 = vpack.c.b16 %v2141, %v2133
          %v3150 = vpack.c.b16 %v2142, %v2134
          %v3151 = vpack.c.b16 %v2143, %v2135
          %v3152 = vpack.c.b16 %v2152, %v2144
          %v3153 = vpack.c.b16 %v2153, %v2145
          %v3154 = vpack.c.b16 %v2154, %v2146
          %v3155 = vpack.c.b16 %v2155, %v2147
          %v3156 = vpack.c.b16 %v2156, %v2148
          %v3157 = vpack.c.b16 %v2157, %v2149
          %v3158 = vpack.c.b16 %v2158, %v2150
          %v3159 = vpack.c.b16 %v2159, %v2151
          %v3160 = vpack.c.b16 %v2168, %v2160
          %v3161 = vpack.c.b16 %v2169, %v2161
          %v3162 = vpack.c.b16 %v2170, %v2162
          %v3163 = vpack.c.b16 %v2171, %v2163
          %v3164 = vpack.c.b16 %v2172, %v2164
          %v3165 = vpack.c.b16 %v2173, %v2165
          %v3166 = vpack.c.b16 %v2174, %v2166
          %v3167 = vpack.c.b16 %v2175, %v2167
          %v3168 = vpack.c.b16 %v2184, %v2176
          %v3169 = vpack.c.b16 %v2185, %v2177
          %v3170 = vpack.c.b16 %v2186, %v2178
          %v3171 = vpack.c.b16 %v2187, %v2179
          %v3172 = vpack.c.b16 %v2188, %v2180
          %v3173 = vpack.c.b16 %v2189, %v2181
          %v3174 = vpack.c.b16 %v2190, %v2182
          %v3175 = vpack.c.b16 %v2191, %v2183
          %v3176 = vpack.c.b16 %v2200, %v2192
          %v3177 = vpack.c.b16 %v2201, %v2193
          %v3178 = vpack.c.b16 %v2202, %v2194
          %v3179 = vpack.c.b16 %v2203, %v2195
          %v3180 = vpack.c.b16 %v2204, %v2196
          %v3181 = vpack.c.b16 %v2205, %v2197
          %v3182 = vpack.c.b16 %v2206, %v2198
          %v3183 = vpack.c.b16 %v2207, %v2199
          %v3184 = vpack.c.b16 %v2216, %v2208
          %v3185 = vpack.c.b16 %v2217, %v2209
          %v3186 = vpack.c.b16 %v2218, %v2210
          %v3187 = vpack.c.b16 %v2219, %v2211
          %v3188 = vpack.c.b16 %v2220, %v2212
          %v3189 = vpack.c.b16 %v2221, %v2213
          %v3190 = vpack.c.b16 %v2222, %v2214
          %v3191 = vpack.c.b16 %v2223, %v2215
          %v3192 = vpack.c.b16 %v2232, %v2224
          %v3193 = vpack.c.b16 %v2233, %v2225
          %v3194 = vpack.c.b16 %v2234, %v2226
          %v3195 = vpack.c.b16 %v2235, %v2227
          %v3196 = vpack.c.b16 %v2236, %v2228
          %v3197 = vpack.c.b16 %v2237, %v2229
          %v3198 = vpack.c.b16 %v2238, %v2230
          %v3199 = vpack.c.b16 %v2239, %v2231
          %v3200 = vpack.c.b16 %v2248, %v2240
          %v3201 = vpack.c.b16 %v2249, %v2241
          %v3202 = vpack.c.b16 %v2250, %v2242
          %v3203 = vpack.c.b16 %v2251, %v2243
          %v3204 = vpack.c.b16 %v2252, %v2244
          %v3205 = vpack.c.b16 %v2253, %v2245
          %v3206 = vpack.c.b16 %v2254, %v2246
          %v3207 = vpack.c.b16 %v2255, %v2247
          %v3208 = vpack.c.b16 %v2264, %v2256
          %v3209 = vpack.c.b16 %v2265, %v2257
          %v3210 = vpack.c.b16 %v2266, %v2258
          %v3211 = vpack.c.b16 %v2267, %v2259
          %v3212 = vpack.c.b16 %v2268, %v2260
          %v3213 = vpack.c.b16 %v2269, %v2261
          %v3214 = vpack.c.b16 %v2270, %v2262
          %v3215 = vpack.c.b16 %v2271, %v2263
          %v3216 = vpack.c.b16 %v2280, %v2272
          %v3217 = vpack.c.b16 %v2281, %v2273
          %v3218 = vpack.c.b16 %v2282, %v2274
          %v3219 = vpack.c.b16 %v2283, %v2275
          %v3220 = vpack.c.b16 %v2284, %v2276
          %v3221 = vpack.c.b16 %v2285, %v2277
          %v3222 = vpack.c.b16 %v2286, %v2278
          %v3223 = vpack.c.b16 %v2287, %v2279
          %v3224 = vpack.c.b16 %v2296, %v2288
          %v3225 = vpack.c.b16 %v2297, %v2289
          %v3226 = vpack.c.b16 %v2298, %v2290
          %v3227 = vpack.c.b16 %v2299, %v2291
          %v3228 = vpack.c.b16 %v2300, %v2292
          %v3229 = vpack.c.b16 %v2301, %v2293
          %v3230 = vpack.c.b16 %v2302, %v2294
          %v3231 = vpack.c.b16 %v2303, %v2295
          %v3232 = vpack.c.b16 %v2312, %v2304
          %v3233 = vpack.c.b16 %v2313, %v2305
          %v3234 = vpack.c.b16 %v2314, %v2306
          %v3235 = vpack.c.b16 %v2315, %v2307
          %v3236 = vpack.c.b16 %v2316, %v2308
          %v3237 = vpack.c.b16 %v2317, %v2309
          %v3238 = vpack.c.b16 %v2318, %v2310
          %v3239 = vpack.c.b16 %v2319, %v2311
          %v3240 = vpack.c.b16 %v2328, %v2320
          %v3241 = vpack.c.b16 %v2329, %v2321
          %v3242 = vpack.c.b16 %v2330, %v2322
          %v3243 = vpack.c.b16 %v2331, %v2323
          %v3244 = vpack.c.b16 %v2332, %v2324
          %v3245 = vpack.c.b16 %v2333, %v2325
          %v3246 = vpack.c.b16 %v2334, %v2326
          %v3247 = vpack.c.b16 %v2335, %v2327
          %v3248 = vpack.c.b16 %v2344, %v2336
          %v3249 = vpack.c.b16 %v2345, %v2337
          %v3250 = vpack.c.b16 %v2346, %v2338
          %v3251 = vpack.c.b16 %v2347, %v2339
          %v3252 = vpack.c.b16 %v2348, %v2340
          %v3253 = vpack.c.b16 %v2349, %v2341
          %v3254 = vpack.c.b16 %v2350, %v2342
          %v3255 = vpack.c.b16 %v2351, %v2343
          %v3256 = vpack.c.b16 %v2360, %v2352
          %v3257 = vpack.c.b16 %v2361, %v2353
          %v3258 = vpack.c.b16 %v2362, %v2354
          %v3259 = vpack.c.b16 %v2363, %v2355
          %v3260 = vpack.c.b16 %v2364, %v2356
          %v3261 = vpack.c.b16 %v2365, %v2357
          %v3262 = vpack.c.b16 %v2366, %v2358
          %v3263 = vpack.c.b16 %v2367, %v2359
          %v3264 = vpack.c.b16 %v2376, %v2368
          %v3265 = vpack.c.b16 %v2377, %v2369
          %v3266 = vpack.c.b16 %v2378, %v2370
          %v3267 = vpack.c.b16 %v2379, %v2371
          %v3268 = vpack.c.b16 %v2380, %v2372
          %v3269 = vpack.c.b16 %v2381, %v2373
          %v3270 = vpack.c.b16 %v2382, %v2374
          %v3271 = vpack.c.b16 %v2383, %v2375
          %v3272 = vpack.c.b16 %v2392, %v2384
          %v3273 = vpack.c.b16 %v2393, %v2385
          %v3274 = vpack.c.b16 %v2394, %v2386
          %v3275 = vpack.c.b16 %v2395, %v2387
          %v3276 = vpack.c.b16 %v2396, %v2388
          %v3277 = vpack.c.b16 %v2397, %v2389
          %v3278 = vpack.c.b16 %v2398, %v2390
          %v3279 = vpack.c.b16 %v2399, %v2391
          %v3280 = vpack.c.b16 %v2408, %v2400
          %v3281 = vpack.c.b16 %v2409, %v2401
          %v3282 = vpack.c.b16 %v2410, %v2402
          %v3283 = vpack.c.b16 %v2411, %v2403
          %v3284 = vpack.c.b16 %v2412, %v2404
          %v3285 = vpack.c.b16 %v2413, %v2405
          %v3286 = vpack.c.b16 %v2414, %v2406
          %v3287 = vpack.c.b16 %v2415, %v2407
          %v3288 = vpack.c.b16 %v2424, %v2416
          %v3289 = vpack.c.b16 %v2425, %v2417
          %v3290 = vpack.c.b16 %v2426, %v2418
          %v3291 = vpack.c.b16 %v2427, %v2419
          %v3292 = vpack.c.b16 %v2428, %v2420
          %v3293 = vpack.c.b16 %v2429, %v2421
          %v3294 = vpack.c.b16 %v2430, %v2422
          %v3295 = vpack.c.b16 %v2431, %v2423
          %v3296 = vpack.c.b16 %v2440, %v2432
          %v3297 = vpack.c.b16 %v2441, %v2433
          %v3298 = vpack.c.b16 %v2442, %v2434
          %v3299 = vpack.c.b16 %v2443, %v2435
          %v3300 = vpack.c.b16 %v2444, %v2436
          %v3301 = vpack.c.b16 %v2445, %v2437
          %v3302 = vpack.c.b16 %v2446, %v2438
          %v3303 = vpack.c.b16 %v2447, %v2439
          %v3304 = vpack.c.b16 %v2456, %v2448
          %v3305 = vpack.c.b16 %v2457, %v2449
          %v3306 = vpack.c.b16 %v2458, %v2450
          %v3307 = vpack.c.b16 %v2459, %v2451
          %v3308 = vpack.c.b16 %v2460, %v2452
          %v3309 = vpack.c.b16 %v2461, %v2453
          %v3310 = vpack.c.b16 %v2462, %v2454
          %v3311 = vpack.c.b16 %v2463, %v2455
          %v3312 = vpack.c.b16 %v2472, %v2464
          %v3313 = vpack.c.b16 %v2473, %v2465
          %v3314 = vpack.c.b16 %v2474, %v2466
          %v3315 = vpack.c.b16 %v2475, %v2467
          %v3316 = vpack.c.b16 %v2476, %v2468
          %v3317 = vpack.c.b16 %v2477, %v2469
          %v3318 = vpack.c.b16 %v2478, %v2470
          %v3319 = vpack.c.b16 %v2479, %v2471
          %v3320 = vpack.c.b16 %v2488, %v2480
          %v3321 = vpack.c.b16 %v2489, %v2481
          %v3322 = vpack.c.b16 %v2490, %v2482
          %v3323 = vpack.c.b16 %v2491, %v2483
          %v3324 = vpack.c.b16 %v2492, %v2484
          %v3325 = vpack.c.b16 %v2493, %v2485
          %v3326 = vpack.c.b16 %v2494, %v2486
          %v3327 = vpack.c.b16 %v2495, %v2487
          %v3328 = vpack.c.b16 %v2504, %v2496
          %v3329 = vpack.c.b16 %v2505, %v2497
          %v3330 = vpack.c.b16 %v2506, %v2498
          %v3331 = vpack.c.b16 %v2507, %v2499
          %v3332 = vpack.c.b16 %v2508, %v2500
          %v3333 = vpack.c.b16 %v2509, %v2501
          %v3334 = vpack.c.b16 %v2510, %v2502
          %v3335 = vpack.c.b16 %v2511, %v2503
          %v3336 = vpack.c.b16 %v2520, %v2512
          %v3337 = vpack.c.b16 %v2521, %v2513
          %v3338 = vpack.c.b16 %v2522, %v2514
          %v3339 = vpack.c.b16 %v2523, %v2515
          %v3340 = vpack.c.b16 %v2524, %v2516
          %v3341 = vpack.c.b16 %v2525, %v2517
          %v3342 = vpack.c.b16 %v2526, %v2518
          %v3343 = vpack.c.b16 %v2527, %v2519
          %v3344 = vpack.c.b16 %v2536, %v2528
          %v3345 = vpack.c.b16 %v2537, %v2529
          %v3346 = vpack.c.b16 %v2538, %v2530
          %v3347 = vpack.c.b16 %v2539, %v2531
          %v3348 = vpack.c.b16 %v2540, %v2532
          %v3349 = vpack.c.b16 %v2541, %v2533
          %v3350 = vpack.c.b16 %v2542, %v2534
          %v3351 = vpack.c.b16 %v2543, %v2535
          %v3352 = vpack.c.b16 %v2552, %v2544
          %v3353 = vpack.c.b16 %v2553, %v2545
          %v3354 = vpack.c.b16 %v2554, %v2546
          %v3355 = vpack.c.b16 %v2555, %v2547
          %v3356 = vpack.c.b16 %v2556, %v2548
          %v3357 = vpack.c.b16 %v2557, %v2549
          %v3358 = vpack.c.b16 %v2558, %v2550
          %v3359 = vpack.c.b16 %v2559, %v2551
          %v3360 = vpack.c.b16 %v2568, %v2560
          %v3361 = vpack.c.b16 %v2569, %v2561
          %v3362 = vpack.c.b16 %v2570, %v2562
          %v3363 = vpack.c.b16 %v2571, %v2563
          %v3364 = vpack.c.b16 %v2572, %v2564
          %v3365 = vpack.c.b16 %v2573, %v2565
          %v3366 = vpack.c.b16 %v2574, %v2566
          %v3367 = vpack.c.b16 %v2575, %v2567
          %v3368 = vpack.c.b16 %v2584, %v2576
          %v3369 = vpack.c.b16 %v2585, %v2577
          %v3370 = vpack.c.b16 %v2586, %v2578
          %v3371 = vpack.c.b16 %v2587, %v2579
          %v3372 = vpack.c.b16 %v2588, %v2580
          %v3373 = vpack.c.b16 %v2589, %v2581
          %v3374 = vpack.c.b16 %v2590, %v2582
          %v3375 = vpack.c.b16 %v2591, %v2583
          %v3376 = vpack.c.b16 %v2600, %v2592
          %v3377 = vpack.c.b16 %v2601, %v2593
          %v3378 = vpack.c.b16 %v2602, %v2594
          %v3379 = vpack.c.b16 %v2603, %v2595
          %v3380 = vpack.c.b16 %v2604, %v2596
          %v3381 = vpack.c.b16 %v2605, %v2597
          %v3382 = vpack.c.b16 %v2606, %v2598
          %v3383 = vpack.c.b16 %v2607, %v2599
          %v3384 = vpack.c.b16 %v2616, %v2608
          %v3385 = vpack.c.b16 %v2617, %v2609
          %v3386 = vpack.c.b16 %v2618, %v2610
          %v3387 = vpack.c.b16 %v2619, %v2611
          %v3388 = vpack.c.b16 %v2620, %v2612
          %v3389 = vpack.c.b16 %v2621, %v2613
          %v3390 = vpack.c.b16 %v2622, %v2614
          %v3391 = vpack.c.b16 %v2623, %v2615
          %v3392 = vpack.c.b16 %v2632, %v2624
          %v3393 = vpack.c.b16 %v2633, %v2625
          %v3394 = vpack.c.b16 %v2634, %v2626
          %v3395 = vpack.c.b16 %v2635, %v2627
          %v3396 = vpack.c.b16 %v2636, %v2628
          %v3397 = vpack.c.b16 %v2637, %v2629
          %v3398 = vpack.c.b16 %v2638, %v2630
          %v3399 = vpack.c.b16 %v2639, %v2631
          %v3400 = vpack.c.b16 %v2648, %v2640
          %v3401 = vpack.c.b16 %v2649, %v2641
          %v3402 = vpack.c.b16 %v2650, %v2642
          %v3403 = vpack.c.b16 %v2651, %v2643
          %v3404 = vpack.c.b16 %v2652, %v2644
          %v3405 = vpack.c.b16 %v2653, %v2645
          %v3406 = vpack.c.b16 %v2654, %v2646
          %v3407 = vpack.c.b16 %v2655, %v2647
          %v3408 = vpack.c.b16 %v2664, %v2656
          %v3409 = vpack.c.b16 %v2665, %v2657
          %v3410 = vpack.c.b16 %v2666, %v2658
          %v3411 = vpack.c.b16 %v2667, %v2659
          %v3412 = vpack.c.b16 %v2668, %v2660
          %v3413 = vpack.c.b16 %v2669, %v2661
          %v3414 = vpack.c.b16 %v2670, %v2662
          %v3415 = vpack.c.b16 %v2671, %v2663
          %v3416 = vpack.c.b16 %v2680, %v2672
          %v3417 = vpack.c.b16 %v2681, %v2673
          %v3418 = vpack.c.b16 %v2682, %v2674
          %v3419 = vpack.c.b16 %v2683, %v2675
          %v3420 = vpack.c.b16 %v2684, %v2676
          %v3421 = vpack.c.b16 %v2685, %v2677
          %v3422 = vpack.c.b16 %v2686, %v2678
          %v3423 = vpack.c.b16 %v2687, %v2679
          %v3424 = vpack.c.b16 %v2696, %v2688
          %v3425 = vpack.c.b16 %v2697, %v2689
          %v3426 = vpack.c.b16 %v2698, %v2690
          %v3427 = vpack.c.b16 %v2699, %v2691
          %v3428 = vpack.c.b16 %v2700, %v2692
          %v3429 = vpack.c.b16 %v2701, %v2693
          %v3430 = vpack.c.b16 %v2702, %v2694
          %v3431 = vpack.c.b16 %v2703, %v2695
          %v3432 = vpack.c.b16 %v2712, %v2704
          %v3433 = vpack.c.b16 %v2713, %v2705
          %v3434 = vpack.c.b16 %v2714, %v2706
          %v3435 = vpack.c.b16 %v2715, %v2707
          %v3436 = vpack.c.b16 %v2716, %v2708
          %v3437 = vpack.c.b16 %v2717, %v2709
          %v3438 = vpack.c.b16 %v2718, %v2710
          %v3439 = vpack.c.b16 %v2719, %v2711
          %v3440 = vpack.c.b16 %v2728, %v2720
          %v3441 = vpack.c.b16 %v2729, %v2721
          %v3442 = vpack.c.b16 %v2730, %v2722
          %v3443 = vpack.c.b16 %v2731, %v2723
          %v3444 = vpack.c.b16 %v2732, %v2724
          %v3445 = vpack.c.b16 %v2733, %v2725
          %v3446 = vpack.c.b16 %v2734, %v2726
          %v3447 = vpack.c.b16 %v2735, %v2727
          %v3448 = vpack.c.b16 %v2744, %v2736
          %v3449 = vpack.c.b16 %v2745, %v2737
          %v3450 = vpack.c.b16 %v2746, %v2738
          %v3451 = vpack.c.b16 %v2747, %v2739
          %v3452 = vpack.c.b16 %v2748, %v2740
          %v3453 = vpack.c.b16 %v2749, %v2741
          %v3454 = vpack.c.b16 %v2750, %v2742
          %v3455 = vpack.c.b16 %v2751, %v2743
          %v3456 = vpack.c.b16 %v2760, %v2752
          %v3457 = vpack.c.b16 %v2761, %v2753
          %v3458 = vpack.c.b16 %v2762, %v2754
          %v3459 = vpack.c.b16 %v2763, %v2755
          %v3460 = vpack.c.b16 %v2764, %v2756
          %v3461 = vpack.c.b16 %v2765, %v2757
          %v3462 = vpack.c.b16 %v2766, %v2758
          %v3463 = vpack.c.b16 %v2767, %v2759
          %v3464 = vpack.c.b16 %v2776, %v2768
          %v3465 = vpack.c.b16 %v2777, %v2769
          %v3466 = vpack.c.b16 %v2778, %v2770
          %v3467 = vpack.c.b16 %v2779, %v2771
          %v3468 = vpack.c.b16 %v2780, %v2772
          %v3469 = vpack.c.b16 %v2781, %v2773
          %v3470 = vpack.c.b16 %v2782, %v2774
          %v3471 = vpack.c.b16 %v2783, %v2775
          %v3472 = vpack.c.b16 %v2792, %v2784
          %v3473 = vpack.c.b16 %v2793, %v2785
          %v3474 = vpack.c.b16 %v2794, %v2786
          %v3475 = vpack.c.b16 %v2795, %v2787
          %v3476 = vpack.c.b16 %v2796, %v2788
          %v3477 = vpack.c.b16 %v2797, %v2789
          %v3478 = vpack.c.b16 %v2798, %v2790
          %v3479 = vpack.c.b16 %v2799, %v2791
          %v3480 = vpack.c.b16 %v2808, %v2800
          %v3481 = vpack.c.b16 %v2809, %v2801
          %v3482 = vpack.c.b16 %v2810, %v2802
          %v3483 = vpack.c.b16 %v2811, %v2803
          %v3484 = vpack.c.b16 %v2812, %v2804
          %v3485 = vpack.c.b16 %v2813, %v2805
          %v3486 = vpack.c.b16 %v2814, %v2806
          %v3487 = vpack.c.b16 %v2815, %v2807
          %v3488 = vpack.c.b16 %v2824, %v2816
          %v3489 = vpack.c.b16 %v2825, %v2817
          %v3490 = vpack.c.b16 %v2826, %v2818
          %v3491 = vpack.c.b16 %v2827, %v2819
          %v3492 = vpack.c.b16 %v2828, %v2820
          %v3493 = vpack.c.b16 %v2829, %v2821
          %v3494 = vpack.c.b16 %v2830, %v2822
          %v3495 = vpack.c.b16 %v2831, %v2823
          %v3496 = vpack.c.b16 %v2840, %v2832
          %v3497 = vpack.c.b16 %v2841, %v2833
          %v3498 = vpack.c.b16 %v2842, %v2834
          %v3499 = vpack.c.b16 %v2843, %v2835
          %v3500 = vpack.c.b16 %v2844, %v2836
          %v3501 = vpack.c.b16 %v2845, %v2837
          %v3502 = vpack.c.b16 %v2846, %v2838
          %v3503 = vpack.c.b16 %v2847, %v2839
          %v3504 = vpack.c.b16 %v2856, %v2848
          %v3505 = vpack.c.b16 %v2857, %v2849
          %v3506 = vpack.c.b16 %v2858, %v2850
          %v3507 = vpack.c.b16 %v2859, %v2851
          %v3508 = vpack.c.b16 %v2860, %v2852
          %v3509 = vpack.c.b16 %v2861, %v2853
          %v3510 = vpack.c.b16 %v2862, %v2854
          %v3511 = vpack.c.b16 %v2863, %v2855
          %v3512 = vpack.c.b16 %v2872, %v2864
          %v3513 = vpack.c.b16 %v2873, %v2865
          %v3514 = vpack.c.b16 %v2874, %v2866
          %v3515 = vpack.c.b16 %v2875, %v2867
          %v3516 = vpack.c.b16 %v2876, %v2868
          %v3517 = vpack.c.b16 %v2877, %v2869
          %v3518 = vpack.c.b16 %v2878, %v2870
          %v3519 = vpack.c.b16 %v2879, %v2871
          %v3520 = vpack.c.b16 %v2888, %v2880
          %v3521 = vpack.c.b16 %v2889, %v2881
          %v3522 = vpack.c.b16 %v2890, %v2882
          %v3523 = vpack.c.b16 %v2891, %v2883
          %v3524 = vpack.c.b16 %v2892, %v2884
          %v3525 = vpack.c.b16 %v2893, %v2885
          %v3526 = vpack.c.b16 %v2894, %v2886
          %v3527 = vpack.c.b16 %v2895, %v2887
          %v3528 = vpack.c.b16 %v2904, %v2896
          %v3529 = vpack.c.b16 %v2905, %v2897
          %v3530 = vpack.c.b16 %v2906, %v2898
          %v3531 = vpack.c.b16 %v2907, %v2899
          %v3532 = vpack.c.b16 %v2908, %v2900
          %v3533 = vpack.c.b16 %v2909, %v2901
          %v3534 = vpack.c.b16 %v2910, %v2902
          %v3535 = vpack.c.b16 %v2911, %v2903
          %v3536 = vpack.c.b16 %v2920, %v2912
          %v3537 = vpack.c.b16 %v2921, %v2913
          %v3538 = vpack.c.b16 %v2922, %v2914
          %v3539 = vpack.c.b16 %v2923, %v2915
          %v3540 = vpack.c.b16 %v2924, %v2916
          %v3541 = vpack.c.b16 %v2925, %v2917
          %v3542 = vpack.c.b16 %v2926, %v2918
          %v3543 = vpack.c.b16 %v2927, %v2919
          %v3544 = vpack.c.b16 %v2936, %v2928
          %v3545 = vpack.c.b16 %v2937, %v2929
          %v3546 = vpack.c.b16 %v2938, %v2930
          %v3547 = vpack.c.b16 %v2939, %v2931
          %v3548 = vpack.c.b16 %v2940, %v2932
          %v3549 = vpack.c.b16 %v2941, %v2933
          %v3550 = vpack.c.b16 %v2942, %v2934
          %v3551 = vpack.c.b16 %v2943, %v2935
          %v3552 = vpack.c.b16 %v2952, %v2944
          %v3553 = vpack.c.b16 %v2953, %v2945
          %v3554 = vpack.c.b16 %v2954, %v2946
          %v3555 = vpack.c.b16 %v2955, %v2947
          %v3556 = vpack.c.b16 %v2956, %v2948
          %v3557 = vpack.c.b16 %v2957, %v2949
          %v3558 = vpack.c.b16 %v2958, %v2950
          %v3559 = vpack.c.b16 %v2959, %v2951
          %v3560 = vpack.c.b16 %v2968, %v2960
          %v3561 = vpack.c.b16 %v2969, %v2961
          %v3562 = vpack.c.b16 %v2970, %v2962
          %v3563 = vpack.c.b16 %v2971, %v2963
          %v3564 = vpack.c.b16 %v2972, %v2964
          %v3565 = vpack.c.b16 %v2973, %v2965
          %v3566 = vpack.c.b16 %v2974, %v2966
          %v3567 = vpack.c.b16 %v2975, %v2967
          %v3568 = vpack.c.b16 %v2984, %v2976
          %v3569 = vpack.c.b16 %v2985, %v2977
          %v3570 = vpack.c.b16 %v2986, %v2978
          %v3571 = vpack.c.b16 %v2987, %v2979
          %v3572 = vpack.c.b16 %v2988, %v2980
          %v3573 = vpack.c.b16 %v2989, %v2981
          %v3574 = vpack.c.b16 %v2990, %v2982
          %v3575 = vpack.c.b16 %v2991, %v2983
          %v3576 = vpack.c.b16 %v3000, %v2992
          %v3577 = vpack.c.b16 %v3001, %v2993
          %v3578 = vpack.c.b16 %v3002, %v2994
          %v3579 = vpack.c.b16 %v3003, %v2995
          %v3580 = vpack.c.b16 %v3004, %v2996
          %v3581 = vpack.c.b16 %v3005, %v2997
          %v3582 = vpack.c.b16 %v3006, %v2998
          %v3583 = vpack.c.b16 %v3007, %v2999
          %v3584 = vpack.c.b16 %v3016, %v3008
          %v3585 = vpack.c.b16 %v3017, %v3009
          %v3586 = vpack.c.b16 %v3018, %v3010
          %v3587 = vpack.c.b16 %v3019, %v3011
          %v3588 = vpack.c.b16 %v3020, %v3012
          %v3589 = vpack.c.b16 %v3021, %v3013
          %v3590 = vpack.c.b16 %v3022, %v3014
          %v3591 = vpack.c.b16 %v3023, %v3015
          %v3592 = vpack.c.b16 %v3032, %v3024
          %v3593 = vpack.c.b16 %v3033, %v3025
          %v3594 = vpack.c.b16 %v3034, %v3026
          %v3595 = vpack.c.b16 %v3035, %v3027
          %v3596 = vpack.c.b16 %v3036, %v3028
          %v3597 = vpack.c.b16 %v3037, %v3029
          %v3598 = vpack.c.b16 %v3038, %v3030
          %v3599 = vpack.c.b16 %v3039, %v3031
          %v3600 = vpack.c.b16 %v3048, %v3040
          %v3601 = vpack.c.b16 %v3049, %v3041
          %v3602 = vpack.c.b16 %v3050, %v3042
          %v3603 = vpack.c.b16 %v3051, %v3043
          %v3604 = vpack.c.b16 %v3052, %v3044
          %v3605 = vpack.c.b16 %v3053, %v3045
          %v3606 = vpack.c.b16 %v3054, %v3046
          %v3607 = vpack.c.b16 %v3055, %v3047
          %v3608 = vpack.c.b16 %v3064, %v3056
          %v3609 = vpack.c.b16 %v3065, %v3057
          %v3610 = vpack.c.b16 %v3066, %v3058
          %v3611 = vpack.c.b16 %v3067, %v3059
          %v3612 = vpack.c.b16 %v3068, %v3060
          %v3613 = vpack.c.b16 %v3069, %v3061
          %v3614 = vpack.c.b16 %v3070, %v3062
          %v3615 = vpack.c.b16 %v3071, %v3063
          %v3616 = vpack.c.b16 %v3080, %v3072
          %v3617 = vpack.c.b16 %v3081, %v3073
          %v3618 = vpack.c.b16 %v3082, %v3074
          %v3619 = vpack.c.b16 %v3083, %v3075
          %v3620 = vpack.c.b16 %v3084, %v3076
          %v3621 = vpack.c.b16 %v3085, %v3077
          %v3622 = vpack.c.b16 %v3086, %v3078
          %v3623 = vpack.c.b16 %v3087, %v3079
          %v3624 = vpack.c.b16 %v3096, %v3088
          %v3625 = vpack.c.b16 %v3097, %v3089
          %v3626 = vpack.c.b16 %v3098, %v3090
          %v3627 = vpack.c.b16 %v3099, %v3091
          %v3628 = vpack.c.b16 %v3100, %v3092
          %v3629 = vpack.c.b16 %v3101, %v3093
          %v3630 = vpack.c.b16 %v3102, %v3094
          %v3631 = vpack.c.b16 %v3103, %v3095
          %v3632 = vpack.c.b16 %v3112, %v3104
          %v3633 = vpack.c.b16 %v3113, %v3105
          %v3634 = vpack.c.b16 %v3114, %v3106
          %v3635 = vpack.c.b16 %v3115, %v3107
          %v3636 = vpack.c.b16 %v3116, %v3108
          %v3637 = vpack.c.b16 %v3117, %v3109
          %v3638 = vpack.c.b16 %v3118, %v3110
          %v3639 = vpack.c.b16 %v3119, %v3111
          %v3640 = vpack.c.b16 %v3128, %v3120
          %v3641 = vpack.c.b16 %v3129, %v3121
          %v3642 = vpack.c.b16 %v3130, %v3122
          %v3643 = vpack.c.b16 %v3131, %v3123
          %v3644 = vpack.c.b16 %v3132, %v3124
          %v3645 = vpack.c.b16 %v3133, %v3125
          %v3646 = vpack.c.b16 %v3134, %v3126
          %v3647 = vpack.c.b16 %v3135, %v3127
          %4160 = vmatprep.subr.bf16.mxu0 %v3193
          %4161 = vmatpush1.bf16.msra.mxu0 %v3192
          %4162 = vmatprep.subr.bf16.mxu0 %v3185
          %4163 = vmatpush1.bf16.msra.mxu0 %v3184
          %4164 = vmatprep.subr.bf16.mxu0 %v3177
          %4165 = vmatpush1.bf16.msra.mxu0 %v3176
          %4166 = vmatprep.subr.bf16.mxu0 %v3169
          %4167 = vmatpush1.bf16.msra.mxu0 %v3168
          %4168 = vmatprep.subr.bf16.mxu0 %v3161
          %4169 = vmatpush1.bf16.msra.mxu0 %v3160
          %4170 = vmatprep.subr.bf16.mxu0 %v3153
          %4171 = vmatpush1.bf16.msra.mxu0 %v3152
          %4172 = vmatprep.subr.bf16.mxu0 %v3145
          %4173 = vmatpush1.bf16.msra.mxu0 %v3144
          %4174 = vmatprep.subr.bf16.mxu0 %v3137
          %4175 = vmatpush1.bf16.msra.mxu0 %v3136
          %4176 = vmatprep.subr.bf16.mxu0 %v3257
          %4177 = vmatpush2.bf16.msra.mxu0 %v3256
          %4178 = vmatprep.subr.bf16.mxu0 %v3249
          %4179 = vmatpush2.bf16.msra.mxu0 %v3248
          %4180 = vmatprep.subr.bf16.mxu0 %v3241
          %4181 = vmatpush2.bf16.msra.mxu0 %v3240
          %4182 = vmatprep.subr.bf16.mxu0 %v3233
          %4183 = vmatpush2.bf16.msra.mxu0 %v3232
          %4184 = vmatprep.subr.bf16.mxu0 %v3225
          %4185 = vmatpush2.bf16.msra.mxu0 %v3224
          %4186 = vmatprep.subr.bf16.mxu0 %v3217
          %4187 = vmatpush2.bf16.msra.mxu0 %v3216
          %4188 = vmatprep.subr.bf16.mxu0 %v3209
          %4189 = vmatpush2.bf16.msra.mxu0 %v3208
          %4190 = vmatprep.subr.bf16.mxu0 %v3201
          %4191 = vmatpush2.bf16.msra.mxu0 %v3200
          %4192 = vmatprep.mubr.bf16.mxu0 %v1585
          %4193 = vmatmul.mubr.bf16.gmra.mxu0 %v1584
          %v4194 = vpop.f32.mrf.mxu0
          %v4195 = vadd.f32 %v1535, %v4194
          %v4196 = vpop.f32.mrf.mxu0
          %v4197 = vadd.f32 %v1539, %v4196
          %v4198 = vpop.f32.mrf.mxu0
          %v4199 = vpop.f32.mrf.mxu0
          %4200 = vdwg.mxu0
          %4201 = vmatprep.subr.bf16.mxu0 %v3321
          %4202 = vmatpush1.bf16.msra.mxu0 %v3320
          %4203 = vmatprep.subr.bf16.mxu0 %v3313
          %4204 = vmatpush1.bf16.msra.mxu0 %v3312
          %4205 = vmatprep.subr.bf16.mxu0 %v3305
          %4206 = vmatpush1.bf16.msra.mxu0 %v3304
          %4207 = vmatprep.subr.bf16.mxu0 %v3297
          %4208 = vmatpush1.bf16.msra.mxu0 %v3296
          %4209 = vmatprep.subr.bf16.mxu0 %v3289
          %4210 = vmatpush1.bf16.msra.mxu0 %v3288
          %4211 = vmatprep.subr.bf16.mxu0 %v3281
          %4212 = vmatpush1.bf16.msra.mxu0 %v3280
          %4213 = vmatprep.subr.bf16.mxu0 %v3273
          %4214 = vmatpush1.bf16.msra.mxu0 %v3272
          %4215 = vmatprep.subr.bf16.mxu0 %v3265
          %4216 = vmatpush1.bf16.msra.mxu0 %v3264
          %4217 = vmatprep.subr.bf16.mxu0 %v3385
          %4218 = vmatpush2.bf16.msra.mxu0 %v3384
          %4219 = vmatprep.subr.bf16.mxu0 %v3377
          %4220 = vmatpush2.bf16.msra.mxu0 %v3376
          %4221 = vmatprep.subr.bf16.mxu0 %v3369
          %4222 = vmatpush2.bf16.msra.mxu0 %v3368
          %4223 = vmatprep.subr.bf16.mxu0 %v3361
          %4224 = vmatpush2.bf16.msra.mxu0 %v3360
          %4225 = vmatprep.subr.bf16.mxu0 %v3353
          %4226 = vmatpush2.bf16.msra.mxu0 %v3352
          %4227 = vmatprep.subr.bf16.mxu0 %v3345
          %4228 = vmatpush2.bf16.msra.mxu0 %v3344
          %4229 = vmatprep.subr.bf16.mxu0 %v3337
          %4230 = vmatpush2.bf16.msra.mxu0 %v3336
          %4231 = vmatprep.subr.bf16.mxu0 %v3329
          %4232 = vmatpush2.bf16.msra.mxu0 %v3328
          %4233 = vmatprep.mubr.bf16.mxu0 %v1587
          %4234 = vmatmul.mubr.bf16.gmra.mxu0 %v1586
          %v4235 = vpop.f32.mrf.mxu0
          %v4236 = vadd.f32 %v4195, %v4235
          %v4237 = vpop.f32.mrf.mxu0
          %v4238 = vadd.f32 %v4197, %v4237
          %v4239 = vpop.f32.mrf.mxu0
          %v4240 = vpop.f32.mrf.mxu0
          %4241 = vdwg.mxu0
          %4242 = vmatprep.subr.bf16.mxu0 %v3449
          %4243 = vmatpush1.bf16.msra.mxu0 %v3448
          %4244 = vmatprep.subr.bf16.mxu0 %v3441
          %4245 = vmatpush1.bf16.msra.mxu0 %v3440
          %4246 = vmatprep.subr.bf16.mxu0 %v3433
          %4247 = vmatpush1.bf16.msra.mxu0 %v3432
          %4248 = vmatprep.subr.bf16.mxu0 %v3425
          %4249 = vmatpush1.bf16.msra.mxu0 %v3424
          %4250 = vmatprep.subr.bf16.mxu0 %v3417
          %4251 = vmatpush1.bf16.msra.mxu0 %v3416
          %4252 = vmatprep.subr.bf16.mxu0 %v3409
          %4253 = vmatpush1.bf16.msra.mxu0 %v3408
          %4254 = vmatprep.subr.bf16.mxu0 %v3401
          %4255 = vmatpush1.bf16.msra.mxu0 %v3400
          %4256 = vmatprep.subr.bf16.mxu0 %v3393
          %4257 = vmatpush1.bf16.msra.mxu0 %v3392
          %4258 = vmatprep.subr.bf16.mxu0 %v3513
          %4259 = vmatpush2.bf16.msra.mxu0 %v3512
          %4260 = vmatprep.subr.bf16.mxu0 %v3505
          %4261 = vmatpush2.bf16.msra.mxu0 %v3504
          %4262 = vmatprep.subr.bf16.mxu0 %v3497
          %4263 = vmatpush2.bf16.msra.mxu0 %v3496
          %4264 = vmatprep.subr.bf16.mxu0 %v3489
          %4265 = vmatpush2.bf16.msra.mxu0 %v3488
          %4266 = vmatprep.subr.bf16.mxu0 %v3481
          %4267 = vmatpush2.bf16.msra.mxu0 %v3480
          %4268 = vmatprep.subr.bf16.mxu0 %v3473
          %4269 = vmatpush2.bf16.msra.mxu0 %v3472
          %4270 = vmatprep.subr.bf16.mxu0 %v3465
          %4271 = vmatpush2.bf16.msra.mxu0 %v3464
          %4272 = vmatprep.subr.bf16.mxu0 %v3457
          %4273 = vmatpush2.bf16.msra.mxu0 %v3456
          %4274 = vmatprep.mubr.bf16.mxu0 %v1589
          %4275 = vmatmul.mubr.bf16.gmra.mxu0 %v1588
          %v4276 = vpop.f32.mrf.mxu0
          %v4277 = vadd.f32 %v4236, %v4276
          %v4278 = vpop.f32.mrf.mxu0
          %v4279 = vadd.f32 %v4238, %v4278
          %v4280 = vpop.f32.mrf.mxu0
          %v4281 = vpop.f32.mrf.mxu0
          %4282 = vdwg.mxu0
          %4283 = vmatprep.subr.bf16.mxu0 %v3577
          %4284 = vmatpush1.bf16.msra.mxu0 %v3576
          %4285 = vmatprep.subr.bf16.mxu0 %v3569
          %4286 = vmatpush1.bf16.msra.mxu0 %v3568
          %4287 = vmatprep.subr.bf16.mxu0 %v3561
          %4288 = vmatpush1.bf16.msra.mxu0 %v3560
          %4289 = vmatprep.subr.bf16.mxu0 %v3553
          %4290 = vmatpush1.bf16.msra.mxu0 %v3552
          %4291 = vmatprep.subr.bf16.mxu0 %v3545
          %4292 = vmatpush1.bf16.msra.mxu0 %v3544
          %4293 = vmatprep.subr.bf16.mxu0 %v3537
          %4294 = vmatpush1.bf16.msra.mxu0 %v3536
          %4295 = vmatprep.subr.bf16.mxu0 %v3529
          %4296 = vmatpush1.bf16.msra.mxu0 %v3528
          %4297 = vmatprep.subr.bf16.mxu0 %v3521
          %4298 = vmatpush1.bf16.msra.mxu0 %v3520
          %4299 = vmatprep.subr.bf16.mxu0 %v3641
          %4300 = vmatpush2.bf16.msra.mxu0 %v3640
          %4301 = vmatprep.subr.bf16.mxu0 %v3633
          %4302 = vmatpush2.bf16.msra.mxu0 %v3632
          %4303 = vmatprep.subr.bf16.mxu0 %v3625
          %4304 = vmatpush2.bf16.msra.mxu0 %v3624
          %4305 = vmatprep.subr.bf16.mxu0 %v3617
          %4306 = vmatpush2.bf16.msra.mxu0 %v3616
          %4307 = vmatprep.subr.bf16.mxu0 %v3609
          %4308 = vmatpush2.bf16.msra.mxu0 %v3608
          %4309 = vmatprep.subr.bf16.mxu0 %v3601
          %4310 = vmatpush2.bf16.msra.mxu0 %v3600
          %4311 = vmatprep.subr.bf16.mxu0 %v3593
          %4312 = vmatpush2.bf16.msra.mxu0 %v3592
          %4313 = vmatprep.subr.bf16.mxu0 %v3585
          %4314 = vmatpush2.bf16.msra.mxu0 %v3584
          %4315 = vmatprep.mubr.bf16.mxu0 %v1591
          %4316 = vmatmul.mubr.bf16.gmra.mxu0 %v1590
          %v4317 = vpop.f32.mrf.mxu0
          %v4318 = vadd.f32 %v4277, %v4317
          %v4319 = vpop.f32.mrf.mxu0
          %v4320 = vadd.f32 %v4279, %v4319
          %v4321 = vpop.f32.mrf.mxu0
          %v4322 = vpop.f32.mrf.mxu0
          %4323 = vdwg.mxu0
          %4324 = vmatprep.subr.bf16.mxu0 %v3195
          %4325 = vmatpush1.bf16.msra.mxu0 %v3194
          %4326 = vmatprep.subr.bf16.mxu0 %v3187
          %4327 = vmatpush1.bf16.msra.mxu0 %v3186
          %4328 = vmatprep.subr.bf16.mxu0 %v3179
          %4329 = vmatpush1.bf16.msra.mxu0 %v3178
          %4330 = vmatprep.subr.bf16.mxu0 %v3171
          %4331 = vmatpush1.bf16.msra.mxu0 %v3170
          %4332 = vmatprep.subr.bf16.mxu0 %v3163
          %4333 = vmatpush1.bf16.msra.mxu0 %v3162
          %4334 = vmatprep.subr.bf16.mxu0 %v3155
          %4335 = vmatpush1.bf16.msra.mxu0 %v3154
          %4336 = vmatprep.subr.bf16.mxu0 %v3147
          %4337 = vmatpush1.bf16.msra.mxu0 %v3146
          %4338 = vmatprep.subr.bf16.mxu0 %v3139
          %4339 = vmatpush1.bf16.msra.mxu0 %v3138
          %4340 = vmatprep.subr.bf16.mxu0 %v3259
          %4341 = vmatpush2.bf16.msra.mxu0 %v3258
          %4342 = vmatprep.subr.bf16.mxu0 %v3251
          %4343 = vmatpush2.bf16.msra.mxu0 %v3250
          %4344 = vmatprep.subr.bf16.mxu0 %v3243
          %4345 = vmatpush2.bf16.msra.mxu0 %v3242
          %4346 = vmatprep.subr.bf16.mxu0 %v3235
          %4347 = vmatpush2.bf16.msra.mxu0 %v3234
          %4348 = vmatprep.subr.bf16.mxu0 %v3227
          %4349 = vmatpush2.bf16.msra.mxu0 %v3226
          %4350 = vmatprep.subr.bf16.mxu0 %v3219
          %4351 = vmatpush2.bf16.msra.mxu0 %v3218
          %4352 = vmatprep.subr.bf16.mxu0 %v3211
          %4353 = vmatpush2.bf16.msra.mxu0 %v3210
          %4354 = vmatprep.subr.bf16.mxu0 %v3203
          %4355 = vmatpush2.bf16.msra.mxu0 %v3202
          %4356 = vmatprep.mubr.bf16.mxu0 %v1585
          %4357 = vmatmul.mubr.bf16.gmra.mxu0 %v1584
          %v4358 = vpop.f32.mrf.mxu0
          %v4359 = vadd.f32 %v1543, %v4358
          %v4360 = vpop.f32.mrf.mxu0
          %v4361 = vadd.f32 %v1547, %v4360
          %v4362 = vpop.f32.mrf.mxu0
          %v4363 = vpop.f32.mrf.mxu0
          %4364 = vdwg.mxu0
          %4365 = vmatprep.subr.bf16.mxu0 %v3323
          %4366 = vmatpush1.bf16.msra.mxu0 %v3322
          %4367 = vmatprep.subr.bf16.mxu0 %v3315
          %4368 = vmatpush1.bf16.msra.mxu0 %v3314
          %4369 = vmatprep.subr.bf16.mxu0 %v3307
          %4370 = vmatpush1.bf16.msra.mxu0 %v3306
          %4371 = vmatprep.subr.bf16.mxu0 %v3299
          %4372 = vmatpush1.bf16.msra.mxu0 %v3298
          %4373 = vmatprep.subr.bf16.mxu0 %v3291
          %4374 = vmatpush1.bf16.msra.mxu0 %v3290
          %4375 = vmatprep.subr.bf16.mxu0 %v3283
          %4376 = vmatpush1.bf16.msra.mxu0 %v3282
          %4377 = vmatprep.subr.bf16.mxu0 %v3275
          %4378 = vmatpush1.bf16.msra.mxu0 %v3274
          %4379 = vmatprep.subr.bf16.mxu0 %v3267
          %4380 = vmatpush1.bf16.msra.mxu0 %v3266
          %4381 = vmatprep.subr.bf16.mxu0 %v3387
          %4382 = vmatpush2.bf16.msra.mxu0 %v3386
          %4383 = vmatprep.subr.bf16.mxu0 %v3379
          %4384 = vmatpush2.bf16.msra.mxu0 %v3378
          %4385 = vmatprep.subr.bf16.mxu0 %v3371
          %4386 = vmatpush2.bf16.msra.mxu0 %v3370
          %4387 = vmatprep.subr.bf16.mxu0 %v3363
          %4388 = vmatpush2.bf16.msra.mxu0 %v3362
          %4389 = vmatprep.subr.bf16.mxu0 %v3355
          %4390 = vmatpush2.bf16.msra.mxu0 %v3354
          %4391 = vmatprep.subr.bf16.mxu0 %v3347
          %4392 = vmatpush2.bf16.msra.mxu0 %v3346
          %4393 = vmatprep.subr.bf16.mxu0 %v3339
          %4394 = vmatpush2.bf16.msra.mxu0 %v3338
          %4395 = vmatprep.subr.bf16.mxu0 %v3331
          %4396 = vmatpush2.bf16.msra.mxu0 %v3330
          %4397 = vmatprep.mubr.bf16.mxu0 %v1587
          %4398 = vmatmul.mubr.bf16.gmra.mxu0 %v1586
          %v4399 = vpop.f32.mrf.mxu0
          %v4400 = vadd.f32 %v4359, %v4399
          %v4401 = vpop.f32.mrf.mxu0
          %v4402 = vadd.f32 %v4361, %v4401
          %v4403 = vpop.f32.mrf.mxu0
          %v4404 = vpop.f32.mrf.mxu0
          %4405 = vdwg.mxu0
          %4406 = vmatprep.subr.bf16.mxu0 %v3451
          %4407 = vmatpush1.bf16.msra.mxu0 %v3450
          %4408 = vmatprep.subr.bf16.mxu0 %v3443
          %4409 = vmatpush1.bf16.msra.mxu0 %v3442
          %4410 = vmatprep.subr.bf16.mxu0 %v3435
          %4411 = vmatpush1.bf16.msra.mxu0 %v3434
          %4412 = vmatprep.subr.bf16.mxu0 %v3427
          %4413 = vmatpush1.bf16.msra.mxu0 %v3426
          %4414 = vmatprep.subr.bf16.mxu0 %v3419
          %4415 = vmatpush1.bf16.msra.mxu0 %v3418
          %4416 = vmatprep.subr.bf16.mxu0 %v3411
          %4417 = vmatpush1.bf16.msra.mxu0 %v3410
          %4418 = vmatprep.subr.bf16.mxu0 %v3403
          %4419 = vmatpush1.bf16.msra.mxu0 %v3402
          %4420 = vmatprep.subr.bf16.mxu0 %v3395
          %4421 = vmatpush1.bf16.msra.mxu0 %v3394
          %4422 = vmatprep.subr.bf16.mxu0 %v3515
          %4423 = vmatpush2.bf16.msra.mxu0 %v3514
          %4424 = vmatprep.subr.bf16.mxu0 %v3507
          %4425 = vmatpush2.bf16.msra.mxu0 %v3506
          %4426 = vmatprep.subr.bf16.mxu0 %v3499
          %4427 = vmatpush2.bf16.msra.mxu0 %v3498
          %4428 = vmatprep.subr.bf16.mxu0 %v3491
          %4429 = vmatpush2.bf16.msra.mxu0 %v3490
          %4430 = vmatprep.subr.bf16.mxu0 %v3483
          %4431 = vmatpush2.bf16.msra.mxu0 %v3482
          %4432 = vmatprep.subr.bf16.mxu0 %v3475
          %4433 = vmatpush2.bf16.msra.mxu0 %v3474
          %4434 = vmatprep.subr.bf16.mxu0 %v3467
          %4435 = vmatpush2.bf16.msra.mxu0 %v3466
          %4436 = vmatprep.subr.bf16.mxu0 %v3459
          %4437 = vmatpush2.bf16.msra.mxu0 %v3458
          %4438 = vmatprep.mubr.bf16.mxu0 %v1589
          %4439 = vmatmul.mubr.bf16.gmra.mxu0 %v1588
          %v4440 = vpop.f32.mrf.mxu0
          %v4441 = vadd.f32 %v4400, %v4440
          %v4442 = vpop.f32.mrf.mxu0
          %v4443 = vadd.f32 %v4402, %v4442
          %v4444 = vpop.f32.mrf.mxu0
          %v4445 = vpop.f32.mrf.mxu0
          %4446 = vdwg.mxu0
          %4447 = vmatprep.subr.bf16.mxu0 %v3579
          %4448 = vmatpush1.bf16.msra.mxu0 %v3578
          %4449 = vmatprep.subr.bf16.mxu0 %v3571
          %4450 = vmatpush1.bf16.msra.mxu0 %v3570
          %4451 = vmatprep.subr.bf16.mxu0 %v3563
          %4452 = vmatpush1.bf16.msra.mxu0 %v3562
          %4453 = vmatprep.subr.bf16.mxu0 %v3555
          %4454 = vmatpush1.bf16.msra.mxu0 %v3554
          %4455 = vmatprep.subr.bf16.mxu0 %v3547
          %4456 = vmatpush1.bf16.msra.mxu0 %v3546
          %4457 = vmatprep.subr.bf16.mxu0 %v3539
          %4458 = vmatpush1.bf16.msra.mxu0 %v3538
          %4459 = vmatprep.subr.bf16.mxu0 %v3531
          %4460 = vmatpush1.bf16.msra.mxu0 %v3530
          %4461 = vmatprep.subr.bf16.mxu0 %v3523
          %4462 = vmatpush1.bf16.msra.mxu0 %v3522
          %4463 = vmatprep.subr.bf16.mxu0 %v3643
          %4464 = vmatpush2.bf16.msra.mxu0 %v3642
          %4465 = vmatprep.subr.bf16.mxu0 %v3635
          %4466 = vmatpush2.bf16.msra.mxu0 %v3634
          %4467 = vmatprep.subr.bf16.mxu0 %v3627
          %4468 = vmatpush2.bf16.msra.mxu0 %v3626
          %4469 = vmatprep.subr.bf16.mxu0 %v3619
          %4470 = vmatpush2.bf16.msra.mxu0 %v3618
          %4471 = vmatprep.subr.bf16.mxu0 %v3611
          %4472 = vmatpush2.bf16.msra.mxu0 %v3610
          %4473 = vmatprep.subr.bf16.mxu0 %v3603
          %4474 = vmatpush2.bf16.msra.mxu0 %v3602
          %4475 = vmatprep.subr.bf16.mxu0 %v3595
          %4476 = vmatpush2.bf16.msra.mxu0 %v3594
          %4477 = vmatprep.subr.bf16.mxu0 %v3587
          %4478 = vmatpush2.bf16.msra.mxu0 %v3586
          %4479 = vmatprep.mubr.bf16.mxu0 %v1591
          %4480 = vmatmul.mubr.bf16.gmra.mxu0 %v1590
          %v4481 = vpop.f32.mrf.mxu0
          %v4482 = vadd.f32 %v4441, %v4481
          %v4483 = vpop.f32.mrf.mxu0
          %v4484 = vadd.f32 %v4443, %v4483
          %v4485 = vpop.f32.mrf.mxu0
          %v4486 = vpop.f32.mrf.mxu0
          %4487 = vdwg.mxu0
          %4488 = vmatprep.subr.bf16.mxu0 %v3197
          %4489 = vmatpush1.bf16.msra.mxu0 %v3196
          %4490 = vmatprep.subr.bf16.mxu0 %v3189
          %4491 = vmatpush1.bf16.msra.mxu0 %v3188
          %4492 = vmatprep.subr.bf16.mxu0 %v3181
          %4493 = vmatpush1.bf16.msra.mxu0 %v3180
          %4494 = vmatprep.subr.bf16.mxu0 %v3173
          %4495 = vmatpush1.bf16.msra.mxu0 %v3172
          %4496 = vmatprep.subr.bf16.mxu0 %v3165
          %4497 = vmatpush1.bf16.msra.mxu0 %v3164
          %4498 = vmatprep.subr.bf16.mxu0 %v3157
          %4499 = vmatpush1.bf16.msra.mxu0 %v3156
          %4500 = vmatprep.subr.bf16.mxu0 %v3149
          %4501 = vmatpush1.bf16.msra.mxu0 %v3148
          %4502 = vmatprep.subr.bf16.mxu0 %v3141
          %4503 = vmatpush1.bf16.msra.mxu0 %v3140
          %4504 = vmatprep.subr.bf16.mxu0 %v3261
          %4505 = vmatpush2.bf16.msra.mxu0 %v3260
          %4506 = vmatprep.subr.bf16.mxu0 %v3253
          %4507 = vmatpush2.bf16.msra.mxu0 %v3252
          %4508 = vmatprep.subr.bf16.mxu0 %v3245
          %4509 = vmatpush2.bf16.msra.mxu0 %v3244
          %4510 = vmatprep.subr.bf16.mxu0 %v3237
          %4511 = vmatpush2.bf16.msra.mxu0 %v3236
          %4512 = vmatprep.subr.bf16.mxu0 %v3229
          %4513 = vmatpush2.bf16.msra.mxu0 %v3228
          %4514 = vmatprep.subr.bf16.mxu0 %v3221
          %4515 = vmatpush2.bf16.msra.mxu0 %v3220
          %4516 = vmatprep.subr.bf16.mxu0 %v3213
          %4517 = vmatpush2.bf16.msra.mxu0 %v3212
          %4518 = vmatprep.subr.bf16.mxu0 %v3205
          %4519 = vmatpush2.bf16.msra.mxu0 %v3204
          %4520 = vmatprep.mubr.bf16.mxu0 %v1585
          %4521 = vmatmul.mubr.bf16.gmra.mxu0 %v1584
          %v4522 = vpop.f32.mrf.mxu0
          %v4523 = vadd.f32 %v1551, %v4522
          %v4524 = vpop.f32.mrf.mxu0
          %v4525 = vadd.f32 %v1555, %v4524
          %v4526 = vpop.f32.mrf.mxu0
          %v4527 = vpop.f32.mrf.mxu0
          %4528 = vdwg.mxu0
          %4529 = vmatprep.subr.bf16.mxu0 %v3325
          %4530 = vmatpush1.bf16.msra.mxu0 %v3324
          %4531 = vmatprep.subr.bf16.mxu0 %v3317
          %4532 = vmatpush1.bf16.msra.mxu0 %v3316
          %4533 = vmatprep.subr.bf16.mxu0 %v3309
          %4534 = vmatpush1.bf16.msra.mxu0 %v3308
          %4535 = vmatprep.subr.bf16.mxu0 %v3301
          %4536 = vmatpush1.bf16.msra.mxu0 %v3300
          %4537 = vmatprep.subr.bf16.mxu0 %v3293
          %4538 = vmatpush1.bf16.msra.mxu0 %v3292
          %4539 = vmatprep.subr.bf16.mxu0 %v3285
          %4540 = vmatpush1.bf16.msra.mxu0 %v3284
          %4541 = vmatprep.subr.bf16.mxu0 %v3277
          %4542 = vmatpush1.bf16.msra.mxu0 %v3276
          %4543 = vmatprep.subr.bf16.mxu0 %v3269
          %4544 = vmatpush1.bf16.msra.mxu0 %v3268
          %4545 = vmatprep.subr.bf16.mxu0 %v3389
          %4546 = vmatpush2.bf16.msra.mxu0 %v3388
          %4547 = vmatprep.subr.bf16.mxu0 %v3381
          %4548 = vmatpush2.bf16.msra.mxu0 %v3380
          %4549 = vmatprep.subr.bf16.mxu0 %v3373
          %4550 = vmatpush2.bf16.msra.mxu0 %v3372
          %4551 = vmatprep.subr.bf16.mxu0 %v3365
          %4552 = vmatpush2.bf16.msra.mxu0 %v3364
          %4553 = vmatprep.subr.bf16.mxu0 %v3357
          %4554 = vmatpush2.bf16.msra.mxu0 %v3356
          %4555 = vmatprep.subr.bf16.mxu0 %v3349
          %4556 = vmatpush2.bf16.msra.mxu0 %v3348
          %4557 = vmatprep.subr.bf16.mxu0 %v3341
          %4558 = vmatpush2.bf16.msra.mxu0 %v3340
          %4559 = vmatprep.subr.bf16.mxu0 %v3333
          %4560 = vmatpush2.bf16.msra.mxu0 %v3332
          %4561 = vmatprep.mubr.bf16.mxu0 %v1587
          %4562 = vmatmul.mubr.bf16.gmra.mxu0 %v1586
          %v4563 = vpop.f32.mrf.mxu0
          %v4564 = vadd.f32 %v4523, %v4563
          %v4565 = vpop.f32.mrf.mxu0
          %v4566 = vadd.f32 %v4525, %v4565
          %v4567 = vpop.f32.mrf.mxu0
          %v4568 = vpop.f32.mrf.mxu0
          %4569 = vdwg.mxu0
          %4570 = vmatprep.subr.bf16.mxu0 %v3453
          %4571 = vmatpush1.bf16.msra.mxu0 %v3452
          %4572 = vmatprep.subr.bf16.mxu0 %v3445
          %4573 = vmatpush1.bf16.msra.mxu0 %v3444
          %4574 = vmatprep.subr.bf16.mxu0 %v3437
          %4575 = vmatpush1.bf16.msra.mxu0 %v3436
          %4576 = vmatprep.subr.bf16.mxu0 %v3429
          %4577 = vmatpush1.bf16.msra.mxu0 %v3428
          %4578 = vmatprep.subr.bf16.mxu0 %v3421
          %4579 = vmatpush1.bf16.msra.mxu0 %v3420
          %4580 = vmatprep.subr.bf16.mxu0 %v3413
          %4581 = vmatpush1.bf16.msra.mxu0 %v3412
          %4582 = vmatprep.subr.bf16.mxu0 %v3405
          %4583 = vmatpush1.bf16.msra.mxu0 %v3404
          %4584 = vmatprep.subr.bf16.mxu0 %v3397
          %4585 = vmatpush1.bf16.msra.mxu0 %v3396
          %4586 = vmatprep.subr.bf16.mxu0 %v3517
          %4587 = vmatpush2.bf16.msra.mxu0 %v3516
          %4588 = vmatprep.subr.bf16.mxu0 %v3509
          %4589 = vmatpush2.bf16.msra.mxu0 %v3508
          %4590 = vmatprep.subr.bf16.mxu0 %v3501
          %4591 = vmatpush2.bf16.msra.mxu0 %v3500
          %4592 = vmatprep.subr.bf16.mxu0 %v3493
          %4593 = vmatpush2.bf16.msra.mxu0 %v3492
          %4594 = vmatprep.subr.bf16.mxu0 %v3485
          %4595 = vmatpush2.bf16.msra.mxu0 %v3484
          %4596 = vmatprep.subr.bf16.mxu0 %v3477
          %4597 = vmatpush2.bf16.msra.mxu0 %v3476
          %4598 = vmatprep.subr.bf16.mxu0 %v3469
          %4599 = vmatpush2.bf16.msra.mxu0 %v3468
          %4600 = vmatprep.subr.bf16.mxu0 %v3461
          %4601 = vmatpush2.bf16.msra.mxu0 %v3460
          %4602 = vmatprep.mubr.bf16.mxu0 %v1589
          %4603 = vmatmul.mubr.bf16.gmra.mxu0 %v1588
          %v4604 = vpop.f32.mrf.mxu0
          %v4605 = vadd.f32 %v4564, %v4604
          %v4606 = vpop.f32.mrf.mxu0
          %v4607 = vadd.f32 %v4566, %v4606
          %v4608 = vpop.f32.mrf.mxu0
          %v4609 = vpop.f32.mrf.mxu0
          %4610 = vdwg.mxu0
          %4611 = vmatprep.subr.bf16.mxu0 %v3581
          %4612 = vmatpush1.bf16.msra.mxu0 %v3580
          %4613 = vmatprep.subr.bf16.mxu0 %v3573
          %4614 = vmatpush1.bf16.msra.mxu0 %v3572
          %4615 = vmatprep.subr.bf16.mxu0 %v3565
          %4616 = vmatpush1.bf16.msra.mxu0 %v3564
          %4617 = vmatprep.subr.bf16.mxu0 %v3557
          %4618 = vmatpush1.bf16.msra.mxu0 %v3556
          %4619 = vmatprep.subr.bf16.mxu0 %v3549
          %4620 = vmatpush1.bf16.msra.mxu0 %v3548
          %4621 = vmatprep.subr.bf16.mxu0 %v3541
          %4622 = vmatpush1.bf16.msra.mxu0 %v3540
          %4623 = vmatprep.subr.bf16.mxu0 %v3533
          %4624 = vmatpush1.bf16.msra.mxu0 %v3532
          %4625 = vmatprep.subr.bf16.mxu0 %v3525
          %4626 = vmatpush1.bf16.msra.mxu0 %v3524
          %4627 = vmatprep.subr.bf16.mxu0 %v3645
          %4628 = vmatpush2.bf16.msra.mxu0 %v3644
          %4629 = vmatprep.subr.bf16.mxu0 %v3637
          %4630 = vmatpush2.bf16.msra.mxu0 %v3636
          %4631 = vmatprep.subr.bf16.mxu0 %v3629
          %4632 = vmatpush2.bf16.msra.mxu0 %v3628
          %4633 = vmatprep.subr.bf16.mxu0 %v3621
          %4634 = vmatpush2.bf16.msra.mxu0 %v3620
          %4635 = vmatprep.subr.bf16.mxu0 %v3613
          %4636 = vmatpush2.bf16.msra.mxu0 %v3612
          %4637 = vmatprep.subr.bf16.mxu0 %v3605
          %4638 = vmatpush2.bf16.msra.mxu0 %v3604
          %4639 = vmatprep.subr.bf16.mxu0 %v3597
          %4640 = vmatpush2.bf16.msra.mxu0 %v3596
          %4641 = vmatprep.subr.bf16.mxu0 %v3589
          %4642 = vmatpush2.bf16.msra.mxu0 %v3588
          %4643 = vmatprep.mubr.bf16.mxu0 %v1591
          %4644 = vmatmul.mubr.bf16.gmra.mxu0 %v1590
          %v4645 = vpop.f32.mrf.mxu0
          %v4646 = vadd.f32 %v4605, %v4645
          %v4647 = vpop.f32.mrf.mxu0
          %v4648 = vadd.f32 %v4607, %v4647
          %v4649 = vpop.f32.mrf.mxu0
          %v4650 = vpop.f32.mrf.mxu0
          %4651 = vdwg.mxu0
          %4652 = vmatprep.subr.bf16.mxu0 %v3199
          %4653 = vmatpush1.bf16.msra.mxu0 %v3198
          %4654 = vmatprep.subr.bf16.mxu0 %v3191
          %4655 = vmatpush1.bf16.msra.mxu0 %v3190
          %4656 = vmatprep.subr.bf16.mxu0 %v3183
          %4657 = vmatpush1.bf16.msra.mxu0 %v3182
          %4658 = vmatprep.subr.bf16.mxu0 %v3175
          %4659 = vmatpush1.bf16.msra.mxu0 %v3174
          %4660 = vmatprep.subr.bf16.mxu0 %v3167
          %4661 = vmatpush1.bf16.msra.mxu0 %v3166
          %4662 = vmatprep.subr.bf16.mxu0 %v3159
          %4663 = vmatpush1.bf16.msra.mxu0 %v3158
          %4664 = vmatprep.subr.bf16.mxu0 %v3151
          %4665 = vmatpush1.bf16.msra.mxu0 %v3150
          %4666 = vmatprep.subr.bf16.mxu0 %v3143
          %4667 = vmatpush1.bf16.msra.mxu0 %v3142
          %4668 = vmatprep.subr.bf16.mxu0 %v3263
          %4669 = vmatpush2.bf16.msra.mxu0 %v3262
          %4670 = vmatprep.subr.bf16.mxu0 %v3255
          %4671 = vmatpush2.bf16.msra.mxu0 %v3254
          %4672 = vmatprep.subr.bf16.mxu0 %v3247
          %4673 = vmatpush2.bf16.msra.mxu0 %v3246
          %4674 = vmatprep.subr.bf16.mxu0 %v3239
          %4675 = vmatpush2.bf16.msra.mxu0 %v3238
          %4676 = vmatprep.subr.bf16.mxu0 %v3231
          %4677 = vmatpush2.bf16.msra.mxu0 %v3230
          %4678 = vmatprep.subr.bf16.mxu0 %v3223
          %4679 = vmatpush2.bf16.msra.mxu0 %v3222
          %4680 = vmatprep.subr.bf16.mxu0 %v3215
          %4681 = vmatpush2.bf16.msra.mxu0 %v3214
          %4682 = vmatprep.subr.bf16.mxu0 %v3207
          %4683 = vmatpush2.bf16.msra.mxu0 %v3206
          %4684 = vmatprep.mubr.bf16.mxu0 %v1585
          %4685 = vmatmul.mubr.bf16.gmra.mxu0 %v1584
          %v4686 = vpop.f32.mrf.mxu0
          %v4687 = vadd.f32 %v1559, %v4686
          %v4688 = vpop.f32.mrf.mxu0
          %v4689 = vadd.f32 %v1563, %v4688
          %v4690 = vpop.f32.mrf.mxu0
          %v4691 = vpop.f32.mrf.mxu0
          %4692 = vdwg.mxu0
          %4693 = vmatprep.subr.bf16.mxu0 %v3327
          %4694 = vmatpush1.bf16.msra.mxu0 %v3326
          %4695 = vmatprep.subr.bf16.mxu0 %v3319
          %4696 = vmatpush1.bf16.msra.mxu0 %v3318
          %4697 = vmatprep.subr.bf16.mxu0 %v3311
          %4698 = vmatpush1.bf16.msra.mxu0 %v3310
          %4699 = vmatprep.subr.bf16.mxu0 %v3303
          %4700 = vmatpush1.bf16.msra.mxu0 %v3302
          %4701 = vmatprep.subr.bf16.mxu0 %v3295
          %4702 = vmatpush1.bf16.msra.mxu0 %v3294
          %4703 = vmatprep.subr.bf16.mxu0 %v3287
          %4704 = vmatpush1.bf16.msra.mxu0 %v3286
          %4705 = vmatprep.subr.bf16.mxu0 %v3279
          %4706 = vmatpush1.bf16.msra.mxu0 %v3278
          %4707 = vmatprep.subr.bf16.mxu0 %v3271
          %4708 = vmatpush1.bf16.msra.mxu0 %v3270
          %4709 = vmatprep.subr.bf16.mxu0 %v3391
          %4710 = vmatpush2.bf16.msra.mxu0 %v3390
          %4711 = vmatprep.subr.bf16.mxu0 %v3383
          %4712 = vmatpush2.bf16.msra.mxu0 %v3382
          %4713 = vmatprep.subr.bf16.mxu0 %v3375
          %4714 = vmatpush2.bf16.msra.mxu0 %v3374
          %4715 = vmatprep.subr.bf16.mxu0 %v3367
          %4716 = vmatpush2.bf16.msra.mxu0 %v3366
          %4717 = vmatprep.subr.bf16.mxu0 %v3359
          %4718 = vmatpush2.bf16.msra.mxu0 %v3358
          %4719 = vmatprep.subr.bf16.mxu0 %v3351
          %4720 = vmatpush2.bf16.msra.mxu0 %v3350
          %4721 = vmatprep.subr.bf16.mxu0 %v3343
          %4722 = vmatpush2.bf16.msra.mxu0 %v3342
          %4723 = vmatprep.subr.bf16.mxu0 %v3335
          %4724 = vmatpush2.bf16.msra.mxu0 %v3334
          %4725 = vmatprep.mubr.bf16.mxu0 %v1587
          %4726 = vmatmul.mubr.bf16.gmra.mxu0 %v1586
          %v4727 = vpop.f32.mrf.mxu0
          %v4728 = vadd.f32 %v4687, %v4727
          %v4729 = vpop.f32.mrf.mxu0
          %v4730 = vadd.f32 %v4689, %v4729
          %v4731 = vpop.f32.mrf.mxu0
          %v4732 = vpop.f32.mrf.mxu0
          %4733 = vdwg.mxu0
          %4734 = vmatprep.subr.bf16.mxu0 %v3455
          %4735 = vmatpush1.bf16.msra.mxu0 %v3454
          %4736 = vmatprep.subr.bf16.mxu0 %v3447
          %4737 = vmatpush1.bf16.msra.mxu0 %v3446
          %4738 = vmatprep.subr.bf16.mxu0 %v3439
          %4739 = vmatpush1.bf16.msra.mxu0 %v3438
          %4740 = vmatprep.subr.bf16.mxu0 %v3431
          %4741 = vmatpush1.bf16.msra.mxu0 %v3430
          %4742 = vmatprep.subr.bf16.mxu0 %v3423
          %4743 = vmatpush1.bf16.msra.mxu0 %v3422
          %4744 = vmatprep.subr.bf16.mxu0 %v3415
          %4745 = vmatpush1.bf16.msra.mxu0 %v3414
          %4746 = vmatprep.subr.bf16.mxu0 %v3407
          %4747 = vmatpush1.bf16.msra.mxu0 %v3406
          %4748 = vmatprep.subr.bf16.mxu0 %v3399
          %4749 = vmatpush1.bf16.msra.mxu0 %v3398
          %4750 = vmatprep.subr.bf16.mxu0 %v3519
          %4751 = vmatpush2.bf16.msra.mxu0 %v3518
          %4752 = vmatprep.subr.bf16.mxu0 %v3511
          %4753 = vmatpush2.bf16.msra.mxu0 %v3510
          %4754 = vmatprep.subr.bf16.mxu0 %v3503
          %4755 = vmatpush2.bf16.msra.mxu0 %v3502
          %4756 = vmatprep.subr.bf16.mxu0 %v3495
          %4757 = vmatpush2.bf16.msra.mxu0 %v3494
          %4758 = vmatprep.subr.bf16.mxu0 %v3487
          %4759 = vmatpush2.bf16.msra.mxu0 %v3486
          %4760 = vmatprep.subr.bf16.mxu0 %v3479
          %4761 = vmatpush2.bf16.msra.mxu0 %v3478
          %4762 = vmatprep.subr.bf16.mxu0 %v3471
          %4763 = vmatpush2.bf16.msra.mxu0 %v3470
          %4764 = vmatprep.subr.bf16.mxu0 %v3463
          %4765 = vmatpush2.bf16.msra.mxu0 %v3462
          %4766 = vmatprep.mubr.bf16.mxu0 %v1589
          %4767 = vmatmul.mubr.bf16.gmra.mxu0 %v1588
          %v4768 = vpop.f32.mrf.mxu0
          %v4769 = vadd.f32 %v4728, %v4768
          %v4770 = vpop.f32.mrf.mxu0
          %v4771 = vadd.f32 %v4730, %v4770
          %v4772 = vpop.f32.mrf.mxu0
          %v4773 = vpop.f32.mrf.mxu0
          %4774 = vdwg.mxu0
          %4775 = vmatprep.subr.bf16.mxu0 %v3583
          %4776 = vmatpush1.bf16.msra.mxu0 %v3582
          %4777 = vmatprep.subr.bf16.mxu0 %v3575
          %4778 = vmatpush1.bf16.msra.mxu0 %v3574
          %4779 = vmatprep.subr.bf16.mxu0 %v3567
          %4780 = vmatpush1.bf16.msra.mxu0 %v3566
          %4781 = vmatprep.subr.bf16.mxu0 %v3559
          %4782 = vmatpush1.bf16.msra.mxu0 %v3558
          %4783 = vmatprep.subr.bf16.mxu0 %v3551
          %4784 = vmatpush1.bf16.msra.mxu0 %v3550
          %4785 = vmatprep.subr.bf16.mxu0 %v3543
          %4786 = vmatpush1.bf16.msra.mxu0 %v3542
          %4787 = vmatprep.subr.bf16.mxu0 %v3535
          %4788 = vmatpush1.bf16.msra.mxu0 %v3534
          %4789 = vmatprep.subr.bf16.mxu0 %v3527
          %4790 = vmatpush1.bf16.msra.mxu0 %v3526
          %4791 = vmatprep.subr.bf16.mxu0 %v3647
          %4792 = vmatpush2.bf16.msra.mxu0 %v3646
          %4793 = vmatprep.subr.bf16.mxu0 %v3639
          %4794 = vmatpush2.bf16.msra.mxu0 %v3638
          %4795 = vmatprep.subr.bf16.mxu0 %v3631
          %4796 = vmatpush2.bf16.msra.mxu0 %v3630
          %4797 = vmatprep.subr.bf16.mxu0 %v3623
          %4798 = vmatpush2.bf16.msra.mxu0 %v3622
          %4799 = vmatprep.subr.bf16.mxu0 %v3615
          %4800 = vmatpush2.bf16.msra.mxu0 %v3614
          %4801 = vmatprep.subr.bf16.mxu0 %v3607
          %4802 = vmatpush2.bf16.msra.mxu0 %v3606
          %4803 = vmatprep.subr.bf16.mxu0 %v3599
          %4804 = vmatpush2.bf16.msra.mxu0 %v3598
          %4805 = vmatprep.subr.bf16.mxu0 %v3591
          %4806 = vmatpush2.bf16.msra.mxu0 %v3590
          %4807 = vmatprep.mubr.bf16.mxu0 %v1591
          %4808 = vmatmul.mubr.bf16.gmra.mxu0 %v1590
          %v4809 = vpop.f32.mrf.mxu0
          %v4810 = vadd.f32 %v4769, %v4809
          %v4811 = vpop.f32.mrf.mxu0
          %v4812 = vadd.f32 %v4771, %v4811
          %v4813 = vpop.f32.mrf.mxu0
          %v4814 = vpop.f32.mrf.mxu0
          %4815 = vdwg.mxu0
          %vm4816 = vcmp.ge.f32.partialorder %v4318, 0.0
          %vm4817 = vcmp.ge.f32.partialorder %v4320, 0.0
          %vm4818 = vcmp.ge.f32.partialorder %v4482, 0.0
          %vm4819 = vcmp.ge.f32.partialorder %v4484, 0.0
          %vm4820 = vcmp.ge.f32.partialorder %v4646, 0.0
          %vm4821 = vcmp.ge.f32.partialorder %v4648, 0.0
          %vm4822 = vcmp.ge.f32.partialorder %v4810, 0.0
          %vm4823 = vcmp.ge.f32.partialorder %v4812, 0.0
          %v4824 = vmul.f32 %v4318, 0.2
          %v4825 = vmul.f32 %v4320, 0.2
          %v4826 = vmul.f32 %v4482, 0.2
          %v4827 = vmul.f32 %v4484, 0.2
          %v4828 = vmul.f32 %v4646, 0.2
          %v4829 = vmul.f32 %v4648, 0.2
          %v4830 = vmul.f32 %v4810, 0.2
          %v4831 = vmul.f32 %v4812, 0.2
          %v4832 = vsel %vm4816, %v4318, %v4824
          %v4833 = vsel %vm4817, %v4320, %v4825
          %v4834 = vsel %vm4818, %v4482, %v4826
          %v4835 = vsel %vm4819, %v4484, %v4827
          %v4836 = vsel %vm4820, %v4646, %v4828
          %v4837 = vsel %vm4821, %v4648, %v4829
          %v4838 = vsel %vm4822, %v4810, %v4830
          %v4839 = vsel %vm4823, %v4812, %v4831
          %v4840 = vpack.c.bf16 %v4832, %v4832
          %v4841 = vpack.c.bf16 %v4833, %v4833
          %v4842 = vpack.c.bf16 %v4834, %v4834
          %v4843 = vpack.c.bf16 %v4835, %v4835
          %v4844 = vpack.c.bf16 %v4836, %v4836
          %v4845 = vpack.c.bf16 %v4837, %v4837
          %v4846 = vpack.c.bf16 %v4838, %v4838
          %v4847 = vpack.c.bf16 %v4839, %v4839
          %v4856 = vunpack.c.l.b16 %v4840
          %v4857 = vunpack.c.l.b16 %v4841
          %v4858 = vunpack.c.l.b16 %v4842
          %v4859 = vunpack.c.l.b16 %v4843
          %v4860 = vunpack.c.l.b16 %v4844
          %v4861 = vunpack.c.l.b16 %v4845
          %v4862 = vunpack.c.l.b16 %v4846
          %v4863 = vunpack.c.l.b16 %v4847
          %v4864 = vpack.c.b16 %v4857, %v4856
          %v4865 = vpack.c.b16 %v4859, %v4858
          %v4866 = vpack.c.b16 %v4861, %v4860
          %v4867 = vpack.c.b16 %v4863, %v4862
          %4872 = vst [vmem:[#allocation2] sm:$0xff] %v4864
          %4873 = vst [vmem:[#allocation2 + $0x8] sm:$0xff] %v4865
          %4874 = vst [vmem:[#allocation2 + $0x10] sm:$0xff] %v4866
          %4875 = vst [vmem:[#allocation2 + $0x18] sm:$0xff] %v4867
        $region68: #{tpu_custom_call.1} parent=39 // pred_fallthru
          _
        %p4876 = scmp.eq.s32.totalorder %s27, 5
        // Predicated region
        $region69: #{tpu_custom_call.1} parent=39 // pred_check
          %p4877 = pneg %p4876
        $region70: #{tpu_custom_call.1} parent=39 // pred_check_branch
          %4879 = sbr.rel (%p4877) target = $region72
        $region71: #{tpu_custom_call.1} parent=39 // pred_region
          %v4880 = vld [vmem:[#allocation2] sm:$0xff]
          %v4881 = vld [vmem:[#allocation2 + $0x8] sm:$0xff]
          %v4882 = vld [vmem:[#allocation2 + $0x10] sm:$0xff]
          %v4883 = vld [vmem:[#allocation2 + $0x18] sm:$0xff]
          %v4884 = vld [vmem:[#allocation9] sm:$0xf]
          %v4885 = vld [vmem:[#allocation9 + $0x4] sm:$0xf]
          %v4886 = vld [vmem:[#allocation9 + $0x8] sm:$0xf]
          %v4887 = vld [vmem:[#allocation9 + $0xc] sm:$0xf]
          %v4888 = vld [vmem:[#allocation9 + $0x10] sm:$0xf]
          %v4889 = vld [vmem:[#allocation9 + $0x14] sm:$0xf]
          %v4890 = vld [vmem:[#allocation9 + $0x18] sm:$0xf]
          %v4891 = vld [vmem:[#allocation9 + $0x1c] sm:$0xf]
          %v4892 = vld [vmem:[#allocation9 + $0x20] sm:$0xf]
          %v4893 = vld [vmem:[#allocation9 + $0x24] sm:$0xf]
          %v4894 = vld [vmem:[#allocation9 + $0x28] sm:$0xf]
          %v4895 = vld [vmem:[#allocation9 + $0x2c] sm:$0xf]
          %v4896 = vld [vmem:[#allocation9 + $0x30] sm:$0xf]
          %v4897 = vld [vmem:[#allocation9 + $0x34] sm:$0xf]
          %v4898 = vld [vmem:[#allocation9 + $0x38] sm:$0xf]
          %v4899 = vld [vmem:[#allocation9 + $0x3c] sm:$0xf]
          %v4900 = vld [vmem:[#allocation9 + $0x40] sm:$0xf]
          %v4901 = vld [vmem:[#allocation9 + $0x44] sm:$0xf]
          %v4902 = vld [vmem:[#allocation9 + $0x48] sm:$0xf]
          %v4903 = vld [vmem:[#allocation9 + $0x4c] sm:$0xf]
          %v4904 = vld [vmem:[#allocation9 + $0x50] sm:$0xf]
          %v4905 = vld [vmem:[#allocation9 + $0x54] sm:$0xf]
          %v4906 = vld [vmem:[#allocation9 + $0x58] sm:$0xf]
          %v4907 = vld [vmem:[#allocation9 + $0x5c] sm:$0xf]
          %v4908 = vld [vmem:[#allocation9 + $0x60] sm:$0xf]
          %v4909 = vld [vmem:[#allocation9 + $0x64] sm:$0xf]
          %v4910 = vld [vmem:[#allocation9 + $0x68] sm:$0xf]
          %v4911 = vld [vmem:[#allocation9 + $0x6c] sm:$0xf]
          %v4912 = vld [vmem:[#allocation9 + $0x70] sm:$0xf]
          %v4913 = vld [vmem:[#allocation9 + $0x74] sm:$0xf]
          %v4914 = vld [vmem:[#allocation9 + $0x78] sm:$0xf]
          %v4915 = vld [vmem:[#allocation9 + $0x7c] sm:$0xf]
          %v4916 = vld [vmem:[#allocation9 + $0x80] sm:$0xf]
          %v4917 = vld [vmem:[#allocation9 + $0x84] sm:$0xf]
          %v4918 = vld [vmem:[#allocation9 + $0x88] sm:$0xf]
          %v4919 = vld [vmem:[#allocation9 + $0x8c] sm:$0xf]
          %v4920 = vld [vmem:[#allocation9 + $0x90] sm:$0xf]
          %v4921 = vld [vmem:[#allocation9 + $0x94] sm:$0xf]
          %v4922 = vld [vmem:[#allocation9 + $0x98] sm:$0xf]
          %v4923 = vld [vmem:[#allocation9 + $0x9c] sm:$0xf]
          %v4924 = vld [vmem:[#allocation9 + $0xa0] sm:$0xf]
          %v4925 = vld [vmem:[#allocation9 + $0xa4] sm:$0xf]
          %v4926 = vld [vmem:[#allocation9 + $0xa8] sm:$0xf]
          %v4927 = vld [vmem:[#allocation9 + $0xac] sm:$0xf]
          %v4928 = vld [vmem:[#allocation9 + $0xb0] sm:$0xf]
          %v4929 = vld [vmem:[#allocation9 + $0xb4] sm:$0xf]
          %v4930 = vld [vmem:[#allocation9 + $0xb8] sm:$0xf]
          %v4931 = vld [vmem:[#allocation9 + $0xbc] sm:$0xf]
          %v4932 = vld [vmem:[#allocation9 + $0xc0] sm:$0xf]
          %v4933 = vld [vmem:[#allocation9 + $0xc4] sm:$0xf]
          %v4934 = vld [vmem:[#allocation9 + $0xc8] sm:$0xf]
          %v4935 = vld [vmem:[#allocation9 + $0xcc] sm:$0xf]
          %v4936 = vld [vmem:[#allocation9 + $0xd0] sm:$0xf]
          %v4937 = vld [vmem:[#allocation9 + $0xd4] sm:$0xf]
          %v4938 = vld [vmem:[#allocation9 + $0xd8] sm:$0xf]
          %v4939 = vld [vmem:[#allocation9 + $0xdc] sm:$0xf]
          %v4940 = vld [vmem:[#allocation9 + $0xe0] sm:$0xf]
          %v4941 = vld [vmem:[#allocation9 + $0xe4] sm:$0xf]
          %v4942 = vld [vmem:[#allocation9 + $0xe8] sm:$0xf]
          %v4943 = vld [vmem:[#allocation9 + $0xec] sm:$0xf]
          %v4944 = vld [vmem:[#allocation9 + $0xf0] sm:$0xf]
          %v4945 = vld [vmem:[#allocation9 + $0xf4] sm:$0xf]
          %v4946 = vld [vmem:[#allocation9 + $0xf8] sm:$0xf]
          %v4947 = vld [vmem:[#allocation9 + $0xfc] sm:$0xf]
          %v4948 = vld [vmem:[#allocation9 + $0x100] sm:$0xf]
          %v4949 = vld [vmem:[#allocation9 + $0x104] sm:$0xf]
          %v4950 = vld [vmem:[#allocation9 + $0x108] sm:$0xf]
          %v4951 = vld [vmem:[#allocation9 + $0x10c] sm:$0xf]
          %v4952 = vld [vmem:[#allocation9 + $0x110] sm:$0xf]
          %v4953 = vld [vmem:[#allocation9 + $0x114] sm:$0xf]
          %v4954 = vld [vmem:[#allocation9 + $0x118] sm:$0xf]
          %v4955 = vld [vmem:[#allocation9 + $0x11c] sm:$0xf]
          %v4956 = vld [vmem:[#allocation9 + $0x120] sm:$0xf]
          %v4957 = vld [vmem:[#allocation9 + $0x124] sm:$0xf]
          %v4958 = vld [vmem:[#allocation9 + $0x128] sm:$0xf]
          %v4959 = vld [vmem:[#allocation9 + $0x12c] sm:$0xf]
          %v4960 = vld [vmem:[#allocation9 + $0x130] sm:$0xf]
          %v4961 = vld [vmem:[#allocation9 + $0x134] sm:$0xf]
          %v4962 = vld [vmem:[#allocation9 + $0x138] sm:$0xf]
          %v4963 = vld [vmem:[#allocation9 + $0x13c] sm:$0xf]
          %v4964 = vld [vmem:[#allocation9 + $0x140] sm:$0xf]
          %v4965 = vld [vmem:[#allocation9 + $0x144] sm:$0xf]
          %v4966 = vld [vmem:[#allocation9 + $0x148] sm:$0xf]
          %v4967 = vld [vmem:[#allocation9 + $0x14c] sm:$0xf]
          %v4968 = vld [vmem:[#allocation9 + $0x150] sm:$0xf]
          %v4969 = vld [vmem:[#allocation9 + $0x154] sm:$0xf]
          %v4970 = vld [vmem:[#allocation9 + $0x158] sm:$0xf]
          %v4971 = vld [vmem:[#allocation9 + $0x15c] sm:$0xf]
          %v4972 = vld [vmem:[#allocation9 + $0x160] sm:$0xf]
          %v4973 = vld [vmem:[#allocation9 + $0x164] sm:$0xf]
          %v4974 = vld [vmem:[#allocation9 + $0x168] sm:$0xf]
          %v4975 = vld [vmem:[#allocation9 + $0x16c] sm:$0xf]
          %v4976 = vld [vmem:[#allocation9 + $0x170] sm:$0xf]
          %v4977 = vld [vmem:[#allocation9 + $0x174] sm:$0xf]
          %v4978 = vld [vmem:[#allocation9 + $0x178] sm:$0xf]
          %v4979 = vld [vmem:[#allocation9 + $0x17c] sm:$0xf]
          %v4980 = vld [vmem:[#allocation9 + $0x180] sm:$0xf]
          %v4981 = vld [vmem:[#allocation9 + $0x184] sm:$0xf]
          %v4982 = vld [vmem:[#allocation9 + $0x188] sm:$0xf]
          %v4983 = vld [vmem:[#allocation9 + $0x18c] sm:$0xf]
          %v4984 = vld [vmem:[#allocation9 + $0x190] sm:$0xf]
          %v4985 = vld [vmem:[#allocation9 + $0x194] sm:$0xf]
          %v4986 = vld [vmem:[#allocation9 + $0x198] sm:$0xf]
          %v4987 = vld [vmem:[#allocation9 + $0x19c] sm:$0xf]
          %v4988 = vld [vmem:[#allocation9 + $0x1a0] sm:$0xf]
          %v4989 = vld [vmem:[#allocation9 + $0x1a4] sm:$0xf]
          %v4990 = vld [vmem:[#allocation9 + $0x1a8] sm:$0xf]
          %v4991 = vld [vmem:[#allocation9 + $0x1ac] sm:$0xf]
          %v4992 = vld [vmem:[#allocation9 + $0x1b0] sm:$0xf]
          %v4993 = vld [vmem:[#allocation9 + $0x1b4] sm:$0xf]
          %v4994 = vld [vmem:[#allocation9 + $0x1b8] sm:$0xf]
          %v4995 = vld [vmem:[#allocation9 + $0x1bc] sm:$0xf]
          %v4996 = vld [vmem:[#allocation9 + $0x1c0] sm:$0xf]
          %v4997 = vld [vmem:[#allocation9 + $0x1c4] sm:$0xf]
          %v4998 = vld [vmem:[#allocation9 + $0x1c8] sm:$0xf]
          %v4999 = vld [vmem:[#allocation9 + $0x1cc] sm:$0xf]
          %v5000 = vld [vmem:[#allocation9 + $0x1d0] sm:$0xf]
          %v5001 = vld [vmem:[#allocation9 + $0x1d4] sm:$0xf]
          %v5002 = vld [vmem:[#allocation9 + $0x1d8] sm:$0xf]
          %v5003 = vld [vmem:[#allocation9 + $0x1dc] sm:$0xf]
          %v5004 = vld [vmem:[#allocation9 + $0x1e0] sm:$0xf]
          %v5005 = vld [vmem:[#allocation9 + $0x1e4] sm:$0xf]
          %v5006 = vld [vmem:[#allocation9 + $0x1e8] sm:$0xf]
          %v5007 = vld [vmem:[#allocation9 + $0x1ec] sm:$0xf]
          %v5008 = vld [vmem:[#allocation9 + $0x1f0] sm:$0xf]
          %v5009 = vld [vmem:[#allocation9 + $0x1f4] sm:$0xf]
          %v5010 = vld [vmem:[#allocation9 + $0x1f8] sm:$0xf]
          %v5011 = vld [vmem:[#allocation9 + $0x1fc] sm:$0xf]
          %v5013 = vlaneseq
          %v5014 = vshrl.u32 %v5013, 7
          %v5015 = vsub.s32 0, %v5014
          %v5016 = vrot.slane %v353, %v5015
          %v5022 = vunpack.c.l.b16 %v4880
          %v5023 = vunpack.c.h.b16 %v4880
          %v5024 = vunpack.c.l.b16 %v4881
          %v5025 = vunpack.c.h.b16 %v4881
          %v5026 = vunpack.c.l.b16 %v4882
          %v5027 = vunpack.c.h.b16 %v4882
          %v5028 = vunpack.c.l.b16 %v4883
          %v5029 = vunpack.c.h.b16 %v4883
          %v5030 = vpack.c.b16 %v5022, %v5022
          %v5031 = vpack.c.b16 %v5023, %v5023
          %v5032 = vpack.c.b16 %v5024, %v5024
          %v5033 = vpack.c.b16 %v5025, %v5025
          %v5034 = vpack.c.b16 %v5026, %v5026
          %v5035 = vpack.c.b16 %v5027, %v5027
          %v5036 = vpack.c.b16 %v5028, %v5028
          %v5037 = vpack.c.b16 %v5029, %v5029
          %v5174 = vunpack.c.l.b16 %v4884
          %v5175 = vunpack.c.l.b16 %v4885
          %v5176 = vunpack.c.l.b16 %v4886
          %v5177 = vunpack.c.l.b16 %v4887
          %v5178 = vunpack.c.l.b16 %v4888
          %v5179 = vunpack.c.l.b16 %v4889
          %v5180 = vunpack.c.l.b16 %v4890
          %v5181 = vunpack.c.l.b16 %v4891
          %v5182 = vunpack.c.l.b16 %v4892
          %v5183 = vunpack.c.l.b16 %v4893
          %v5184 = vunpack.c.l.b16 %v4894
          %v5185 = vunpack.c.l.b16 %v4895
          %v5186 = vunpack.c.l.b16 %v4896
          %v5187 = vunpack.c.l.b16 %v4897
          %v5188 = vunpack.c.l.b16 %v4898
          %v5189 = vunpack.c.l.b16 %v4899
          %v5190 = vunpack.c.l.b16 %v4900
          %v5191 = vunpack.c.l.b16 %v4901
          %v5192 = vunpack.c.l.b16 %v4902
          %v5193 = vunpack.c.l.b16 %v4903
          %v5194 = vunpack.c.l.b16 %v4904
          %v5195 = vunpack.c.l.b16 %v4905
          %v5196 = vunpack.c.l.b16 %v4906
          %v5197 = vunpack.c.l.b16 %v4907
          %v5198 = vunpack.c.l.b16 %v4908
          %v5199 = vunpack.c.l.b16 %v4909
          %v5200 = vunpack.c.l.b16 %v4910
          %v5201 = vunpack.c.l.b16 %v4911
          %v5202 = vunpack.c.l.b16 %v4912
          %v5203 = vunpack.c.l.b16 %v4913
          %v5204 = vunpack.c.l.b16 %v4914
          %v5205 = vunpack.c.l.b16 %v4915
          %v5206 = vunpack.c.l.b16 %v4916
          %v5207 = vunpack.c.l.b16 %v4917
          %v5208 = vunpack.c.l.b16 %v4918
          %v5209 = vunpack.c.l.b16 %v4919
          %v5210 = vunpack.c.l.b16 %v4920
          %v5211 = vunpack.c.l.b16 %v4921
          %v5212 = vunpack.c.l.b16 %v4922
          %v5213 = vunpack.c.l.b16 %v4923
          %v5214 = vunpack.c.l.b16 %v4924
          %v5215 = vunpack.c.l.b16 %v4925
          %v5216 = vunpack.c.l.b16 %v4926
          %v5217 = vunpack.c.l.b16 %v4927
          %v5218 = vunpack.c.l.b16 %v4928
          %v5219 = vunpack.c.l.b16 %v4929
          %v5220 = vunpack.c.l.b16 %v4930
          %v5221 = vunpack.c.l.b16 %v4931
          %v5222 = vunpack.c.l.b16 %v4932
          %v5223 = vunpack.c.l.b16 %v4933
          %v5224 = vunpack.c.l.b16 %v4934
          %v5225 = vunpack.c.l.b16 %v4935
          %v5226 = vunpack.c.l.b16 %v4936
          %v5227 = vunpack.c.l.b16 %v4937
          %v5228 = vunpack.c.l.b16 %v4938
          %v5229 = vunpack.c.l.b16 %v4939
          %v5230 = vunpack.c.l.b16 %v4940
          %v5231 = vunpack.c.l.b16 %v4941
          %v5232 = vunpack.c.l.b16 %v4942
          %v5233 = vunpack.c.l.b16 %v4943
          %v5234 = vunpack.c.l.b16 %v4944
          %v5235 = vunpack.c.l.b16 %v4945
          %v5236 = vunpack.c.l.b16 %v4946
          %v5237 = vunpack.c.l.b16 %v4947
          %v5238 = vunpack.c.l.b16 %v4948
          %v5239 = vunpack.c.l.b16 %v4949
          %v5240 = vunpack.c.l.b16 %v4950
          %v5241 = vunpack.c.l.b16 %v4951
          %v5242 = vunpack.c.l.b16 %v4952
          %v5243 = vunpack.c.l.b16 %v4953
          %v5244 = vunpack.c.l.b16 %v4954
          %v5245 = vunpack.c.l.b16 %v4955
          %v5246 = vunpack.c.l.b16 %v4956
          %v5247 = vunpack.c.l.b16 %v4957
          %v5248 = vunpack.c.l.b16 %v4958
          %v5249 = vunpack.c.l.b16 %v4959
          %v5250 = vunpack.c.l.b16 %v4960
          %v5251 = vunpack.c.l.b16 %v4961
          %v5252 = vunpack.c.l.b16 %v4962
          %v5253 = vunpack.c.l.b16 %v4963
          %v5254 = vunpack.c.l.b16 %v4964
          %v5255 = vunpack.c.l.b16 %v4965
          %v5256 = vunpack.c.l.b16 %v4966
          %v5257 = vunpack.c.l.b16 %v4967
          %v5258 = vunpack.c.l.b16 %v4968
          %v5259 = vunpack.c.l.b16 %v4969
          %v5260 = vunpack.c.l.b16 %v4970
          %v5261 = vunpack.c.l.b16 %v4971
          %v5262 = vunpack.c.l.b16 %v4972
          %v5263 = vunpack.c.l.b16 %v4973
          %v5264 = vunpack.c.l.b16 %v4974
          %v5265 = vunpack.c.l.b16 %v4975
          %v5266 = vunpack.c.l.b16 %v4976
          %v5267 = vunpack.c.l.b16 %v4977
          %v5268 = vunpack.c.l.b16 %v4978
          %v5269 = vunpack.c.l.b16 %v4979
          %v5270 = vunpack.c.l.b16 %v4980
          %v5271 = vunpack.c.l.b16 %v4981
          %v5272 = vunpack.c.l.b16 %v4982
          %v5273 = vunpack.c.l.b16 %v4983
          %v5274 = vunpack.c.l.b16 %v4984
          %v5275 = vunpack.c.l.b16 %v4985
          %v5276 = vunpack.c.l.b16 %v4986
          %v5277 = vunpack.c.l.b16 %v4987
          %v5278 = vunpack.c.l.b16 %v4988
          %v5279 = vunpack.c.l.b16 %v4989
          %v5280 = vunpack.c.l.b16 %v4990
          %v5281 = vunpack.c.l.b16 %v4991
          %v5282 = vunpack.c.l.b16 %v4992
          %v5283 = vunpack.c.l.b16 %v4993
          %v5284 = vunpack.c.l.b16 %v4994
          %v5285 = vunpack.c.l.b16 %v4995
          %v5286 = vunpack.c.l.b16 %v4996
          %v5287 = vunpack.c.l.b16 %v4997
          %v5288 = vunpack.c.l.b16 %v4998
          %v5289 = vunpack.c.l.b16 %v4999
          %v5290 = vunpack.c.l.b16 %v5000
          %v5291 = vunpack.c.l.b16 %v5001
          %v5292 = vunpack.c.l.b16 %v5002
          %v5293 = vunpack.c.l.b16 %v5003
          %v5294 = vunpack.c.l.b16 %v5004
          %v5295 = vunpack.c.l.b16 %v5005
          %v5296 = vunpack.c.l.b16 %v5006
          %v5297 = vunpack.c.l.b16 %v5007
          %v5298 = vunpack.c.l.b16 %v5008
          %v5299 = vunpack.c.l.b16 %v5009
          %v5300 = vunpack.c.l.b16 %v5010
          %v5301 = vunpack.c.l.b16 %v5011
          %v5302 = vpack.c.b16 %v5175, %v5174
          %v5303 = vpack.c.b16 %v5177, %v5176
          %v5304 = vpack.c.b16 %v5179, %v5178
          %v5305 = vpack.c.b16 %v5181, %v5180
          %v5306 = vpack.c.b16 %v5183, %v5182
          %v5307 = vpack.c.b16 %v5185, %v5184
          %v5308 = vpack.c.b16 %v5187, %v5186
          %v5309 = vpack.c.b16 %v5189, %v5188
          %v5310 = vpack.c.b16 %v5191, %v5190
          %v5311 = vpack.c.b16 %v5193, %v5192
          %v5312 = vpack.c.b16 %v5195, %v5194
          %v5313 = vpack.c.b16 %v5197, %v5196
          %v5314 = vpack.c.b16 %v5199, %v5198
          %v5315 = vpack.c.b16 %v5201, %v5200
          %v5316 = vpack.c.b16 %v5203, %v5202
          %v5317 = vpack.c.b16 %v5205, %v5204
          %v5318 = vpack.c.b16 %v5207, %v5206
          %v5319 = vpack.c.b16 %v5209, %v5208
          %v5320 = vpack.c.b16 %v5211, %v5210
          %v5321 = vpack.c.b16 %v5213, %v5212
          %v5322 = vpack.c.b16 %v5215, %v5214
          %v5323 = vpack.c.b16 %v5217, %v5216
          %v5324 = vpack.c.b16 %v5219, %v5218
          %v5325 = vpack.c.b16 %v5221, %v5220
          %v5326 = vpack.c.b16 %v5223, %v5222
          %v5327 = vpack.c.b16 %v5225, %v5224
          %v5328 = vpack.c.b16 %v5227, %v5226
          %v5329 = vpack.c.b16 %v5229, %v5228
          %v5330 = vpack.c.b16 %v5231, %v5230
          %v5331 = vpack.c.b16 %v5233, %v5232
          %v5332 = vpack.c.b16 %v5235, %v5234
          %v5333 = vpack.c.b16 %v5237, %v5236
          %v5334 = vpack.c.b16 %v5239, %v5238
          %v5335 = vpack.c.b16 %v5241, %v5240
          %v5336 = vpack.c.b16 %v5243, %v5242
          %v5337 = vpack.c.b16 %v5245, %v5244
          %v5338 = vpack.c.b16 %v5247, %v5246
          %v5339 = vpack.c.b16 %v5249, %v5248
          %v5340 = vpack.c.b16 %v5251, %v5250
          %v5341 = vpack.c.b16 %v5253, %v5252
          %v5342 = vpack.c.b16 %v5255, %v5254
          %v5343 = vpack.c.b16 %v5257, %v5256
          %v5344 = vpack.c.b16 %v5259, %v5258
          %v5345 = vpack.c.b16 %v5261, %v5260
          %v5346 = vpack.c.b16 %v5263, %v5262
          %v5347 = vpack.c.b16 %v5265, %v5264
          %v5348 = vpack.c.b16 %v5267, %v5266
          %v5349 = vpack.c.b16 %v5269, %v5268
          %v5350 = vpack.c.b16 %v5271, %v5270
          %v5351 = vpack.c.b16 %v5273, %v5272
          %v5352 = vpack.c.b16 %v5275, %v5274
          %v5353 = vpack.c.b16 %v5277, %v5276
          %v5354 = vpack.c.b16 %v5279, %v5278
          %v5355 = vpack.c.b16 %v5281, %v5280
          %v5356 = vpack.c.b16 %v5283, %v5282
          %v5357 = vpack.c.b16 %v5285, %v5284
          %v5358 = vpack.c.b16 %v5287, %v5286
          %v5359 = vpack.c.b16 %v5289, %v5288
          %v5360 = vpack.c.b16 %v5291, %v5290
          %v5361 = vpack.c.b16 %v5293, %v5292
          %v5362 = vpack.c.b16 %v5295, %v5294
          %v5363 = vpack.c.b16 %v5297, %v5296
          %v5364 = vpack.c.b16 %v5299, %v5298
          %v5365 = vpack.c.b16 %v5301, %v5300
          %5430 = vmatprep.subr.bf16.mxu0 0
          %5431 = vmatpush1.bf16.msra.mxu0 %v5309
          %5432 = vmatprep.subr.bf16.mxu0 0
          %5433 = vmatpush1.bf16.msra.mxu0 %v5308
          %5434 = vmatprep.subr.bf16.mxu0 0
          %5435 = vmatpush1.bf16.msra.mxu0 %v5307
          %5436 = vmatprep.subr.bf16.mxu0 0
          %5437 = vmatpush1.bf16.msra.mxu0 %v5306
          %5438 = vmatprep.subr.bf16.mxu0 0
          %5439 = vmatpush1.bf16.msra.mxu0 %v5305
          %5440 = vmatprep.subr.bf16.mxu0 0
          %5441 = vmatpush1.bf16.msra.mxu0 %v5304
          %5442 = vmatprep.subr.bf16.mxu0 0
          %5443 = vmatpush1.bf16.msra.mxu0 %v5303
          %5444 = vmatprep.subr.bf16.mxu0 0
          %5445 = vmatpush1.bf16.msra.mxu0 %v5302
          %5446 = vmatprep.subr.bf16.mxu0 0
          %5447 = vmatpush2.bf16.msra.mxu0 %v5317
          %5448 = vmatprep.subr.bf16.mxu0 0
          %5449 = vmatpush2.bf16.msra.mxu0 %v5316
          %5450 = vmatprep.subr.bf16.mxu0 0
          %5451 = vmatpush2.bf16.msra.mxu0 %v5315
          %5452 = vmatprep.subr.bf16.mxu0 0
          %5453 = vmatpush2.bf16.msra.mxu0 %v5314
          %5454 = vmatprep.subr.bf16.mxu0 0
          %5455 = vmatpush2.bf16.msra.mxu0 %v5313
          %5456 = vmatprep.subr.bf16.mxu0 0
          %5457 = vmatpush2.bf16.msra.mxu0 %v5312
          %5458 = vmatprep.subr.bf16.mxu0 0
          %5459 = vmatpush2.bf16.msra.mxu0 %v5311
          %5460 = vmatprep.subr.bf16.mxu0 0
          %5461 = vmatpush2.bf16.msra.mxu0 %v5310
          %5462 = vmatprep.mubr.bf16.mxu0 %v5031
          %5463 = vmatmul.mubr.bf16.gmra.mxu0 %v5030
          %v5464 = vpop.f32.mrf.mxu0
          %v5465 = vadd.f32 %v5016, %v5464
          %v5466 = vpop.f32.mrf.mxu0
          %v5467 = vpop.f32.mrf.mxu0
          %v5468 = vpop.f32.mrf.mxu0
          %5469 = vdwg.mxu0
          %5470 = vmatprep.subr.bf16.mxu0 0
          %5471 = vmatpush1.bf16.msra.mxu0 %v5325
          %5472 = vmatprep.subr.bf16.mxu0 0
          %5473 = vmatpush1.bf16.msra.mxu0 %v5324
          %5474 = vmatprep.subr.bf16.mxu0 0
          %5475 = vmatpush1.bf16.msra.mxu0 %v5323
          %5476 = vmatprep.subr.bf16.mxu0 0
          %5477 = vmatpush1.bf16.msra.mxu0 %v5322
          %5478 = vmatprep.subr.bf16.mxu0 0
          %5479 = vmatpush1.bf16.msra.mxu0 %v5321
          %5480 = vmatprep.subr.bf16.mxu0 0
          %5481 = vmatpush1.bf16.msra.mxu0 %v5320
          %5482 = vmatprep.subr.bf16.mxu0 0
          %5483 = vmatpush1.bf16.msra.mxu0 %v5319
          %5484 = vmatprep.subr.bf16.mxu0 0
          %5485 = vmatpush1.bf16.msra.mxu0 %v5318
          %5486 = vmatprep.subr.bf16.mxu0 0
          %5487 = vmatpush2.bf16.msra.mxu0 %v5333
          %5488 = vmatprep.subr.bf16.mxu0 0
          %5489 = vmatpush2.bf16.msra.mxu0 %v5332
          %5490 = vmatprep.subr.bf16.mxu0 0
          %5491 = vmatpush2.bf16.msra.mxu0 %v5331
          %5492 = vmatprep.subr.bf16.mxu0 0
          %5493 = vmatpush2.bf16.msra.mxu0 %v5330
          %5494 = vmatprep.subr.bf16.mxu0 0
          %5495 = vmatpush2.bf16.msra.mxu0 %v5329
          %5496 = vmatprep.subr.bf16.mxu0 0
          %5497 = vmatpush2.bf16.msra.mxu0 %v5328
          %5498 = vmatprep.subr.bf16.mxu0 0
          %5499 = vmatpush2.bf16.msra.mxu0 %v5327
          %5500 = vmatprep.subr.bf16.mxu0 0
          %5501 = vmatpush2.bf16.msra.mxu0 %v5326
          %5502 = vmatprep.mubr.bf16.mxu0 %v5033
          %5503 = vmatmul.mubr.bf16.gmra.mxu0 %v5032
          %v5504 = vpop.f32.mrf.mxu0
          %v5505 = vadd.f32 %v5465, %v5504
          %v5506 = vpop.f32.mrf.mxu0
          %v5507 = vpop.f32.mrf.mxu0
          %v5508 = vpop.f32.mrf.mxu0
          %5509 = vdwg.mxu0
          %5510 = vmatprep.subr.bf16.mxu0 0
          %5511 = vmatpush1.bf16.msra.mxu0 %v5341
          %5512 = vmatprep.subr.bf16.mxu0 0
          %5513 = vmatpush1.bf16.msra.mxu0 %v5340
          %5514 = vmatprep.subr.bf16.mxu0 0
          %5515 = vmatpush1.bf16.msra.mxu0 %v5339
          %5516 = vmatprep.subr.bf16.mxu0 0
          %5517 = vmatpush1.bf16.msra.mxu0 %v5338
          %5518 = vmatprep.subr.bf16.mxu0 0
          %5519 = vmatpush1.bf16.msra.mxu0 %v5337
          %5520 = vmatprep.subr.bf16.mxu0 0
          %5521 = vmatpush1.bf16.msra.mxu0 %v5336
          %5522 = vmatprep.subr.bf16.mxu0 0
          %5523 = vmatpush1.bf16.msra.mxu0 %v5335
          %5524 = vmatprep.subr.bf16.mxu0 0
          %5525 = vmatpush1.bf16.msra.mxu0 %v5334
          %5526 = vmatprep.subr.bf16.mxu0 0
          %5527 = vmatpush2.bf16.msra.mxu0 %v5349
          %5528 = vmatprep.subr.bf16.mxu0 0
          %5529 = vmatpush2.bf16.msra.mxu0 %v5348
          %5530 = vmatprep.subr.bf16.mxu0 0
          %5531 = vmatpush2.bf16.msra.mxu0 %v5347
          %5532 = vmatprep.subr.bf16.mxu0 0
          %5533 = vmatpush2.bf16.msra.mxu0 %v5346
          %5534 = vmatprep.subr.bf16.mxu0 0
          %5535 = vmatpush2.bf16.msra.mxu0 %v5345
          %5536 = vmatprep.subr.bf16.mxu0 0
          %5537 = vmatpush2.bf16.msra.mxu0 %v5344
          %5538 = vmatprep.subr.bf16.mxu0 0
          %5539 = vmatpush2.bf16.msra.mxu0 %v5343
          %5540 = vmatprep.subr.bf16.mxu0 0
          %5541 = vmatpush2.bf16.msra.mxu0 %v5342
          %5542 = vmatprep.mubr.bf16.mxu0 %v5035
          %5543 = vmatmul.mubr.bf16.gmra.mxu0 %v5034
          %v5544 = vpop.f32.mrf.mxu0
          %v5545 = vadd.f32 %v5505, %v5544
          %v5546 = vpop.f32.mrf.mxu0
          %v5547 = vpop.f32.mrf.mxu0
          %v5548 = vpop.f32.mrf.mxu0
          %5549 = vdwg.mxu0
          %5550 = vmatprep.subr.bf16.mxu0 0
          %5551 = vmatpush1.bf16.msra.mxu0 %v5357
          %5552 = vmatprep.subr.bf16.mxu0 0
          %5553 = vmatpush1.bf16.msra.mxu0 %v5356
          %5554 = vmatprep.subr.bf16.mxu0 0
          %5555 = vmatpush1.bf16.msra.mxu0 %v5355
          %5556 = vmatprep.subr.bf16.mxu0 0
          %5557 = vmatpush1.bf16.msra.mxu0 %v5354
          %5558 = vmatprep.subr.bf16.mxu0 0
          %5559 = vmatpush1.bf16.msra.mxu0 %v5353
          %5560 = vmatprep.subr.bf16.mxu0 0
          %5561 = vmatpush1.bf16.msra.mxu0 %v5352
          %5562 = vmatprep.subr.bf16.mxu0 0
          %5563 = vmatpush1.bf16.msra.mxu0 %v5351
          %5564 = vmatprep.subr.bf16.mxu0 0
          %5565 = vmatpush1.bf16.msra.mxu0 %v5350
          %5566 = vmatprep.subr.bf16.mxu0 0
          %5567 = vmatpush2.bf16.msra.mxu0 %v5365
          %5568 = vmatprep.subr.bf16.mxu0 0
          %5569 = vmatpush2.bf16.msra.mxu0 %v5364
          %5570 = vmatprep.subr.bf16.mxu0 0
          %5571 = vmatpush2.bf16.msra.mxu0 %v5363
          %5572 = vmatprep.subr.bf16.mxu0 0
          %5573 = vmatpush2.bf16.msra.mxu0 %v5362
          %5574 = vmatprep.subr.bf16.mxu0 0
          %5575 = vmatpush2.bf16.msra.mxu0 %v5361
          %5576 = vmatprep.subr.bf16.mxu0 0
          %5577 = vmatpush2.bf16.msra.mxu0 %v5360
          %5578 = vmatprep.subr.bf16.mxu0 0
          %5579 = vmatpush2.bf16.msra.mxu0 %v5359
          %5580 = vmatprep.subr.bf16.mxu0 0
          %5581 = vmatpush2.bf16.msra.mxu0 %v5358
          %5582 = vmatprep.mubr.bf16.mxu0 %v5037
          %5583 = vmatmul.mubr.bf16.gmra.mxu0 %v5036
          %v5584 = vpop.f32.mrf.mxu0
          %v5585 = vadd.f32 %v5545, %v5584
          %v5586 = vpop.f32.mrf.mxu0
          %v5587 = vpop.f32.mrf.mxu0
          %v5588 = vpop.f32.mrf.mxu0
          %5589 = vdwg.mxu0
          %5590 = vst [vmem:[#allocation12] sm:$0xff] %v5585
        $region72: #{tpu_custom_call.1} parent=39 // pred_fallthru
          _
        // Predicated region
        $region73: #{tpu_custom_call.1} parent=39 // pred_check
          %p5591 = pneg %p182
        $region74: #{tpu_custom_call.1} parent=39 // pred_check_branch
          %5593 = sbr.rel (%p5591) target = $region76
        $region75: #{tpu_custom_call.1} parent=39 // pred_region
          %s5595 = ssub.s32 128, 128
          %5596 = vsyncadd [#allocation5], %s5595
          %s5597 = smul.addr %s26, 128
          %s5598 = scalar_lea.hbm %s5, %s5597
          %s5600 = sshll.u32 [#allocation12], 4
          %s5601 = int_to_ptr.vmem [resolvable:$true] %s5600
          %5603 = dma.vmem_to_hbm [thread:$0]  %s5601, 128, %s5598, [#allocation5]
        $region76: #{tpu_custom_call.1} parent=39 // pred_fallthru
          _
        // Predicated region
        $region77: #{tpu_custom_call.1} parent=39 // pred_check
          %p5604 = pneg %p182
        $region78: #{tpu_custom_call.1} parent=39 // pred_check_branch
          %5606 = sbr.rel (%p5604) target = $region80
        $region79: #{tpu_custom_call.1} parent=39 // pred_region
          %5607 = dma.done [#allocation5], 128
        $region80: #{tpu_custom_call.1} parent=39 // pred_fallthru
          _
      $region40: #{tpu_custom_call.1} parent=5 // pred_fallthru
        _
      %p5608 = scmp.le.s32.totalorder 2, %s17
      // Predicated region
      $region81: #{tpu_custom_call.1} parent=5 // pred_check
        %p5609 = pneg %p5608
      $region82: #{tpu_custom_call.1} parent=5 // pred_check_branch
        %5611 = sbr.rel (%p5609) target = $region84
      $region83: #{tpu_custom_call.1} parent=5 // pred_region
        %s5612 = ssub.s32 %s17, 2
      $region84: #{tpu_custom_call.1} parent=5 // pred_fallthru
        _
    $region6: #{tpu_custom_call.1} parent=1 // loop_footer
      %s21 = sadd.s32 1, %s17
    $region7: #{tpu_custom_call.1} parent=1 // loop_footer_branch
      %16 = sbr.rel target = $region3
    $region8: #{tpu_custom_call.1} parent=1 // loop_exit
      _
    %5613 = vsyncpa [#allocation4], 1
    %s5614 = scalar_lea.sflag [#allocation4], 1
    %5615 = vsyncpa %s5614, 1
    %5616 = vsyncpa [#allocation7], 1
    %5617 = vsyncpa [#allocation11], 1
    %s5618 = scalar_lea.sflag [#allocation11], 1
    %5619 = vsyncpa %s5618, 1
    %5620 = vsyncpa [#allocation5], 1
    %s5621 = scalar_lea.sflag [#allocation5], 1
    %5622 = vsyncpa %s5621, 1

</llo_original>
